<compile_context>
chip_gen: v7x
topology: tpu7x:2x2x1
jax: 0.10.0
libtpu: 0.0.40
codegen_flags: <defaults>
</compile_context>

<pallas_src>
import jax
import jax.numpy as jnp
from jax import lax
from jax.experimental import pallas as pl
from jax.experimental.pallas import tpu as pltpu

# ----------------------------- config (small) --------------------------------
PREFIX_LENGTH = 8          # <= 10 => clip_project is the MLP branch (Linear-Tanh-Linear)
PREFIX_SIZE   = 64         # stands in for CLIP's 512
N_EMBD        = 32         # gpt_embedding_size
N_HEAD        = 2
HEAD_DIM      = N_EMBD // N_HEAD
N_LAYER       = 2
VOCAB         = 128
N_POS         = 64
BATCH         = 2
TEXT_LEN      = 8          # token sequence length
TOTAL_LEN     = PREFIX_LENGTH + TEXT_LEN
CP_HID        = N_EMBD * PREFIX_LENGTH // 2   # 128
CP_OUT        = N_EMBD * PREFIX_LENGTH        # 256


def _gelu_new(x):
  # GPT-2 "gelu_new" (tanh approximation), fp32
  return 0.5 * x * (1.0 + jnp.tanh(0.7978845608028654 * (x + 0.044715 * x * x * x)))


# ----------------------------- fused Pallas kernel ----------------------------
def fused_forward_kernel(
    # scalar prefetch (SMEM)
    tokens_ref,                  # (B, Lt) int32
    # activations / precomputed constants (VMEM)
    prefix_ref,                  # (B, PREFIX_SIZE)       f32
    pos_ref,                     # (B*T, N_EMBD)          f32  (wpe[:T] tiled over batch)
    mask_ref,                    # (B*T, B*T)             f32  additive block-diag causal
    # shared weights (VMEM resident)
    cp_w1_ref, cp_b1_ref,        # (PREFIX_SIZE, CP_HID) bf16 / (1, CP_HID) f32
    cp_w2_ref, cp_b2_ref,        # (CP_HID, CP_OUT) bf16 / (1, CP_OUT) f32
    ln1_g_ref, ln1_b_ref,        # (NL, 1, E) f32
    attn_w_ref, attn_b_ref,      # (NL, E, 3E) bf16 (Q cols pre-scaled) / (NL, 1, 3E) f32
    aproj_w_ref, aproj_b_ref,    # (NL, E, E) bf16 / (NL, 1, E) f32
    ln2_g_ref, ln2_b_ref,        # (NL, 1, E) f32
    fc_w_ref, fc_b_ref,          # (NL, E, 4E) bf16 / (NL, 1, 4E) f32
    mproj_w_ref, mproj_b_ref,    # (NL, 4E, E) bf16 / (NL, 1, E) f32
    lnf_g_ref, lnf_b_ref,        # (1, E) f32
    wte_ref,                     # (VOCAB, E) f32  -> in-kernel embedding gather
    wte_t_ref,                   # (E, VOCAB) bf16 -> tied lm_head (pre-transposed/cast)
    # output
    logits_ref,                  # (B*T, VOCAB) f32
):
  f32, bf16 = jnp.float32, jnp.bfloat16
  B, Lt = tokens_ref.shape
  T = PREFIX_LENGTH + Lt
  E = N_EMBD

  def mm(x, w_bf16, b_f32):
    # bf16 MXU operands, fp32 accumulation, fp32 epilogue (bias add)
    return jnp.dot(x.astype(bf16), w_bf16, preferred_element_type=f32) + b_f32

  def layer_norm(x, g, b):
    mu = jnp.mean(x, axis=-1, keepdims=True)
    xc = x - mu
    var = jnp.mean(xc * xc, axis=-1, keepdims=True)
    return xc * lax.rsqrt(var + 1e-5) * g + b

  # ---- clip_project MLP (all batches folded into M):
  #      Linear(PREFIX_SIZE -> CP_HID) -> Tanh -> Linear(-> CP_OUT = P*E)
  h1 = jnp.tanh(mm(prefix_ref[...], cp_w1_ref[...], cp_b1_ref[...]))    # (B, CP_HID)
  h2 = mm(h1, cp_w2_ref[...], cp_b2_ref[...])                           # (B, CP_OUT)

  # ---- build hidden (B*T, E) as a VALUE (no scratch round-trip):
  #      rows [b*T : b*T+P)      = prefix_proj.view(-1, P, E) for batch b
  #      rows [b*T+P : (b+1)*T)  = wte[tokens[b, t]]  (in-kernel gather, fp32 wte)
  rows = []
  for b in range(B):
    for p in range(PREFIX_LENGTH):
      rows.append(h2[b:b + 1, p * E:(p + 1) * E])
    for t in range(Lt):
      tok = tokens_ref[b, t]                       # SMEM scalar read
      rows.append(wte_ref[pl.ds(tok, 1), :])       # dynamic row gather from VMEM wte
  hidden = jnp.concatenate(rows, axis=0) + pos_ref[...]                 # (B*T, E) f32

  addmask = mask_ref[...]                          # additive 0 / -1e9 block-diag causal

  for l in range(N_LAYER):
    # --- attention sub-block (pre-LN); 1/sqrt(Dh) already folded into Q weights ---
    a_in = layer_norm(hidden, ln1_g_ref[l], ln1_b_ref[l])
    qkv = mm(a_in, attn_w_ref[l], attn_b_ref[l])                        # (B*T, 3E)
    aw_l = aproj_w_ref[l]                                               # (E, E) bf16
    attn_acc = None
    for h in range(N_HEAD):
      q = qkv[:, h * HEAD_DIM:(h + 1) * HEAD_DIM]
      k = qkv[:, E + h * HEAD_DIM:E + (h + 1) * HEAD_DIM]
      v = qkv[:, 2 * E + h * HEAD_DIM:2 * E + (h + 1) * HEAD_DIM]
      # q @ k^T without materializing a transpose
      s = lax.dot_general(q.astype(bf16), k.astype(bf16),
                          (((1,), (1,)), ((), ())),
                          preferred_element_type=f32)                   # (B*T, B*T)
      s = s + addmask
      s = s - jnp.max(s, axis=-1, keepdims=True)
      pexp = jnp.exp(s)
      pexp = pexp * pl.reciprocal(jnp.sum(pexp, axis=-1, keepdims=True), approx=True)
      ctx = jnp.dot(pexp.astype(bf16), v.astype(bf16),
                    preferred_element_type=f32)                         # (B*T, Dh)
      # head-merge + output projection fused as a block matmul (no lane concat)
      w_h = aw_l[h * HEAD_DIM:(h + 1) * HEAD_DIM, :]                    # (Dh, E) bf16
      contrib = jnp.dot(ctx.astype(bf16), w_h, preferred_element_type=f32)
      attn_acc = contrib if attn_acc is None else attn_acc + contrib
    hidden = hidden + attn_acc + aproj_b_ref[l]
    # --- MLP sub-block (pre-LN) ---
    m_in = layer_norm(hidden, ln2_g_ref[l], ln2_b_ref[l])
    m = _gelu_new(mm(m_in, fc_w_ref[l], fc_b_ref[l]))
    m = mm(m, mproj_w_ref[l], mproj_b_ref[l])
    hidden = hidden + m

  hidden = layer_norm(hidden, lnf_g_ref[...], lnf_b_ref[...])

  # lm_head tied to wte, pre-transposed bf16 (E, VOCAB); lane-dense output block.
  # TODO(synk): the tied weight is bf16 here vs fp32 for the gather (not bit-identical).
  logits_ref[...] = jnp.dot(hidden.astype(bf16), wte_t_ref[...],
                            preferred_element_type=f32)


# ----------------------------- parameter init --------------------------------
def init_params(key):
  def nrm(k, shape, scale=0.02):
    return scale * jax.random.normal(k, shape, dtype=jnp.float32)

  keys = jax.random.split(key, 4 + 4 * N_LAYER)
  it = iter(keys)
  p = {}
  # GPT-2 embeddings
  wte = nrm(next(it), (VOCAB, N_EMBD))
  wpe = nrm(next(it), (N_POS, N_EMBD), scale=0.01)
  p["wte"] = wte                                   # fp32: in-kernel embedding gather
  p["wte_t"] = wte.T.astype(jnp.bfloat16)          # pre-transposed/cast tied lm_head
  # position rows for [prefix ++ text], tiled over the folded batch (precomputed once)
  p["pos"] = jnp.tile(wpe[:TOTAL_LEN], (BATCH, 1))
  # additive block-diagonal causal mask over the folded (B*T) rows (precomputed once)
  r = jnp.arange(BATCH * TOTAL_LEN)
  same_batch = (r[:, None] // TOTAL_LEN) == (r[None, :] // TOTAL_LEN)
  causal = (r[None, :] % TOTAL_LEN) <= (r[:, None] % TOTAL_LEN)
  p["mask"] = jnp.where(same_batch & causal, 0.0, -1e9).astype(jnp.float32)

  # clip_project MLP
  p["cp_w1"] = nrm(next(it), (PREFIX_SIZE, CP_HID)).astype(jnp.bfloat16)
  p["cp_b1"] = jnp.zeros((1, CP_HID), jnp.float32)
  p["cp_w2"] = nrm(next(it), (CP_HID, CP_OUT)).astype(jnp.bfloat16)
  p["cp_b2"] = jnp.zeros((1, CP_OUT), jnp.float32)
  # final layer norm
  p["lnf_g"] = jnp.ones((1, N_EMBD), jnp.float32)
  p["lnf_b"] = jnp.zeros((1, N_EMBD), jnp.float32)
  # transformer blocks, stacked along a leading layer axis
  attn_w, aproj_w, fc_w, mproj_w = [], [], [], []
  for _ in range(N_LAYER):
    attn_w.append(nrm(next(it), (N_EMBD, 3 * N_EMBD)))
    aproj_w.append(nrm(next(it), (N_EMBD, N_EMBD)))
    fc_w.append(nrm(next(it), (N_EMBD, 4 * N_EMBD)))
    mproj_w.append(nrm(next(it), (4 * N_EMBD, N_EMBD)))
  # fold 1/sqrt(head_dim) into the Q columns (and Q bias) at init time (free)
  scale = 1.0 / (HEAD_DIM ** 0.5)
  col_scale = jnp.concatenate([jnp.full((N_EMBD,), scale, jnp.float32),
                               jnp.ones((2 * N_EMBD,), jnp.float32)])
  attn_w = jnp.stack(attn_w) * col_scale[None, None, :]
  attn_b = jnp.zeros((N_LAYER, 1, 3 * N_EMBD), jnp.float32) * col_scale[None, None, :]
  p["attn_w"] = attn_w.astype(jnp.bfloat16)
  p["attn_b"] = attn_b
  p["aproj_w"] = jnp.stack(aproj_w).astype(jnp.bfloat16)
  p["aproj_b"] = jnp.zeros((N_LAYER, 1, N_EMBD), jnp.float32)
  p["fc_w"] = jnp.stack(fc_w).astype(jnp.bfloat16)
  p["fc_b"] = jnp.zeros((N_LAYER, 1, 4 * N_EMBD), jnp.float32)
  p["mproj_w"] = jnp.stack(mproj_w).astype(jnp.bfloat16)
  p["mproj_b"] = jnp.zeros((N_LAYER, 1, N_EMBD), jnp.float32)
  p["ln1_g"] = jnp.ones((N_LAYER, 1, N_EMBD), jnp.float32)
  p["ln1_b"] = jnp.zeros((N_LAYER, 1, N_EMBD), jnp.float32)
  p["ln2_g"] = jnp.ones((N_LAYER, 1, N_EMBD), jnp.float32)
  p["ln2_b"] = jnp.zeros((N_LAYER, 1, N_EMBD), jnp.float32)
  return p


WEIGHT_ORDER = ("cp_w1", "cp_b1", "cp_w2", "cp_b2",
                "ln1_g", "ln1_b", "attn_w", "attn_b", "aproj_w", "aproj_b",
                "ln2_g", "ln2_b", "fc_w", "fc_b", "mproj_w", "mproj_b",
                "lnf_g", "lnf_b", "wte", "wte_t")


# ----------------------------- full forward ----------------------------------
def clip_caption_forward(params, tokens, prefix):
  """tokens: (B, Lt) int32, prefix: (B, PREFIX_SIZE) f32 -> logits (B, T, VOCAB)."""
  B, Lt = tokens.shape
  T = PREFIX_LENGTH + Lt
  BT = B * T

  weights = tuple(params[name] for name in WEIGHT_ORDER)

  def full_spec(arr):
    nd = arr.ndim
    # index_map receives (grid idx, scalar-prefetch ref); constant block index.
    return pl.BlockSpec(arr.shape, lambda i, tok, _n=nd: (0,) * _n)

  in_specs = ([full_spec(prefix), full_spec(params["pos"]), full_spec(params["mask"])]
              + [full_spec(w) for w in weights])

  grid_spec = pltpu.PrefetchScalarGridSpec(
      num_scalar_prefetch=1,           # tokens -> SMEM, read in-kernel for the gather
      grid=(1,),                       # batch folded into M; single grid step
      in_specs=in_specs,
      out_specs=pl.BlockSpec((BT, VOCAB), lambda i, tok: (0, 0)),
  )

  logits_flat = pl.pallas_call(
      fused_forward_kernel,
      out_shape=jax.ShapeDtypeStruct((BT, VOCAB), jnp.float32),
      grid_spec=grid_spec,
      compiler_params=pltpu.CompilerParams(dimension_semantics=("arbitrary",)),
  )(tokens, prefix, params["pos"], params["mask"], *weights)
  # TODO(synk): dropout is identity (inference); the HF CausalLMOutputWithCrossAttentions
  # wrapper is represented by returning raw logits.
  return logits_flat.reshape(B, T, VOCAB)


# ----------------------------------- main -------------------------------------
if __name__ == "__main__":
  key = jax.random.PRNGKey(0)
  kp, kt, kx = jax.random.split(key, 3)

  params = init_params(kp)
  tokens = jax.random.randint(kt, (BATCH, TEXT_LEN), 0, VOCAB, dtype=jnp.int32)
  prefix = jax.random.normal(kx, (BATCH, PREFIX_SIZE), dtype=jnp.float32)

  fwd = jax.jit(clip_caption_forward)
  logits = fwd(params, tokens, prefix)
  jax.block_until_ready(logits)

  assert logits.shape == (BATCH, TOTAL_LEN, VOCAB), logits.shape
  assert bool(jnp.all(jnp.isfinite(logits)))
  print("KERNEL_OK")
</pallas_src>

<mosaic_0001>
module attributes {stable_mosaic.version = 11 : i64} {
  func.func @fused_forward_kernel(%arg0: i32, %arg1: memref<2x8xi32, #tpu.memory_space<smem>>, %arg2: memref<2x64xf32, #tpu.memory_space<vmem>>, %arg3: memref<32x32xf32, #tpu.memory_space<vmem>>, %arg4: memref<32x32xf32, #tpu.memory_space<vmem>>, %arg5: memref<64x128xbf16, #tpu.memory_space<vmem>>, %arg6: memref<1x128xf32, #tpu.memory_space<vmem>>, %arg7: memref<128x256xbf16, #tpu.memory_space<vmem>>, %arg8: memref<1x256xf32, #tpu.memory_space<vmem>>, %arg9: memref<2x1x32xf32, #tpu.memory_space<vmem>>, %arg10: memref<2x1x32xf32, #tpu.memory_space<vmem>>, %arg11: memref<2x32x96xbf16, #tpu.memory_space<vmem>>, %arg12: memref<2x1x96xf32, #tpu.memory_space<vmem>>, %arg13: memref<2x32x32xbf16, #tpu.memory_space<vmem>>, %arg14: memref<2x1x32xf32, #tpu.memory_space<vmem>>, %arg15: memref<2x1x32xf32, #tpu.memory_space<vmem>>, %arg16: memref<2x1x32xf32, #tpu.memory_space<vmem>>, %arg17: memref<2x32x128xbf16, #tpu.memory_space<vmem>>, %arg18: memref<2x1x128xf32, #tpu.memory_space<vmem>>, %arg19: memref<2x128x32xbf16, #tpu.memory_space<vmem>>, %arg20: memref<2x1x32xf32, #tpu.memory_space<vmem>>, %arg21: memref<1x32xf32, #tpu.memory_space<vmem>>, %arg22: memref<1x32xf32, #tpu.memory_space<vmem>>, %arg23: memref<128x32xf32, #tpu.memory_space<vmem>>, %arg24: memref<32x128xbf16, #tpu.memory_space<vmem>>, %arg25: memref<32x128xf32, #tpu.memory_space<vmem>>) attributes {dimension_semantics = [#tpu.dimension_semantics<arbitrary>], iteration_bounds = array<i64: 1>, scalar_prefetch = 1 : i64, scratch_operands = 0 : i64, tpu.core_type = #tpu.core_type<tc>, window_params = [{pipeline_mode = #tpu.pipeline_mode<synchronous>, transform_indices = @transform_0, window_bounds = array<i64: 2, 64>}, {pipeline_mode = #tpu.pipeline_mode<synchronous>, transform_indices = @transform_1, window_bounds = array<i64: 32, 32>}, {pipeline_mode = #tpu.pipeline_mode<synchronous>, transform_indices = @transform_2, window_bounds = array<i64: 32, 32>}, {pipeline_mode = #tpu.pipeline_mode<synchronous>, transform_indices = @transform_3, window_bounds = array<i64: 64, 128>}, {pipeline_mode = #tpu.pipeline_mode<synchronous>, transform_indices = @transform_4, window_bounds = array<i64: 1, 128>}, {pipeline_mode = #tpu.pipeline_mode<synchronous>, transform_indices = @transform_5, window_bounds = array<i64: 128, 256>}, {pipeline_mode = #tpu.pipeline_mode<synchronous>, transform_indices = @transform_6, window_bounds = array<i64: 1, 256>}, {pipeline_mode = #tpu.pipeline_mode<synchronous>, transform_indices = @transform_7, window_bounds = array<i64: 2, 1, 32>}, {pipeline_mode = #tpu.pipeline_mode<synchronous>, transform_indices = @transform_8, window_bounds = array<i64: 2, 1, 32>}, {pipeline_mode = #tpu.pipeline_mode<synchronous>, transform_indices = @transform_9, window_bounds = array<i64: 2, 32, 96>}, {pipeline_mode = #tpu.pipeline_mode<synchronous>, transform_indices = @transform_10, window_bounds = array<i64: 2, 1, 96>}, {pipeline_mode = #tpu.pipeline_mode<synchronous>, transform_indices = @transform_11, window_bounds = array<i64: 2, 32, 32>}, {pipeline_mode = #tpu.pipeline_mode<synchronous>, transform_indices = @transform_12, window_bounds = array<i64: 2, 1, 32>}, {pipeline_mode = #tpu.pipeline_mode<synchronous>, transform_indices = @transform_13, window_bounds = array<i64: 2, 1, 32>}, {pipeline_mode = #tpu.pipeline_mode<synchronous>, transform_indices = @transform_14, window_bounds = array<i64: 2, 1, 32>}, {pipeline_mode = #tpu.pipeline_mode<synchronous>, transform_indices = @transform_15, window_bounds = array<i64: 2, 32, 128>}, {pipeline_mode = #tpu.pipeline_mode<synchronous>, transform_indices = @transform_16, window_bounds = array<i64: 2, 1, 128>}, {pipeline_mode = #tpu.pipeline_mode<synchronous>, transform_indices = @transform_17, window_bounds = array<i64: 2, 128, 32>}, {pipeline_mode = #tpu.pipeline_mode<synchronous>, transform_indices = @transform_18, window_bounds = array<i64: 2, 1, 32>}, {pipeline_mode = #tpu.pipeline_mode<synchronous>, transform_indices = @transform_19, window_bounds = array<i64: 1, 32>}, {pipeline_mode = #tpu.pipeline_mode<synchronous>, transform_indices = @transform_20, window_bounds = array<i64: 1, 32>}, {pipeline_mode = #tpu.pipeline_mode<synchronous>, transform_indices = @transform_21, window_bounds = array<i64: 128, 32>}, {pipeline_mode = #tpu.pipeline_mode<synchronous>, transform_indices = @transform_22, window_bounds = array<i64: 32, 128>}, {pipeline_mode = #tpu.pipeline_mode<synchronous>, transform_indices = @transform_23, window_bounds = array<i64: 32, 128>}]} {
    %c0 = arith.constant 0 : index
    %c0_0 = arith.constant 0 : index
    %0 = vector.load %arg2[%c0, %c0_0] : memref<2x64xf32, #tpu.memory_space<vmem>>, vector<2x64xf32>
    %c0_1 = arith.constant 0 : index
    %c0_2 = arith.constant 0 : index
    %1 = vector.load %arg5[%c0_1, %c0_2] : memref<64x128xbf16, #tpu.memory_space<vmem>>, vector<64x128xbf16>
    %c0_3 = arith.constant 0 : index
    %c0_4 = arith.constant 0 : index
    %2 = vector.load %arg6[%c0_3, %c0_4] : memref<1x128xf32, #tpu.memory_space<vmem>>, vector<1x128xf32>
    %3 = arith.truncf %0 : vector<2x64xf32> to vector<2x64xbf16>
    %cst = arith.constant dense<0.000000e+00> : vector<2x128xf32>
    %4 = tpu.matmul %3, %1, %cst {dimension_numbers = #tpu.dot_dimension_numbers<[1], [0], [0], [1], [0, 0, 1, 1], [], []>} : vector<2x64xbf16>, vector<64x128xbf16>, vector<2x128xf32> -> vector<2x128xf32>
    %5 = vector.broadcast %2 : vector<1x128xf32> to vector<2x128xf32>
    %6 = arith.addf %4, %5 : vector<2x128xf32>
    %7 = math.tanh %6 : vector<2x128xf32>
    %c0_5 = arith.constant 0 : index
    %c0_6 = arith.constant 0 : index
    %8 = vector.load %arg7[%c0_5, %c0_6] : memref<128x256xbf16, #tpu.memory_space<vmem>>, vector<128x256xbf16>
    %c0_7 = arith.constant 0 : index
    %c0_8 = arith.constant 0 : index
    %9 = vector.load %arg8[%c0_7, %c0_8] : memref<1x256xf32, #tpu.memory_space<vmem>>, vector<1x256xf32>
    %10 = arith.truncf %7 : vector<2x128xf32> to vector<2x128xbf16>
    %cst_9 = arith.constant dense<0.000000e+00> : vector<2x256xf32>
    %11 = tpu.matmul %10, %8, %cst_9 {dimension_numbers = #tpu.dot_dimension_numbers<[1], [0], [0], [1], [0, 0, 1, 1], [], []>} : vector<2x128xbf16>, vector<128x256xbf16>, vector<2x256xf32> -> vector<2x256xf32>
    %12 = vector.broadcast %9 : vector<1x256xf32> to vector<2x256xf32>
    %13 = arith.addf %11, %12 : vector<2x256xf32>
    %14 = vector.extract_strided_slice %13 {offsets = [0, 0], sizes = [1, 32], strides = [1, 1]} : vector<2x256xf32> to vector<1x32xf32>
    %15 = vector.extract_strided_slice %13 {offsets = [0, 32], sizes = [1, 32], strides = [1, 1]} : vector<2x256xf32> to vector<1x32xf32>
    %16 = vector.extract_strided_slice %13 {offsets = [0, 64], sizes = [1, 32], strides = [1, 1]} : vector<2x256xf32> to vector<1x32xf32>
    %17 = vector.extract_strided_slice %13 {offsets = [0, 96], sizes = [1, 32], strides = [1, 1]} : vector<2x256xf32> to vector<1x32xf32>
    %18 = vector.extract_strided_slice %13 {offsets = [0, 128], sizes = [1, 32], strides = [1, 1]} : vector<2x256xf32> to vector<1x32xf32>
    %19 = vector.extract_strided_slice %13 {offsets = [0, 160], sizes = [1, 32], strides = [1, 1]} : vector<2x256xf32> to vector<1x32xf32>
    %20 = vector.extract_strided_slice %13 {offsets = [0, 192], sizes = [1, 32], strides = [1, 1]} : vector<2x256xf32> to vector<1x32xf32>
    %21 = vector.extract_strided_slice %13 {offsets = [0, 224], sizes = [1, 32], strides = [1, 1]} : vector<2x256xf32> to vector<1x32xf32>
    %c0_10 = arith.constant 0 : index
    %c0_11 = arith.constant 0 : index
    %22 = memref.load %arg1[%c0_10, %c0_11] : memref<2x8xi32, #tpu.memory_space<smem>>
    %23 = arith.index_cast %22 : i32 to index
    %c0_12 = arith.constant 0 : index
    %24 = vector.load %arg23[%23, %c0_12] : memref<128x32xf32, #tpu.memory_space<vmem>>, vector<1x32xf32>
    %c0_13 = arith.constant 0 : index
    %c1 = arith.constant 1 : index
    %25 = memref.load %arg1[%c0_13, %c1] : memref<2x8xi32, #tpu.memory_space<smem>>
    %26 = arith.index_cast %25 : i32 to index
    %c0_14 = arith.constant 0 : index
    %27 = vector.load %arg23[%26, %c0_14] : memref<128x32xf32, #tpu.memory_space<vmem>>, vector<1x32xf32>
    %c0_15 = arith.constant 0 : index
    %c2 = arith.constant 2 : index
    %28 = memref.load %arg1[%c0_15, %c2] : memref<2x8xi32, #tpu.memory_space<smem>>
    %29 = arith.index_cast %28 : i32 to index
    %c0_16 = arith.constant 0 : index
    %30 = vector.load %arg23[%29, %c0_16] : memref<128x32xf32, #tpu.memory_space<vmem>>, vector<1x32xf32>
    %c0_17 = arith.constant 0 : index
    %c3 = arith.constant 3 : index
    %31 = memref.load %arg1[%c0_17, %c3] : memref<2x8xi32, #tpu.memory_space<smem>>
    %32 = arith.index_cast %31 : i32 to index
    %c0_18 = arith.constant 0 : index
    %33 = vector.load %arg23[%32, %c0_18] : memref<128x32xf32, #tpu.memory_space<vmem>>, vector<1x32xf32>
    %c0_19 = arith.constant 0 : index
    %c4 = arith.constant 4 : index
    %34 = memref.load %arg1[%c0_19, %c4] : memref<2x8xi32, #tpu.memory_space<smem>>
    %35 = arith.index_cast %34 : i32 to index
    %c0_20 = arith.constant 0 : index
    %36 = vector.load %arg23[%35, %c0_20] : memref<128x32xf32, #tpu.memory_space<vmem>>, vector<1x32xf32>
    %c0_21 = arith.constant 0 : index
    %c5 = arith.constant 5 : index
    %37 = memref.load %arg1[%c0_21, %c5] : memref<2x8xi32, #tpu.memory_space<smem>>
    %38 = arith.index_cast %37 : i32 to index
    %c0_22 = arith.constant 0 : index
    %39 = vector.load %arg23[%38, %c0_22] : memref<128x32xf32, #tpu.memory_space<vmem>>, vector<1x32xf32>
    %c0_23 = arith.constant 0 : index
    %c6 = arith.constant 6 : index
    %40 = memref.load %arg1[%c0_23, %c6] : memref<2x8xi32, #tpu.memory_space<smem>>
    %41 = arith.index_cast %40 : i32 to index
    %c0_24 = arith.constant 0 : index
    %42 = vector.load %arg23[%41, %c0_24] : memref<128x32xf32, #tpu.memory_space<vmem>>, vector<1x32xf32>
    %c0_25 = arith.constant 0 : index
    %c7 = arith.constant 7 : index
    %43 = memref.load %arg1[%c0_25, %c7] : memref<2x8xi32, #tpu.memory_space<smem>>
    %44 = arith.index_cast %43 : i32 to index
    %c0_26 = arith.constant 0 : index
    %45 = vector.load %arg23[%44, %c0_26] : memref<128x32xf32, #tpu.memory_space<vmem>>, vector<1x32xf32>
    %46 = vector.extract_strided_slice %13 {offsets = [1, 0], sizes = [1, 32], strides = [1, 1]} : vector<2x256xf32> to vector<1x32xf32>
    %47 = vector.extract_strided_slice %13 {offsets = [1, 32], sizes = [1, 32], strides = [1, 1]} : vector<2x256xf32> to vector<1x32xf32>
    %48 = vector.extract_strided_slice %13 {offsets = [1, 64], sizes = [1, 32], strides = [1, 1]} : vector<2x256xf32> to vector<1x32xf32>
    %49 = vector.extract_strided_slice %13 {offsets = [1, 96], sizes = [1, 32], strides = [1, 1]} : vector<2x256xf32> to vector<1x32xf32>
    %50 = vector.extract_strided_slice %13 {offsets = [1, 128], sizes = [1, 32], strides = [1, 1]} : vector<2x256xf32> to vector<1x32xf32>
    %51 = vector.extract_strided_slice %13 {offsets = [1, 160], sizes = [1, 32], strides = [1, 1]} : vector<2x256xf32> to vector<1x32xf32>
    %52 = vector.extract_strided_slice %13 {offsets = [1, 192], sizes = [1, 32], strides = [1, 1]} : vector<2x256xf32> to vector<1x32xf32>
    %53 = vector.extract_strided_slice %13 {offsets = [1, 224], sizes = [1, 32], strides = [1, 1]} : vector<2x256xf32> to vector<1x32xf32>
    %c1_27 = arith.constant 1 : index
    %c0_28 = arith.constant 0 : index
    %54 = memref.load %arg1[%c1_27, %c0_28] : memref<2x8xi32, #tpu.memory_space<smem>>
    %55 = arith.index_cast %54 : i32 to index
    %c0_29 = arith.constant 0 : index
    %56 = vector.load %arg23[%55, %c0_29] : memref<128x32xf32, #tpu.memory_space<vmem>>, vector<1x32xf32>
    %c1_30 = arith.constant 1 : index
    %c1_31 = arith.constant 1 : index
    %57 = memref.load %arg1[%c1_30, %c1_31] : memref<2x8xi32, #tpu.memory_space<smem>>
    %58 = arith.index_cast %57 : i32 to index
    %c0_32 = arith.constant 0 : index
    %59 = vector.load %arg23[%58, %c0_32] : memref<128x32xf32, #tpu.memory_space<vmem>>, vector<1x32xf32>
    %c1_33 = arith.constant 1 : index
    %c2_34 = arith.constant 2 : index
    %60 = memref.load %arg1[%c1_33, %c2_34] : memref<2x8xi32, #tpu.memory_space<smem>>
    %61 = arith.index_cast %60 : i32 to index
    %c0_35 = arith.constant 0 : index
    %62 = vector.load %arg23[%61, %c0_35] : memref<128x32xf32, #tpu.memory_space<vmem>>, vector<1x32xf32>
    %c1_36 = arith.constant 1 : index
    %c3_37 = arith.constant 3 : index
    %63 = memref.load %arg1[%c1_36, %c3_37] : memref<2x8xi32, #tpu.memory_space<smem>>
    %64 = arith.index_cast %63 : i32 to index
    %c0_38 = arith.constant 0 : index
    %65 = vector.load %arg23[%64, %c0_38] : memref<128x32xf32, #tpu.memory_space<vmem>>, vector<1x32xf32>
    %c1_39 = arith.constant 1 : index
    %c4_40 = arith.constant 4 : index
    %66 = memref.load %arg1[%c1_39, %c4_40] : memref<2x8xi32, #tpu.memory_space<smem>>
    %67 = arith.index_cast %66 : i32 to index
    %c0_41 = arith.constant 0 : index
    %68 = vector.load %arg23[%67, %c0_41] : memref<128x32xf32, #tpu.memory_space<vmem>>, vector<1x32xf32>
    %c1_42 = arith.constant 1 : index
    %c5_43 = arith.constant 5 : index
    %69 = memref.load %arg1[%c1_42, %c5_43] : memref<2x8xi32, #tpu.memory_space<smem>>
    %70 = arith.index_cast %69 : i32 to index
    %c0_44 = arith.constant 0 : index
    %71 = vector.load %arg23[%70, %c0_44] : memref<128x32xf32, #tpu.memory_space<vmem>>, vector<1x32xf32>
    %c1_45 = arith.constant 1 : index
    %c6_46 = arith.constant 6 : index
    %72 = memref.load %arg1[%c1_45, %c6_46] : memref<2x8xi32, #tpu.memory_space<smem>>
    %73 = arith.index_cast %72 : i32 to index
    %c0_47 = arith.constant 0 : index
    %74 = vector.load %arg23[%73, %c0_47] : memref<128x32xf32, #tpu.memory_space<vmem>>, vector<1x32xf32>
    %c1_48 = arith.constant 1 : index
    %c7_49 = arith.constant 7 : index
    %75 = memref.load %arg1[%c1_48, %c7_49] : memref<2x8xi32, #tpu.memory_space<smem>>
    %76 = arith.index_cast %75 : i32 to index
    %c0_50 = arith.constant 0 : index
    %77 = vector.load %arg23[%76, %c0_50] : memref<128x32xf32, #tpu.memory_space<vmem>>, vector<1x32xf32>
    %78 = tpu.concatenate %14, %15, %16, %17, %18, %19, %20, %21, %24, %27, %30, %33, %36, %39, %42, %45 in 0 : vector<1x32xf32>, vector<1x32xf32>, vector<1x32xf32>, vector<1x32xf32>, vector<1x32xf32>, vector<1x32xf32>, vector<1x32xf32>, vector<1x32xf32>, vector<1x32xf32>, vector<1x32xf32>, vector<1x32xf32>, vector<1x32xf32>, vector<1x32xf32>, vector<1x32xf32>, vector<1x32xf32>, vector<1x32xf32> -> vector<16x32xf32>
    %79 = tpu.concatenate %46, %47, %48, %49, %50, %51, %52, %53, %56, %59, %62, %65, %68, %71, %74, %77 in 0 : vector<1x32xf32>, vector<1x32xf32>, vector<1x32xf32>, vector<1x32xf32>, vector<1x32xf32>, vector<1x32xf32>, vector<1x32xf32>, vector<1x32xf32>, vector<1x32xf32>, vector<1x32xf32>, vector<1x32xf32>, vector<1x32xf32>, vector<1x32xf32>, vector<1x32xf32>, vector<1x32xf32>, vector<1x32xf32> -> vector<16x32xf32>
    %80 = tpu.concatenate %78, %79 in 0 : vector<16x32xf32>, vector<16x32xf32> -> vector<32x32xf32>
    %c0_51 = arith.constant 0 : index
    %c0_52 = arith.constant 0 : index
    %81 = vector.load %arg3[%c0_51, %c0_52] : memref<32x32xf32, #tpu.memory_space<vmem>>, vector<32x32xf32>
    %82 = arith.addf %80, %81 : vector<32x32xf32>
    %c0_53 = arith.constant 0 : index
    %c0_54 = arith.constant 0 : index
    %83 = vector.load %arg4[%c0_53, %c0_54] : memref<32x32xf32, #tpu.memory_space<vmem>>, vector<32x32xf32>
    %c0_55 = arith.constant 0 : index
    %c0_56 = arith.constant 0 : index
    %c0_57 = arith.constant 0 : index
    %84 = vector.load %arg9[%c0_55, %c0_56, %c0_57] : memref<2x1x32xf32, #tpu.memory_space<vmem>>, vector<1x1x32xf32>
    %85 = vector.shape_cast %84 : vector<1x1x32xf32> to vector<1x32xf32>
    %c0_58 = arith.constant 0 : index
    %c0_59 = arith.constant 0 : index
    %c0_60 = arith.constant 0 : index
    %86 = vector.load %arg10[%c0_58, %c0_59, %c0_60] : memref<2x1x32xf32, #tpu.memory_space<vmem>>, vector<1x1x32xf32>
    %87 = vector.shape_cast %86 : vector<1x1x32xf32> to vector<1x32xf32>
    %cst_61 = arith.constant dense<0.000000e+00> : vector<32xf32>
    %88 = vector.multi_reduction <add>, %82, %cst_61 [1] : vector<32x32xf32> to vector<32xf32>
    %89 = vector.shape_cast %88 : vector<32xf32> to vector<32x1xf32>
    %cst_62 = arith.constant 3.200000e+01 : f32
    %90 = vector.broadcast %cst_62 : f32 to vector<32x1xf32>
    %91 = arith.divf %89, %90 : vector<32x1xf32>
    %92 = vector.broadcast %91 : vector<32x1xf32> to vector<32x32xf32>
    %93 = arith.subf %82, %92 : vector<32x32xf32>
    %94 = arith.mulf %93, %93 : vector<32x32xf32>
    %cst_63 = arith.constant dense<0.000000e+00> : vector<32xf32>
    %95 = vector.multi_reduction <add>, %94, %cst_63 [1] : vector<32x32xf32> to vector<32xf32>
    %96 = vector.shape_cast %95 : vector<32xf32> to vector<32x1xf32>
    %cst_64 = arith.constant 3.200000e+01 : f32
    %97 = vector.broadcast %cst_64 : f32 to vector<32x1xf32>
    %98 = arith.divf %96, %97 : vector<32x1xf32>
    %cst_65 = arith.constant 9.99999974E-6 : f32
    %99 = vector.broadcast %cst_65 : f32 to vector<32x1xf32>
    %100 = arith.addf %98, %99 : vector<32x1xf32>
    %101 = math.rsqrt %100 : vector<32x1xf32>
    %102 = vector.broadcast %101 : vector<32x1xf32> to vector<32x32xf32>
    %103 = arith.mulf %93, %102 : vector<32x32xf32>
    %104 = vector.broadcast %85 : vector<1x32xf32> to vector<32x32xf32>
    %105 = arith.mulf %103, %104 : vector<32x32xf32>
    %106 = vector.broadcast %87 : vector<1x32xf32> to vector<32x32xf32>
    %107 = arith.addf %105, %106 : vector<32x32xf32>
    %c0_66 = arith.constant 0 : index
    %c0_67 = arith.constant 0 : index
    %c0_68 = arith.constant 0 : index
    %108 = vector.load %arg11[%c0_66, %c0_67, %c0_68] : memref<2x32x96xbf16, #tpu.memory_space<vmem>>, vector<1x32x96xbf16>
    %109 = vector.shape_cast %108 : vector<1x32x96xbf16> to vector<32x96xbf16>
    %c0_69 = arith.constant 0 : index
    %c0_70 = arith.constant 0 : index
    %c0_71 = arith.constant 0 : index
    %110 = vector.load %arg12[%c0_69, %c0_70, %c0_71] : memref<2x1x96xf32, #tpu.memory_space<vmem>>, vector<1x1x96xf32>
    %111 = vector.shape_cast %110 : vector<1x1x96xf32> to vector<1x96xf32>
    %112 = arith.truncf %107 : vector<32x32xf32> to vector<32x32xbf16>
    %cst_72 = arith.constant dense<0.000000e+00> : vector<32x96xf32>
    %113 = tpu.matmul %112, %109, %cst_72 {dimension_numbers = #tpu.dot_dimension_numbers<[1], [0], [0], [1], [0, 0, 1, 1], [], []>} : vector<32x32xbf16>, vector<32x96xbf16>, vector<32x96xf32> -> vector<32x96xf32>
    %114 = vector.broadcast %111 : vector<1x96xf32> to vector<32x96xf32>
    %115 = arith.addf %113, %114 : vector<32x96xf32>
    %c0_73 = arith.constant 0 : index
    %c0_74 = arith.constant 0 : index
    %c0_75 = arith.constant 0 : index
    %116 = vector.load %arg13[%c0_73, %c0_74, %c0_75] : memref<2x32x32xbf16, #tpu.memory_space<vmem>>, vector<1x32x32xbf16>
    %117 = vector.shape_cast %116 : vector<1x32x32xbf16> to vector<32x32xbf16>
    %118 = vector.extract_strided_slice %115 {offsets = [0, 0], sizes = [32, 16], strides = [1, 1]} : vector<32x96xf32> to vector<32x16xf32>
    %119 = vector.extract_strided_slice %115 {offsets = [0, 32], sizes = [32, 16], strides = [1, 1]} : vector<32x96xf32> to vector<32x16xf32>
    %120 = vector.extract_strided_slice %115 {offsets = [0, 64], sizes = [32, 16], strides = [1, 1]} : vector<32x96xf32> to vector<32x16xf32>
    %121 = arith.truncf %118 : vector<32x16xf32> to vector<32x16xbf16>
    %122 = arith.truncf %119 : vector<32x16xf32> to vector<32x16xbf16>
    %cst_76 = arith.constant dense<0.000000e+00> : vector<32x32xf32>
    %123 = tpu.matmul %121, %122, %cst_76 {dimension_numbers = #tpu.dot_dimension_numbers<[1], [1], [0], [0], [0, 0, 1, 0], [], []>} : vector<32x16xbf16>, vector<32x16xbf16>, vector<32x32xf32> -> vector<32x32xf32>
    %124 = arith.addf %123, %83 : vector<32x32xf32>
    %cst_77 = arith.constant dense<0xFF800000> : vector<32xf32>
    %125 = vector.multi_reduction <maximumf>, %124, %cst_77 [1] : vector<32x32xf32> to vector<32xf32>
    %126 = vector.shape_cast %125 : vector<32xf32> to vector<32x1xf32>
    %127 = vector.broadcast %126 : vector<32x1xf32> to vector<32x32xf32>
    %128 = arith.subf %124, %127 : vector<32x32xf32>
    %129 = math.exp %128 : vector<32x32xf32>
    %cst_78 = arith.constant dense<0.000000e+00> : vector<32xf32>
    %130 = vector.multi_reduction <add>, %129, %cst_78 [1] : vector<32x32xf32> to vector<32xf32>
    %131 = vector.shape_cast %130 : vector<32xf32> to vector<32x1xf32>
    %132 = tpu.reciprocal %131 {approx = true} : vector<32x1xf32> -> vector<32x1xf32>
    %133 = vector.broadcast %132 : vector<32x1xf32> to vector<32x32xf32>
    %134 = arith.mulf %129, %133 : vector<32x32xf32>
    %135 = arith.truncf %134 : vector<32x32xf32> to vector<32x32xbf16>
    %136 = arith.truncf %120 : vector<32x16xf32> to vector<32x16xbf16>
    %cst_79 = arith.constant dense<0.000000e+00> : vector<32x16xf32>
    %137 = tpu.matmul %135, %136, %cst_79 {dimension_numbers = #tpu.dot_dimension_numbers<[1], [0], [0], [1], [0, 0, 1, 1], [], []>} : vector<32x32xbf16>, vector<32x16xbf16>, vector<32x16xf32> -> vector<32x16xf32>
    %138 = vector.extract_strided_slice %117 {offsets = [0, 0], sizes = [16, 32], strides = [1, 1]} : vector<32x32xbf16> to vector<16x32xbf16>
    %139 = arith.truncf %137 : vector<32x16xf32> to vector<32x16xbf16>
    %cst_80 = arith.constant dense<0.000000e+00> : vector<32x32xf32>
    %140 = tpu.matmul %139, %138, %cst_80 {dimension_numbers = #tpu.dot_dimension_numbers<[1], [0], [0], [1], [0, 0, 1, 1], [], []>} : vector<32x16xbf16>, vector<16x32xbf16>, vector<32x32xf32> -> vector<32x32xf32>
    %141 = vector.extract_strided_slice %115 {offsets = [0, 16], sizes = [32, 16], strides = [1, 1]} : vector<32x96xf32> to vector<32x16xf32>
    %142 = vector.extract_strided_slice %115 {offsets = [0, 48], sizes = [32, 16], strides = [1, 1]} : vector<32x96xf32> to vector<32x16xf32>
    %143 = vector.extract_strided_slice %115 {offsets = [0, 80], sizes = [32, 16], strides = [1, 1]} : vector<32x96xf32> to vector<32x16xf32>
    %144 = arith.truncf %141 : vector<32x16xf32> to vector<32x16xbf16>
    %145 = arith.truncf %142 : vector<32x16xf32> to vector<32x16xbf16>
    %cst_81 = arith.constant dense<0.000000e+00> : vector<32x32xf32>
    %146 = tpu.matmul %144, %145, %cst_81 {dimension_numbers = #tpu.dot_dimension_numbers<[1], [1], [0], [0], [0, 0, 1, 0], [], []>} : vector<32x16xbf16>, vector<32x16xbf16>, vector<32x32xf32> -> vector<32x32xf32>
    %147 = arith.addf %146, %83 : vector<32x32xf32>
    %cst_82 = arith.constant dense<0xFF800000> : vector<32xf32>
    %148 = vector.multi_reduction <maximumf>, %147, %cst_82 [1] : vector<32x32xf32> to vector<32xf32>
    %149 = vector.shape_cast %148 : vector<32xf32> to vector<32x1xf32>
    %150 = vector.broadcast %149 : vector<32x1xf32> to vector<32x32xf32>
    %151 = arith.subf %147, %150 : vector<32x32xf32>
    %152 = math.exp %151 : vector<32x32xf32>
    %cst_83 = arith.constant dense<0.000000e+00> : vector<32xf32>
    %153 = vector.multi_reduction <add>, %152, %cst_83 [1] : vector<32x32xf32> to vector<32xf32>
    %154 = vector.shape_cast %153 : vector<32xf32> to vector<32x1xf32>
    %155 = tpu.reciprocal %154 {approx = true} : vector<32x1xf32> -> vector<32x1xf32>
    %156 = vector.broadcast %155 : vector<32x1xf32> to vector<32x32xf32>
    %157 = arith.mulf %152, %156 : vector<32x32xf32>
    %158 = arith.truncf %157 : vector<32x32xf32> to vector<32x32xbf16>
    %159 = arith.truncf %143 : vector<32x16xf32> to vector<32x16xbf16>
    %cst_84 = arith.constant dense<0.000000e+00> : vector<32x16xf32>
    %160 = tpu.matmul %158, %159, %cst_84 {dimension_numbers = #tpu.dot_dimension_numbers<[1], [0], [0], [1], [0, 0, 1, 1], [], []>} : vector<32x32xbf16>, vector<32x16xbf16>, vector<32x16xf32> -> vector<32x16xf32>
    %161 = vector.extract_strided_slice %117 {offsets = [16, 0], sizes = [16, 32], strides = [1, 1]} : vector<32x32xbf16> to vector<16x32xbf16>
    %162 = arith.truncf %160 : vector<32x16xf32> to vector<32x16xbf16>
    %cst_85 = arith.constant dense<0.000000e+00> : vector<32x32xf32>
    %163 = tpu.matmul %162, %161, %cst_85 {dimension_numbers = #tpu.dot_dimension_numbers<[1], [0], [0], [1], [0, 0, 1, 1], [], []>} : vector<32x16xbf16>, vector<16x32xbf16>, vector<32x32xf32> -> vector<32x32xf32>
    %164 = arith.addf %140, %163 : vector<32x32xf32>
    %165 = arith.addf %82, %164 : vector<32x32xf32>
    %c0_86 = arith.constant 0 : index
    %c0_87 = arith.constant 0 : index
    %c0_88 = arith.constant 0 : index
    %166 = vector.load %arg14[%c0_86, %c0_87, %c0_88] : memref<2x1x32xf32, #tpu.memory_space<vmem>>, vector<1x1x32xf32>
    %167 = vector.shape_cast %166 : vector<1x1x32xf32> to vector<1x32xf32>
    %168 = vector.broadcast %167 : vector<1x32xf32> to vector<32x32xf32>
    %169 = arith.addf %165, %168 : vector<32x32xf32>
    %c0_89 = arith.constant 0 : index
    %c0_90 = arith.constant 0 : index
    %c0_91 = arith.constant 0 : index
    %170 = vector.load %arg15[%c0_89, %c0_90, %c0_91] : memref<2x1x32xf32, #tpu.memory_space<vmem>>, vector<1x1x32xf32>
    %171 = vector.shape_cast %170 : vector<1x1x32xf32> to vector<1x32xf32>
    %c0_92 = arith.constant 0 : index
    %c0_93 = arith.constant 0 : index
    %c0_94 = arith.constant 0 : index
    %172 = vector.load %arg16[%c0_92, %c0_93, %c0_94] : memref<2x1x32xf32, #tpu.memory_space<vmem>>, vector<1x1x32xf32>
    %173 = vector.shape_cast %172 : vector<1x1x32xf32> to vector<1x32xf32>
    %cst_95 = arith.constant dense<0.000000e+00> : vector<32xf32>
    %174 = vector.multi_reduction <add>, %169, %cst_95 [1] : vector<32x32xf32> to vector<32xf32>
    %175 = vector.shape_cast %174 : vector<32xf32> to vector<32x1xf32>
    %cst_96 = arith.constant 3.200000e+01 : f32
    %176 = vector.broadcast %cst_96 : f32 to vector<32x1xf32>
    %177 = arith.divf %175, %176 : vector<32x1xf32>
    %178 = vector.broadcast %177 : vector<32x1xf32> to vector<32x32xf32>
    %179 = arith.subf %169, %178 : vector<32x32xf32>
    %180 = arith.mulf %179, %179 : vector<32x32xf32>
    %cst_97 = arith.constant dense<0.000000e+00> : vector<32xf32>
    %181 = vector.multi_reduction <add>, %180, %cst_97 [1] : vector<32x32xf32> to vector<32xf32>
    %182 = vector.shape_cast %181 : vector<32xf32> to vector<32x1xf32>
    %cst_98 = arith.constant 3.200000e+01 : f32
    %183 = vector.broadcast %cst_98 : f32 to vector<32x1xf32>
    %184 = arith.divf %182, %183 : vector<32x1xf32>
    %cst_99 = arith.constant 9.99999974E-6 : f32
    %185 = vector.broadcast %cst_99 : f32 to vector<32x1xf32>
    %186 = arith.addf %184, %185 : vector<32x1xf32>
    %187 = math.rsqrt %186 : vector<32x1xf32>
    %188 = vector.broadcast %187 : vector<32x1xf32> to vector<32x32xf32>
    %189 = arith.mulf %179, %188 : vector<32x32xf32>
    %190 = vector.broadcast %171 : vector<1x32xf32> to vector<32x32xf32>
    %191 = arith.mulf %189, %190 : vector<32x32xf32>
    %192 = vector.broadcast %173 : vector<1x32xf32> to vector<32x32xf32>
    %193 = arith.addf %191, %192 : vector<32x32xf32>
    %c0_100 = arith.constant 0 : index
    %c0_101 = arith.constant 0 : index
    %c0_102 = arith.constant 0 : index
    %194 = vector.load %arg17[%c0_100, %c0_101, %c0_102] : memref<2x32x128xbf16, #tpu.memory_space<vmem>>, vector<1x32x128xbf16>
    %195 = vector.shape_cast %194 : vector<1x32x128xbf16> to vector<32x128xbf16>
    %c0_103 = arith.constant 0 : index
    %c0_104 = arith.constant 0 : index
    %c0_105 = arith.constant 0 : index
    %196 = vector.load %arg18[%c0_103, %c0_104, %c0_105] : memref<2x1x128xf32, #tpu.memory_space<vmem>>, vector<1x1x128xf32>
    %197 = vector.shape_cast %196 : vector<1x1x128xf32> to vector<1x128xf32>
    %198 = arith.truncf %193 : vector<32x32xf32> to vector<32x32xbf16>
    %cst_106 = arith.constant dense<0.000000e+00> : vector<32x128xf32>
    %199 = tpu.matmul %198, %195, %cst_106 {dimension_numbers = #tpu.dot_dimension_numbers<[1], [0], [0], [1], [0, 0, 1, 1], [], []>} : vector<32x32xbf16>, vector<32x128xbf16>, vector<32x128xf32> -> vector<32x128xf32>
    %200 = vector.broadcast %197 : vector<1x128xf32> to vector<32x128xf32>
    %201 = arith.addf %199, %200 : vector<32x128xf32>
    %cst_107 = arith.constant 5.000000e-01 : f32
    %202 = vector.broadcast %cst_107 : f32 to vector<32x128xf32>
    %203 = arith.mulf %202, %201 : vector<32x128xf32>
    %cst_108 = arith.constant 4.471500e-02 : f32
    %204 = vector.broadcast %cst_108 : f32 to vector<32x128xf32>
    %205 = arith.mulf %204, %201 : vector<32x128xf32>
    %206 = arith.mulf %205, %201 : vector<32x128xf32>
    %207 = arith.mulf %206, %201 : vector<32x128xf32>
    %208 = arith.addf %201, %207 : vector<32x128xf32>
    %cst_109 = arith.constant 0.797884583 : f32
    %209 = vector.broadcast %cst_109 : f32 to vector<32x128xf32>
    %210 = arith.mulf %209, %208 : vector<32x128xf32>
    %211 = math.tanh %210 : vector<32x128xf32>
    %cst_110 = arith.constant 1.000000e+00 : f32
    %212 = vector.broadcast %cst_110 : f32 to vector<32x128xf32>
    %213 = arith.addf %212, %211 : vector<32x128xf32>
    %214 = arith.mulf %203, %213 : vector<32x128xf32>
    %c0_111 = arith.constant 0 : index
    %c0_112 = arith.constant 0 : index
    %c0_113 = arith.constant 0 : index
    %215 = vector.load %arg19[%c0_111, %c0_112, %c0_113] : memref<2x128x32xbf16, #tpu.memory_space<vmem>>, vector<1x128x32xbf16>
    %216 = vector.shape_cast %215 : vector<1x128x32xbf16> to vector<128x32xbf16>
    %c0_114 = arith.constant 0 : index
    %c0_115 = arith.constant 0 : index
    %c0_116 = arith.constant 0 : index
    %217 = vector.load %arg20[%c0_114, %c0_115, %c0_116] : memref<2x1x32xf32, #tpu.memory_space<vmem>>, vector<1x1x32xf32>
    %218 = vector.shape_cast %217 : vector<1x1x32xf32> to vector<1x32xf32>
    %219 = arith.truncf %214 : vector<32x128xf32> to vector<32x128xbf16>
    %cst_117 = arith.constant dense<0.000000e+00> : vector<32x32xf32>
    %220 = tpu.matmul %219, %216, %cst_117 {dimension_numbers = #tpu.dot_dimension_numbers<[1], [0], [0], [1], [0, 0, 1, 1], [], []>} : vector<32x128xbf16>, vector<128x32xbf16>, vector<32x32xf32> -> vector<32x32xf32>
    %221 = vector.broadcast %218 : vector<1x32xf32> to vector<32x32xf32>
    %222 = arith.addf %220, %221 : vector<32x32xf32>
    %223 = arith.addf %169, %222 : vector<32x32xf32>
    %c1_118 = arith.constant 1 : index
    %c0_119 = arith.constant 0 : index
    %c0_120 = arith.constant 0 : index
    %224 = vector.load %arg9[%c1_118, %c0_119, %c0_120] : memref<2x1x32xf32, #tpu.memory_space<vmem>>, vector<1x1x32xf32>
    %225 = vector.shape_cast %224 : vector<1x1x32xf32> to vector<1x32xf32>
    %c1_121 = arith.constant 1 : index
    %c0_122 = arith.constant 0 : index
    %c0_123 = arith.constant 0 : index
    %226 = vector.load %arg10[%c1_121, %c0_122, %c0_123] : memref<2x1x32xf32, #tpu.memory_space<vmem>>, vector<1x1x32xf32>
    %227 = vector.shape_cast %226 : vector<1x1x32xf32> to vector<1x32xf32>
    %cst_124 = arith.constant dense<0.000000e+00> : vector<32xf32>
    %228 = vector.multi_reduction <add>, %223, %cst_124 [1] : vector<32x32xf32> to vector<32xf32>
    %229 = vector.shape_cast %228 : vector<32xf32> to vector<32x1xf32>
    %cst_125 = arith.constant 3.200000e+01 : f32
    %230 = vector.broadcast %cst_125 : f32 to vector<32x1xf32>
    %231 = arith.divf %229, %230 : vector<32x1xf32>
    %232 = vector.broadcast %231 : vector<32x1xf32> to vector<32x32xf32>
    %233 = arith.subf %223, %232 : vector<32x32xf32>
    %234 = arith.mulf %233, %233 : vector<32x32xf32>
    %cst_126 = arith.constant dense<0.000000e+00> : vector<32xf32>
    %235 = vector.multi_reduction <add>, %234, %cst_126 [1] : vector<32x32xf32> to vector<32xf32>
    %236 = vector.shape_cast %235 : vector<32xf32> to vector<32x1xf32>
    %cst_127 = arith.constant 3.200000e+01 : f32
    %237 = vector.broadcast %cst_127 : f32 to vector<32x1xf32>
    %238 = arith.divf %236, %237 : vector<32x1xf32>
    %cst_128 = arith.constant 9.99999974E-6 : f32
    %239 = vector.broadcast %cst_128 : f32 to vector<32x1xf32>
    %240 = arith.addf %238, %239 : vector<32x1xf32>
    %241 = math.rsqrt %240 : vector<32x1xf32>
    %242 = vector.broadcast %241 : vector<32x1xf32> to vector<32x32xf32>
    %243 = arith.mulf %233, %242 : vector<32x32xf32>
    %244 = vector.broadcast %225 : vector<1x32xf32> to vector<32x32xf32>
    %245 = arith.mulf %243, %244 : vector<32x32xf32>
    %246 = vector.broadcast %227 : vector<1x32xf32> to vector<32x32xf32>
    %247 = arith.addf %245, %246 : vector<32x32xf32>
    %c1_129 = arith.constant 1 : index
    %c0_130 = arith.constant 0 : index
    %c0_131 = arith.constant 0 : index
    %248 = vector.load %arg11[%c1_129, %c0_130, %c0_131] : memref<2x32x96xbf16, #tpu.memory_space<vmem>>, vector<1x32x96xbf16>
    %249 = vector.shape_cast %248 : vector<1x32x96xbf16> to vector<32x96xbf16>
    %c1_132 = arith.constant 1 : index
    %c0_133 = arith.constant 0 : index
    %c0_134 = arith.constant 0 : index
    %250 = vector.load %arg12[%c1_132, %c0_133, %c0_134] : memref<2x1x96xf32, #tpu.memory_space<vmem>>, vector<1x1x96xf32>
    %251 = vector.shape_cast %250 : vector<1x1x96xf32> to vector<1x96xf32>
    %252 = arith.truncf %247 : vector<32x32xf32> to vector<32x32xbf16>
    %cst_135 = arith.constant dense<0.000000e+00> : vector<32x96xf32>
    %253 = tpu.matmul %252, %249, %cst_135 {dimension_numbers = #tpu.dot_dimension_numbers<[1], [0], [0], [1], [0, 0, 1, 1], [], []>} : vector<32x32xbf16>, vector<32x96xbf16>, vector<32x96xf32> -> vector<32x96xf32>
    %254 = vector.broadcast %251 : vector<1x96xf32> to vector<32x96xf32>
    %255 = arith.addf %253, %254 : vector<32x96xf32>
    %c1_136 = arith.constant 1 : index
    %c0_137 = arith.constant 0 : index
    %c0_138 = arith.constant 0 : index
    %256 = vector.load %arg13[%c1_136, %c0_137, %c0_138] : memref<2x32x32xbf16, #tpu.memory_space<vmem>>, vector<1x32x32xbf16>
    %257 = vector.shape_cast %256 : vector<1x32x32xbf16> to vector<32x32xbf16>
    %258 = vector.extract_strided_slice %255 {offsets = [0, 0], sizes = [32, 16], strides = [1, 1]} : vector<32x96xf32> to vector<32x16xf32>
    %259 = vector.extract_strided_slice %255 {offsets = [0, 32], sizes = [32, 16], strides = [1, 1]} : vector<32x96xf32> to vector<32x16xf32>
    %260 = vector.extract_strided_slice %255 {offsets = [0, 64], sizes = [32, 16], strides = [1, 1]} : vector<32x96xf32> to vector<32x16xf32>
    %261 = arith.truncf %258 : vector<32x16xf32> to vector<32x16xbf16>
    %262 = arith.truncf %259 : vector<32x16xf32> to vector<32x16xbf16>
    %cst_139 = arith.constant dense<0.000000e+00> : vector<32x32xf32>
    %263 = tpu.matmul %261, %262, %cst_139 {dimension_numbers = #tpu.dot_dimension_numbers<[1], [1], [0], [0], [0, 0, 1, 0], [], []>} : vector<32x16xbf16>, vector<32x16xbf16>, vector<32x32xf32> -> vector<32x32xf32>
    %264 = arith.addf %263, %83 : vector<32x32xf32>
    %cst_140 = arith.constant dense<0xFF800000> : vector<32xf32>
    %265 = vector.multi_reduction <maximumf>, %264, %cst_140 [1] : vector<32x32xf32> to vector<32xf32>
    %266 = vector.shape_cast %265 : vector<32xf32> to vector<32x1xf32>
    %267 = vector.broadcast %266 : vector<32x1xf32> to vector<32x32xf32>
    %268 = arith.subf %264, %267 : vector<32x32xf32>
    %269 = math.exp %268 : vector<32x32xf32>
    %cst_141 = arith.constant dense<0.000000e+00> : vector<32xf32>
    %270 = vector.multi_reduction <add>, %269, %cst_141 [1] : vector<32x32xf32> to vector<32xf32>
    %271 = vector.shape_cast %270 : vector<32xf32> to vector<32x1xf32>
    %272 = tpu.reciprocal %271 {approx = true} : vector<32x1xf32> -> vector<32x1xf32>
    %273 = vector.broadcast %272 : vector<32x1xf32> to vector<32x32xf32>
    %274 = arith.mulf %269, %273 : vector<32x32xf32>
    %275 = arith.truncf %274 : vector<32x32xf32> to vector<32x32xbf16>
    %276 = arith.truncf %260 : vector<32x16xf32> to vector<32x16xbf16>
    %cst_142 = arith.constant dense<0.000000e+00> : vector<32x16xf32>
    %277 = tpu.matmul %275, %276, %cst_142 {dimension_numbers = #tpu.dot_dimension_numbers<[1], [0], [0], [1], [0, 0, 1, 1], [], []>} : vector<32x32xbf16>, vector<32x16xbf16>, vector<32x16xf32> -> vector<32x16xf32>
    %278 = vector.extract_strided_slice %257 {offsets = [0, 0], sizes = [16, 32], strides = [1, 1]} : vector<32x32xbf16> to vector<16x32xbf16>
    %279 = arith.truncf %277 : vector<32x16xf32> to vector<32x16xbf16>
    %cst_143 = arith.constant dense<0.000000e+00> : vector<32x32xf32>
    %280 = tpu.matmul %279, %278, %cst_143 {dimension_numbers = #tpu.dot_dimension_numbers<[1], [0], [0], [1], [0, 0, 1, 1], [], []>} : vector<32x16xbf16>, vector<16x32xbf16>, vector<32x32xf32> -> vector<32x32xf32>
    %281 = vector.extract_strided_slice %255 {offsets = [0, 16], sizes = [32, 16], strides = [1, 1]} : vector<32x96xf32> to vector<32x16xf32>
    %282 = vector.extract_strided_slice %255 {offsets = [0, 48], sizes = [32, 16], strides = [1, 1]} : vector<32x96xf32> to vector<32x16xf32>
    %283 = vector.extract_strided_slice %255 {offsets = [0, 80], sizes = [32, 16], strides = [1, 1]} : vector<32x96xf32> to vector<32x16xf32>
    %284 = arith.truncf %281 : vector<32x16xf32> to vector<32x16xbf16>
    %285 = arith.truncf %282 : vector<32x16xf32> to vector<32x16xbf16>
    %cst_144 = arith.constant dense<0.000000e+00> : vector<32x32xf32>
    %286 = tpu.matmul %284, %285, %cst_144 {dimension_numbers = #tpu.dot_dimension_numbers<[1], [1], [0], [0], [0, 0, 1, 0], [], []>} : vector<32x16xbf16>, vector<32x16xbf16>, vector<32x32xf32> -> vector<32x32xf32>
    %287 = arith.addf %286, %83 : vector<32x32xf32>
    %cst_145 = arith.constant dense<0xFF800000> : vector<32xf32>
    %288 = vector.multi_reduction <maximumf>, %287, %cst_145 [1] : vector<32x32xf32> to vector<32xf32>
    %289 = vector.shape_cast %288 : vector<32xf32> to vector<32x1xf32>
    %290 = vector.broadcast %289 : vector<32x1xf32> to vector<32x32xf32>
    %291 = arith.subf %287, %290 : vector<32x32xf32>
    %292 = math.exp %291 : vector<32x32xf32>
    %cst_146 = arith.constant dense<0.000000e+00> : vector<32xf32>
    %293 = vector.multi_reduction <add>, %292, %cst_146 [1] : vector<32x32xf32> to vector<32xf32>
    %294 = vector.shape_cast %293 : vector<32xf32> to vector<32x1xf32>
    %295 = tpu.reciprocal %294 {approx = true} : vector<32x1xf32> -> vector<32x1xf32>
    %296 = vector.broadcast %295 : vector<32x1xf32> to vector<32x32xf32>
    %297 = arith.mulf %292, %296 : vector<32x32xf32>
    %298 = arith.truncf %297 : vector<32x32xf32> to vector<32x32xbf16>
    %299 = arith.truncf %283 : vector<32x16xf32> to vector<32x16xbf16>
    %cst_147 = arith.constant dense<0.000000e+00> : vector<32x16xf32>
    %300 = tpu.matmul %298, %299, %cst_147 {dimension_numbers = #tpu.dot_dimension_numbers<[1], [0], [0], [1], [0, 0, 1, 1], [], []>} : vector<32x32xbf16>, vector<32x16xbf16>, vector<32x16xf32> -> vector<32x16xf32>
    %301 = vector.extract_strided_slice %257 {offsets = [16, 0], sizes = [16, 32], strides = [1, 1]} : vector<32x32xbf16> to vector<16x32xbf16>
    %302 = arith.truncf %300 : vector<32x16xf32> to vector<32x16xbf16>
    %cst_148 = arith.constant dense<0.000000e+00> : vector<32x32xf32>
    %303 = tpu.matmul %302, %301, %cst_148 {dimension_numbers = #tpu.dot_dimension_numbers<[1], [0], [0], [1], [0, 0, 1, 1], [], []>} : vector<32x16xbf16>, vector<16x32xbf16>, vector<32x32xf32> -> vector<32x32xf32>
    %304 = arith.addf %280, %303 : vector<32x32xf32>
    %305 = arith.addf %223, %304 : vector<32x32xf32>
    %c1_149 = arith.constant 1 : index
    %c0_150 = arith.constant 0 : index
    %c0_151 = arith.constant 0 : index
    %306 = vector.load %arg14[%c1_149, %c0_150, %c0_151] : memref<2x1x32xf32, #tpu.memory_space<vmem>>, vector<1x1x32xf32>
    %307 = vector.shape_cast %306 : vector<1x1x32xf32> to vector<1x32xf32>
    %308 = vector.broadcast %307 : vector<1x32xf32> to vector<32x32xf32>
    %309 = arith.addf %305, %308 : vector<32x32xf32>
    %c1_152 = arith.constant 1 : index
    %c0_153 = arith.constant 0 : index
    %c0_154 = arith.constant 0 : index
    %310 = vector.load %arg15[%c1_152, %c0_153, %c0_154] : memref<2x1x32xf32, #tpu.memory_space<vmem>>, vector<1x1x32xf32>
    %311 = vector.shape_cast %310 : vector<1x1x32xf32> to vector<1x32xf32>
    %c1_155 = arith.constant 1 : index
    %c0_156 = arith.constant 0 : index
    %c0_157 = arith.constant 0 : index
    %312 = vector.load %arg16[%c1_155, %c0_156, %c0_157] : memref<2x1x32xf32, #tpu.memory_space<vmem>>, vector<1x1x32xf32>
    %313 = vector.shape_cast %312 : vector<1x1x32xf32> to vector<1x32xf32>
    %cst_158 = arith.constant dense<0.000000e+00> : vector<32xf32>
    %314 = vector.multi_reduction <add>, %309, %cst_158 [1] : vector<32x32xf32> to vector<32xf32>
    %315 = vector.shape_cast %314 : vector<32xf32> to vector<32x1xf32>
    %cst_159 = arith.constant 3.200000e+01 : f32
    %316 = vector.broadcast %cst_159 : f32 to vector<32x1xf32>
    %317 = arith.divf %315, %316 : vector<32x1xf32>
    %318 = vector.broadcast %317 : vector<32x1xf32> to vector<32x32xf32>
    %319 = arith.subf %309, %318 : vector<32x32xf32>
    %320 = arith.mulf %319, %319 : vector<32x32xf32>
    %cst_160 = arith.constant dense<0.000000e+00> : vector<32xf32>
    %321 = vector.multi_reduction <add>, %320, %cst_160 [1] : vector<32x32xf32> to vector<32xf32>
    %322 = vector.shape_cast %321 : vector<32xf32> to vector<32x1xf32>
    %cst_161 = arith.constant 3.200000e+01 : f32
    %323 = vector.broadcast %cst_161 : f32 to vector<32x1xf32>
    %324 = arith.divf %322, %323 : vector<32x1xf32>
    %cst_162 = arith.constant 9.99999974E-6 : f32
    %325 = vector.broadcast %cst_162 : f32 to vector<32x1xf32>
    %326 = arith.addf %324, %325 : vector<32x1xf32>
    %327 = math.rsqrt %326 : vector<32x1xf32>
    %328 = vector.broadcast %327 : vector<32x1xf32> to vector<32x32xf32>
    %329 = arith.mulf %319, %328 : vector<32x32xf32>
    %330 = vector.broadcast %311 : vector<1x32xf32> to vector<32x32xf32>
    %331 = arith.mulf %329, %330 : vector<32x32xf32>
    %332 = vector.broadcast %313 : vector<1x32xf32> to vector<32x32xf32>
    %333 = arith.addf %331, %332 : vector<32x32xf32>
    %c1_163 = arith.constant 1 : index
    %c0_164 = arith.constant 0 : index
    %c0_165 = arith.constant 0 : index
    %334 = vector.load %arg17[%c1_163, %c0_164, %c0_165] : memref<2x32x128xbf16, #tpu.memory_space<vmem>>, vector<1x32x128xbf16>
    %335 = vector.shape_cast %334 : vector<1x32x128xbf16> to vector<32x128xbf16>
    %c1_166 = arith.constant 1 : index
    %c0_167 = arith.constant 0 : index
    %c0_168 = arith.constant 0 : index
    %336 = vector.load %arg18[%c1_166, %c0_167, %c0_168] : memref<2x1x128xf32, #tpu.memory_space<vmem>>, vector<1x1x128xf32>
    %337 = vector.shape_cast %336 : vector<1x1x128xf32> to vector<1x128xf32>
    %338 = arith.truncf %333 : vector<32x32xf32> to vector<32x32xbf16>
    %cst_169 = arith.constant dense<0.000000e+00> : vector<32x128xf32>
    %339 = tpu.matmul %338, %335, %cst_169 {dimension_numbers = #tpu.dot_dimension_numbers<[1], [0], [0], [1], [0, 0, 1, 1], [], []>} : vector<32x32xbf16>, vector<32x128xbf16>, vector<32x128xf32> -> vector<32x128xf32>
    %340 = vector.broadcast %337 : vector<1x128xf32> to vector<32x128xf32>
    %341 = arith.addf %339, %340 : vector<32x128xf32>
    %cst_170 = arith.constant 5.000000e-01 : f32
    %342 = vector.broadcast %cst_170 : f32 to vector<32x128xf32>
    %343 = arith.mulf %342, %341 : vector<32x128xf32>
    %cst_171 = arith.constant 4.471500e-02 : f32
    %344 = vector.broadcast %cst_171 : f32 to vector<32x128xf32>
    %345 = arith.mulf %344, %341 : vector<32x128xf32>
    %346 = arith.mulf %345, %341 : vector<32x128xf32>
    %347 = arith.mulf %346, %341 : vector<32x128xf32>
    %348 = arith.addf %341, %347 : vector<32x128xf32>
    %cst_172 = arith.constant 0.797884583 : f32
    %349 = vector.broadcast %cst_172 : f32 to vector<32x128xf32>
    %350 = arith.mulf %349, %348 : vector<32x128xf32>
    %351 = math.tanh %350 : vector<32x128xf32>
    %cst_173 = arith.constant 1.000000e+00 : f32
    %352 = vector.broadcast %cst_173 : f32 to vector<32x128xf32>
    %353 = arith.addf %352, %351 : vector<32x128xf32>
    %354 = arith.mulf %343, %353 : vector<32x128xf32>
    %c1_174 = arith.constant 1 : index
    %c0_175 = arith.constant 0 : index
    %c0_176 = arith.constant 0 : index
    %355 = vector.load %arg19[%c1_174, %c0_175, %c0_176] : memref<2x128x32xbf16, #tpu.memory_space<vmem>>, vector<1x128x32xbf16>
    %356 = vector.shape_cast %355 : vector<1x128x32xbf16> to vector<128x32xbf16>
    %c1_177 = arith.constant 1 : index
    %c0_178 = arith.constant 0 : index
    %c0_179 = arith.constant 0 : index
    %357 = vector.load %arg20[%c1_177, %c0_178, %c0_179] : memref<2x1x32xf32, #tpu.memory_space<vmem>>, vector<1x1x32xf32>
    %358 = vector.shape_cast %357 : vector<1x1x32xf32> to vector<1x32xf32>
    %359 = arith.truncf %354 : vector<32x128xf32> to vector<32x128xbf16>
    %cst_180 = arith.constant dense<0.000000e+00> : vector<32x32xf32>
    %360 = tpu.matmul %359, %356, %cst_180 {dimension_numbers = #tpu.dot_dimension_numbers<[1], [0], [0], [1], [0, 0, 1, 1], [], []>} : vector<32x128xbf16>, vector<128x32xbf16>, vector<32x32xf32> -> vector<32x32xf32>
    %361 = vector.broadcast %358 : vector<1x32xf32> to vector<32x32xf32>
    %362 = arith.addf %360, %361 : vector<32x32xf32>
    %363 = arith.addf %309, %362 : vector<32x32xf32>
    %c0_181 = arith.constant 0 : index
    %c0_182 = arith.constant 0 : index
    %364 = vector.load %arg21[%c0_181, %c0_182] : memref<1x32xf32, #tpu.memory_space<vmem>>, vector<1x32xf32>
    %c0_183 = arith.constant 0 : index
    %c0_184 = arith.constant 0 : index
    %365 = vector.load %arg22[%c0_183, %c0_184] : memref<1x32xf32, #tpu.memory_space<vmem>>, vector<1x32xf32>
    %cst_185 = arith.constant dense<0.000000e+00> : vector<32xf32>
    %366 = vector.multi_reduction <add>, %363, %cst_185 [1] : vector<32x32xf32> to vector<32xf32>
    %367 = vector.shape_cast %366 : vector<32xf32> to vector<32x1xf32>
    %cst_186 = arith.constant 3.200000e+01 : f32
    %368 = vector.broadcast %cst_186 : f32 to vector<32x1xf32>
    %369 = arith.divf %367, %368 : vector<32x1xf32>
    %370 = vector.broadcast %369 : vector<32x1xf32> to vector<32x32xf32>
    %371 = arith.subf %363, %370 : vector<32x32xf32>
    %372 = arith.mulf %371, %371 : vector<32x32xf32>
    %cst_187 = arith.constant dense<0.000000e+00> : vector<32xf32>
    %373 = vector.multi_reduction <add>, %372, %cst_187 [1] : vector<32x32xf32> to vector<32xf32>
    %374 = vector.shape_cast %373 : vector<32xf32> to vector<32x1xf32>
    %cst_188 = arith.constant 3.200000e+01 : f32
    %375 = vector.broadcast %cst_188 : f32 to vector<32x1xf32>
    %376 = arith.divf %374, %375 : vector<32x1xf32>
    %cst_189 = arith.constant 9.99999974E-6 : f32
    %377 = vector.broadcast %cst_189 : f32 to vector<32x1xf32>
    %378 = arith.addf %376, %377 : vector<32x1xf32>
    %379 = math.rsqrt %378 : vector<32x1xf32>
    %380 = vector.broadcast %379 : vector<32x1xf32> to vector<32x32xf32>
    %381 = arith.mulf %371, %380 : vector<32x32xf32>
    %382 = vector.broadcast %364 : vector<1x32xf32> to vector<32x32xf32>
    %383 = arith.mulf %381, %382 : vector<32x32xf32>
    %384 = vector.broadcast %365 : vector<1x32xf32> to vector<32x32xf32>
    %385 = arith.addf %383, %384 : vector<32x32xf32>
    %386 = arith.truncf %385 : vector<32x32xf32> to vector<32x32xbf16>
    %c0_190 = arith.constant 0 : index
    %c0_191 = arith.constant 0 : index
    %387 = vector.load %arg24[%c0_190, %c0_191] : memref<32x128xbf16, #tpu.memory_space<vmem>>, vector<32x128xbf16>
    %cst_192 = arith.constant dense<0.000000e+00> : vector<32x128xf32>
    %388 = tpu.matmul %386, %387, %cst_192 {dimension_numbers = #tpu.dot_dimension_numbers<[1], [0], [0], [1], [0, 0, 1, 1], [], []>} : vector<32x32xbf16>, vector<32x128xbf16>, vector<32x128xf32> -> vector<32x128xf32>
    %c0_193 = arith.constant 0 : index
    %c0_194 = arith.constant 0 : index
    %389 = vector.load %arg25[%c0_193, %c0_194] : memref<32x128xf32, #tpu.memory_space<vmem>>, vector<32x128xf32>
    tpu.vector_store %arg25[%c0_193, %c0_194], %388 {strides = array<i32>} : memref<32x128xf32, #tpu.memory_space<vmem>>, vector<32x128xf32>,
    return
  }
  func.func @transform_0(%arg0: i32, %arg1: memref<2x8xi32, #tpu.memory_space<smem>>) -> (i32, i32) {
    %c0_i32 = arith.constant 0 : i32
    %c0_i32_0 = arith.constant 0 : i32
    %c0_i32_1 = arith.constant 0 : i32
    return %c0_i32, %c0_i32_0 : i32, i32
  }
  func.func @transform_1(%arg0: i32, %arg1: memref<2x8xi32, #tpu.memory_space<smem>>) -> (i32, i32) {
    %c0_i32 = arith.constant 0 : i32
    %c0_i32_0 = arith.constant 0 : i32
    %c0_i32_1 = arith.constant 0 : i32
    return %c0_i32, %c0_i32_0 : i32, i32
  }
  func.func @transform_2(%arg0: i32, %arg1: memref<2x8xi32, #tpu.memory_space<smem>>) -> (i32, i32) {
    %c0_i32 = arith.constant 0 : i32
    %c0_i32_0 = arith.constant 0 : i32
    %c0_i32_1 = arith.constant 0 : i32
    return %c0_i32, %c0_i32_0 : i32, i32
  }
  func.func @transform_3(%arg0: i32, %arg1: memref<2x8xi32, #tpu.memory_space<smem>>) -> (i32, i32) {
    %c0_i32 = arith.constant 0 : i32
    %c0_i32_0 = arith.constant 0 : i32
    %c0_i32_1 = arith.constant 0 : i32
    return %c0_i32, %c0_i32_0 : i32, i32
  }
  func.func @transform_4(%arg0: i32, %arg1: memref<2x8xi32, #tpu.memory_space<smem>>) -> (i32, i32) {
    %c0_i32 = arith.constant 0 : i32
    %c0_i32_0 = arith.constant 0 : i32
    %c0_i32_1 = arith.constant 0 : i32
    return %c0_i32, %c0_i32_0 : i32, i32
  }
  func.func @transform_5(%arg0: i32, %arg1: memref<2x8xi32, #tpu.memory_space<smem>>) -> (i32, i32) {
    %c0_i32 = arith.constant 0 : i32
    %c0_i32_0 = arith.constant 0 : i32
    %c0_i32_1 = arith.constant 0 : i32
    return %c0_i32, %c0_i32_0 : i32, i32
  }
  func.func @transform_6(%arg0: i32, %arg1: memref<2x8xi32, #tpu.memory_space<smem>>) -> (i32, i32) {
    %c0_i32 = arith.constant 0 : i32
    %c0_i32_0 = arith.constant 0 : i32
    %c0_i32_1 = arith.constant 0 : i32
    return %c0_i32, %c0_i32_0 : i32, i32
  }
  func.func @transform_7(%arg0: i32, %arg1: memref<2x8xi32, #tpu.memory_space<smem>>) -> (i32, i32, i32) {
    %c0_i32 = arith.constant 0 : i32
    %c0_i32_0 = arith.constant 0 : i32
    %c0_i32_1 = arith.constant 0 : i32
    %c0_i32_2 = arith.constant 0 : i32
    return %c0_i32, %c0_i32_0, %c0_i32_1 : i32, i32, i32
  }
  func.func @transform_8(%arg0: i32, %arg1: memref<2x8xi32, #tpu.memory_space<smem>>) -> (i32, i32, i32) {
    %c0_i32 = arith.constant 0 : i32
    %c0_i32_0 = arith.constant 0 : i32
    %c0_i32_1 = arith.constant 0 : i32
    %c0_i32_2 = arith.constant 0 : i32
    return %c0_i32, %c0_i32_0, %c0_i32_1 : i32, i32, i32
  }
  func.func @transform_9(%arg0: i32, %arg1: memref<2x8xi32, #tpu.memory_space<smem>>) -> (i32, i32, i32) {
    %c0_i32 = arith.constant 0 : i32
    %c0_i32_0 = arith.constant 0 : i32
    %c0_i32_1 = arith.constant 0 : i32
    %c0_i32_2 = arith.constant 0 : i32
    return %c0_i32, %c0_i32_0, %c0_i32_1 : i32, i32, i32
  }
  func.func @transform_10(%arg0: i32, %arg1: memref<2x8xi32, #tpu.memory_space<smem>>) -> (i32, i32, i32) {
    %c0_i32 = arith.constant 0 : i32
    %c0_i32_0 = arith.constant 0 : i32
    %c0_i32_1 = arith.constant 0 : i32
    %c0_i32_2 = arith.constant 0 : i32
    return %c0_i32, %c0_i32_0, %c0_i32_1 : i32, i32, i32
  }
  func.func @transform_11(%arg0: i32, %arg1: memref<2x8xi32, #tpu.memory_space<smem>>) -> (i32, i32, i32) {
    %c0_i32 = arith.constant 0 : i32
    %c0_i32_0 = arith.constant 0 : i32
    %c0_i32_1 = arith.constant 0 : i32
    %c0_i32_2 = arith.constant 0 : i32
    return %c0_i32, %c0_i32_0, %c0_i32_1 : i32, i32, i32
  }
  func.func @transform_12(%arg0: i32, %arg1: memref<2x8xi32, #tpu.memory_space<smem>>) -> (i32, i32, i32) {
    %c0_i32 = arith.constant 0 : i32
    %c0_i32_0 = arith.constant 0 : i32
    %c0_i32_1 = arith.constant 0 : i32
    %c0_i32_2 = arith.constant 0 : i32
    return %c0_i32, %c0_i32_0, %c0_i32_1 : i32, i32, i32
  }
  func.func @transform_13(%arg0: i32, %arg1: memref<2x8xi32, #tpu.memory_space<smem>>) -> (i32, i32, i32) {
    %c0_i32 = arith.constant 0 : i32
    %c0_i32_0 = arith.constant 0 : i32
    %c0_i32_1 = arith.constant 0 : i32
    %c0_i32_2 = arith.constant 0 : i32
    return %c0_i32, %c0_i32_0, %c0_i32_1 : i32, i32, i32
  }
  func.func @transform_14(%arg0: i32, %arg1: memref<2x8xi32, #tpu.memory_space<smem>>) -> (i32, i32, i32) {
    %c0_i32 = arith.constant 0 : i32
    %c0_i32_0 = arith.constant 0 : i32
    %c0_i32_1 = arith.constant 0 : i32
    %c0_i32_2 = arith.constant 0 : i32
    return %c0_i32, %c0_i32_0, %c0_i32_1 : i32, i32, i32
  }
  func.func @transform_15(%arg0: i32, %arg1: memref<2x8xi32, #tpu.memory_space<smem>>) -> (i32, i32, i32) {
    %c0_i32 = arith.constant 0 : i32
    %c0_i32_0 = arith.constant 0 : i32
    %c0_i32_1 = arith.constant 0 : i32
    %c0_i32_2 = arith.constant 0 : i32
    return %c0_i32, %c0_i32_0, %c0_i32_1 : i32, i32, i32
  }
  func.func @transform_16(%arg0: i32, %arg1: memref<2x8xi32, #tpu.memory_space<smem>>) -> (i32, i32, i32) {
    %c0_i32 = arith.constant 0 : i32
    %c0_i32_0 = arith.constant 0 : i32
    %c0_i32_1 = arith.constant 0 : i32
    %c0_i32_2 = arith.constant 0 : i32
    return %c0_i32, %c0_i32_0, %c0_i32_1 : i32, i32, i32
  }
  func.func @transform_17(%arg0: i32, %arg1: memref<2x8xi32, #tpu.memory_space<smem>>) -> (i32, i32, i32) {
    %c0_i32 = arith.constant 0 : i32
    %c0_i32_0 = arith.constant 0 : i32
    %c0_i32_1 = arith.constant 0 : i32
    %c0_i32_2 = arith.constant 0 : i32
    return %c0_i32, %c0_i32_0, %c0_i32_1 : i32, i32, i32
  }
  func.func @transform_18(%arg0: i32, %arg1: memref<2x8xi32, #tpu.memory_space<smem>>) -> (i32, i32, i32) {
    %c0_i32 = arith.constant 0 : i32
    %c0_i32_0 = arith.constant 0 : i32
    %c0_i32_1 = arith.constant 0 : i32
    %c0_i32_2 = arith.constant 0 : i32
    return %c0_i32, %c0_i32_0, %c0_i32_1 : i32, i32, i32
  }
  func.func @transform_19(%arg0: i32, %arg1: memref<2x8xi32, #tpu.memory_space<smem>>) -> (i32, i32) {
    %c0_i32 = arith.constant 0 : i32
    %c0_i32_0 = arith.constant 0 : i32
    %c0_i32_1 = arith.constant 0 : i32
    return %c0_i32, %c0_i32_0 : i32, i32
  }
  func.func @transform_20(%arg0: i32, %arg1: memref<2x8xi32, #tpu.memory_space<smem>>) -> (i32, i32) {
    %c0_i32 = arith.constant 0 : i32
    %c0_i32_0 = arith.constant 0 : i32
    %c0_i32_1 = arith.constant 0 : i32
    return %c0_i32, %c0_i32_0 : i32, i32
  }
  func.func @transform_21(%arg0: i32, %arg1: memref<2x8xi32, #tpu.memory_space<smem>>) -> (i32, i32) {
    %c0_i32 = arith.constant 0 : i32
    %c0_i32_0 = arith.constant 0 : i32
    %c0_i32_1 = arith.constant 0 : i32
    return %c0_i32, %c0_i32_0 : i32, i32
  }
  func.func @transform_22(%arg0: i32, %arg1: memref<2x8xi32, #tpu.memory_space<smem>>) -> (i32, i32) {
    %c0_i32 = arith.constant 0 : i32
    %c0_i32_0 = arith.constant 0 : i32
    %c0_i32_1 = arith.constant 0 : i32
    return %c0_i32, %c0_i32_0 : i32, i32
  }
  func.func @transform_23(%arg0: i32, %arg1: memref<2x8xi32, #tpu.memory_space<smem>>) -> (i32, i32) {
    %c0_i32 = arith.constant 0 : i32
    %c0_i32_0 = arith.constant 0 : i32
    %c0_i32_1 = arith.constant 0 : i32
    return %c0_i32, %c0_i32_0 : i32, i32
  }
}

</mosaic_0001>

<llo_original>
// kernel: clip_caption_forward.1
$region0: #{clip_caption_forward.1}
  #allocation0 [shape = 'u32[]', space=smem, size = 0x4, offset = 0x4, fixed_abs, tag = 'smem constant byte address 0x4 - core index']
  #allocation1 [shape = 'u32[144,128]{1,0:T(1,128)}', space=vmem, size = 0x12000, scoped, tag = 'internal scratch']
  #allocation2 [shape = 's32[1]{0}', space=sflag, size = 0x4, scoped, tag = 'scoped memory for clip_caption_forward.1']
  #allocation3 [shape = 'u8[1024]{0}', space=smem, size = 0x400, scoped, tag = 'prefetched SMEM operand 0']
  %s0 = inlined_call_operand.vmem [shape: s32[2,8], index: 0, kind: input, shape index: {}]
  %s1 = inlined_call_operand.vmem [shape: f32[2,64], index: 1, kind: input, shape index: {}]
  %s2 = inlined_call_operand.vmem [shape: f32[32,32], index: 2, kind: input, shape index: {}]
  %s3 = inlined_call_operand.vmem [shape: f32[32,32], index: 3, kind: input, shape index: {}]
  %s4 = inlined_call_operand.vmem [shape: bf16[64,128], index: 4, kind: input, shape index: {}]
  %s5 = inlined_call_operand.hbm [shape: f32[1,128], index: 5, kind: input, shape index: {}]
  %s6 = inlined_call_operand.vmem [shape: bf16[128,256], index: 6, kind: input, shape index: {}]
  %s7 = inlined_call_operand.hbm [shape: f32[1,256], index: 7, kind: input, shape index: {}]
  %s8 = inlined_call_operand.hbm [shape: f32[2,1,32], index: 8, kind: input, shape index: {}]
  %s9 = inlined_call_operand.hbm [shape: f32[2,1,32], index: 9, kind: input, shape index: {}]
  %s10 = inlined_call_operand.vmem [shape: bf16[2,32,96], index: 10, kind: input, shape index: {}]
  %s11 = inlined_call_operand.hbm [shape: f32[2,1,96], index: 11, kind: input, shape index: {}]
  %s12 = inlined_call_operand.vmem [shape: bf16[2,32,32], index: 12, kind: input, shape index: {}]
  %s13 = inlined_call_operand.hbm [shape: f32[2,1,32], index: 13, kind: input, shape index: {}]
  %s14 = inlined_call_operand.hbm [shape: f32[2,1,32], index: 14, kind: input, shape index: {}]
  %s15 = inlined_call_operand.hbm [shape: f32[2,1,32], index: 15, kind: input, shape index: {}]
  %s16 = inlined_call_operand.vmem [shape: bf16[2,32,128], index: 16, kind: input, shape index: {}]
  %s17 = inlined_call_operand.hbm [shape: f32[2,1,128], index: 17, kind: input, shape index: {}]
  %s18 = inlined_call_operand.vmem [shape: bf16[2,128,32], index: 18, kind: input, shape index: {}]
  %s19 = inlined_call_operand.hbm [shape: f32[2,1,32], index: 19, kind: input, shape index: {}]
  %s20 = inlined_call_operand.hbm [shape: f32[1,32], index: 20, kind: input, shape index: {}]
  %s21 = inlined_call_operand.hbm [shape: f32[1,32], index: 21, kind: input, shape index: {}]
  %s22 = inlined_call_operand.vmem [shape: f32[128,32], index: 22, kind: input, shape index: {}]
  %s23 = inlined_call_operand.hbm [shape: bf16[32,128], index: 23, kind: input, shape index: {}]
  %s24 = inlined_call_operand.hbm [shape: f32[32,128], index: 24, kind: output, shape index: {}]
  %s25 = sld [smem:[#allocation0]]
  $region154: #{clip_caption_forward.1} parent=0
    _
  %s27 = ssub.s32 1, %s25
  %s28 = scalar_select 0, %s27, %s25
  %s29 = sshll.u32 %s0, 4
  %s30 = int_to_ptr.vmem [resolvable:$true] %s29
  %32 = dma.vmem_to_smem %s30, 32, [#allocation3], [#allocation2]
  %33 = dma.done [#allocation2], 32
  %34 = sfence
  $region1: #{clip_caption_forward.1} parent=0
    #allocation4 [shape = 'u8[512]{0}', space=vmem, size = 0x400, scoped, tag = 'input window, operand 5, single buffered']
    #allocation5 [shape = 's32[1]{0}', space=sflag, size = 0x4, scoped, tag = 'scoped memory for clip_caption_forward.1']
    #allocation6 [shape = 's32[1]{0}', space=sflag, size = 0x4, scoped, tag = 'scoped memory for clip_caption_forward.1']
    #allocation7 [shape = 'u8[1024]{0}', space=vmem, size = 0x400, scoped, tag = 'input window, operand 7, single buffered']
    #allocation8 [shape = 's32[1]{0}', space=sflag, size = 0x4, scoped, tag = 'scoped memory for clip_caption_forward.1']
    #allocation9 [shape = 'u8[1024]{0}', space=vmem, size = 0x400, scoped, tag = 'input window, operand 8, single buffered']
    #allocation10 [shape = 'u8[1024]{0}', space=vmem, size = 0x400, scoped, tag = 'input window, operand 9, single buffered']
    #allocation11 [shape = 's32[1]{0}', space=sflag, size = 0x4, scoped, tag = 'scoped memory for clip_caption_forward.1']
    #allocation12 [shape = 'u8[1024]{0}', space=vmem, size = 0x400, scoped, tag = 'input window, operand 11, single buffered']
    #allocation13 [shape = 'u8[1024]{0}', space=vmem, size = 0x400, scoped, tag = 'input window, operand 13, single buffered']
    #allocation14 [shape = 's32[1]{0}', space=sflag, size = 0x4, scoped, tag = 'scoped memory for clip_caption_forward.1']
    #allocation15 [shape = 'u8[1024]{0}', space=vmem, size = 0x400, scoped, tag = 'input window, operand 14, single buffered']
    #allocation16 [shape = 'u8[1024]{0}', space=vmem, size = 0x400, scoped, tag = 'input window, operand 15, single buffered']
    #allocation17 [shape = 's32[1]{0}', space=sflag, size = 0x4, scoped, tag = 'scoped memory for clip_caption_forward.1']
    #allocation18 [shape = 'u8[1024]{0}', space=vmem, size = 0x400, scoped, tag = 'input window, operand 17, single buffered']
    #allocation19 [shape = 'u8[1024]{0}', space=vmem, size = 0x400, scoped, tag = 'input window, operand 19, single buffered']
    #allocation20 [shape = 's32[1]{0}', space=sflag, size = 0x4, scoped, tag = 'scoped memory for clip_caption_forward.1']
    #allocation21 [shape = 'u8[512]{0}', space=vmem, size = 0x400, scoped, tag = 'input window, operand 20, single buffered']
    #allocation22 [shape = 'u8[512]{0}', space=vmem, size = 0x400, scoped, tag = 'input window, operand 21, single buffered']
    #allocation23 [shape = 's32[1]{0}', space=sflag, size = 0x4, scoped, tag = 'scoped memory for clip_caption_forward.1']
    #allocation24 [shape = 'u8[8192]{0}', space=vmem, size = 0x2000, scoped, tag = 'input window, operand 23, single buffered']
    #allocation25 [shape = 'u8[16384]{0}', space=vmem, size = 0x4000, scoped, tag = 'output window, operand 0, single buffered']
    %35 = vsyncpa [#allocation5], 0
    %36 = vsyncpa [#allocation8], 0
    %37 = vsyncpa [#allocation11], 0
    %38 = vsyncpa [#allocation14], 0
    %39 = vsyncpa [#allocation17], 0
    %40 = vsyncpa [#allocation20], 0
    %41 = vsyncpa [#allocation23], 0
    %42 = vsyncpa [#allocation6], 0
    // Predicated region
    $region2: #{clip_caption_forward.1} parent=1 // pred_check
      _
    $region3: #{clip_caption_forward.1} parent=1 // pred_check_branch
      %44 = sbr.rel (0) target = $region5
    $region4: #{clip_caption_forward.1} parent=1 // pred_region
      _
    $region5: #{clip_caption_forward.1} parent=1 // pred_fallthru
      _
    // Predicated region
    $region6: #{clip_caption_forward.1} parent=1 // pred_check
      _
    $region7: #{clip_caption_forward.1} parent=1 // pred_check_branch
      %46 = sbr.rel (0) target = $region9
    $region8: #{clip_caption_forward.1} parent=1 // pred_region
      _
    $region9: #{clip_caption_forward.1} parent=1 // pred_fallthru
      _
    // Predicated region
    $region10: #{clip_caption_forward.1} parent=1 // pred_check
      _
    $region11: #{clip_caption_forward.1} parent=1 // pred_check_branch
      %48 = sbr.rel (0) target = $region13
    $region12: #{clip_caption_forward.1} parent=1 // pred_region
      _
    $region13: #{clip_caption_forward.1} parent=1 // pred_fallthru
      _
    // Predicated region
    $region14: #{clip_caption_forward.1} parent=1 // pred_check
      _
    $region15: #{clip_caption_forward.1} parent=1 // pred_check_branch
      %50 = sbr.rel (0) target = $region17
    $region16: #{clip_caption_forward.1} parent=1 // pred_region
      _
    $region17: #{clip_caption_forward.1} parent=1 // pred_fallthru
      _
    // Predicated region
    $region18: #{clip_caption_forward.1} parent=1 // pred_check
      _
    $region19: #{clip_caption_forward.1} parent=1 // pred_check_branch
      %52 = sbr.rel (0) target = $region21
    $region20: #{clip_caption_forward.1} parent=1 // pred_region
      %s54 = ssub.s32 16, 16
      %55 = vsyncadd [#allocation5], %s54
      %s57 = sshll.u32 [#allocation4], 4
      %s58 = int_to_ptr.vmem [resolvable:$true] %s57
      %60 = dma.hbm_to_vmem [thread:$0]  %s5, 16, %s58, [#allocation5]
    $region21: #{clip_caption_forward.1} parent=1 // pred_fallthru
      _
    // Predicated region
    $region22: #{clip_caption_forward.1} parent=1 // pred_check
      _
    $region23: #{clip_caption_forward.1} parent=1 // pred_check_branch
      %62 = sbr.rel (0) target = $region25
    $region24: #{clip_caption_forward.1} parent=1 // pred_region
      _
    $region25: #{clip_caption_forward.1} parent=1 // pred_fallthru
      _
    // Predicated region
    $region26: #{clip_caption_forward.1} parent=1 // pred_check
      _
    $region27: #{clip_caption_forward.1} parent=1 // pred_check_branch
      %64 = sbr.rel (0) target = $region29
    $region28: #{clip_caption_forward.1} parent=1 // pred_region
      %s66 = ssub.s32 32, 32
      %67 = vsyncadd [#allocation8], %s66
      %s69 = sshll.u32 [#allocation7], 4
      %s70 = int_to_ptr.vmem [resolvable:$true] %s69
      %72 = dma.hbm_to_vmem [thread:$0]  %s7, 32, %s70, [#allocation8]
    $region29: #{clip_caption_forward.1} parent=1 // pred_fallthru
      _
    // Predicated region
    $region30: #{clip_caption_forward.1} parent=1 // pred_check
      _
    $region31: #{clip_caption_forward.1} parent=1 // pred_check_branch
      %74 = sbr.rel (0) target = $region33
    $region32: #{clip_caption_forward.1} parent=1 // pred_region
      %s76 = ssub.s32 32, 32
      %77 = vsyncadd [#allocation8], %s76
      %s78 = sshll.u32 [#allocation9], 4
      %s79 = int_to_ptr.vmem [resolvable:$true] %s78
      %84 = dma.hbm_to_vmem [thread:$0]  %s8, 32, %s79, [#allocation8], 16, 16, 1
    $region33: #{clip_caption_forward.1} parent=1 // pred_fallthru
      _
    // Predicated region
    $region34: #{clip_caption_forward.1} parent=1 // pred_check
      _
    $region35: #{clip_caption_forward.1} parent=1 // pred_check_branch
      %86 = sbr.rel (0) target = $region37
    $region36: #{clip_caption_forward.1} parent=1 // pred_region
      %s88 = ssub.s32 32, 32
      %89 = vsyncadd [#allocation11], %s88
      %s90 = sshll.u32 [#allocation10], 4
      %s91 = int_to_ptr.vmem [resolvable:$true] %s90
      %96 = dma.hbm_to_vmem [thread:$0]  %s9, 32, %s91, [#allocation11], 16, 16, 1
    $region37: #{clip_caption_forward.1} parent=1 // pred_fallthru
      _
    // Predicated region
    $region38: #{clip_caption_forward.1} parent=1 // pred_check
      _
    $region39: #{clip_caption_forward.1} parent=1 // pred_check_branch
      %98 = sbr.rel (0) target = $region41
    $region40: #{clip_caption_forward.1} parent=1 // pred_region
      _
    $region41: #{clip_caption_forward.1} parent=1 // pred_fallthru
      _
    // Predicated region
    $region42: #{clip_caption_forward.1} parent=1 // pred_check
      _
    $region43: #{clip_caption_forward.1} parent=1 // pred_check_branch
      %100 = sbr.rel (0) target = $region45
    $region44: #{clip_caption_forward.1} parent=1 // pred_region
      %s102 = ssub.s32 32, 32
      %103 = vsyncadd [#allocation11], %s102
      %s104 = sshll.u32 [#allocation12], 4
      %s105 = int_to_ptr.vmem [resolvable:$true] %s104
      %110 = dma.hbm_to_vmem [thread:$0]  %s11, 32, %s105, [#allocation11], 16, 16, 1
    $region45: #{clip_caption_forward.1} parent=1 // pred_fallthru
      _
    // Predicated region
    $region46: #{clip_caption_forward.1} parent=1 // pred_check
      _
    $region47: #{clip_caption_forward.1} parent=1 // pred_check_branch
      %112 = sbr.rel (0) target = $region49
    $region48: #{clip_caption_forward.1} parent=1 // pred_region
      _
    $region49: #{clip_caption_forward.1} parent=1 // pred_fallthru
      _
    // Predicated region
    $region50: #{clip_caption_forward.1} parent=1 // pred_check
      _
    $region51: #{clip_caption_forward.1} parent=1 // pred_check_branch
      %114 = sbr.rel (0) target = $region53
    $region52: #{clip_caption_forward.1} parent=1 // pred_region
      %s116 = ssub.s32 32, 32
      %117 = vsyncadd [#allocation14], %s116
      %s118 = sshll.u32 [#allocation13], 4
      %s119 = int_to_ptr.vmem [resolvable:$true] %s118
      %124 = dma.hbm_to_vmem [thread:$0]  %s13, 32, %s119, [#allocation14], 16, 16, 1
    $region53: #{clip_caption_forward.1} parent=1 // pred_fallthru
      _
    // Predicated region
    $region54: #{clip_caption_forward.1} parent=1 // pred_check
      _
    $region55: #{clip_caption_forward.1} parent=1 // pred_check_branch
      %126 = sbr.rel (0) target = $region57
    $region56: #{clip_caption_forward.1} parent=1 // pred_region
      %s128 = ssub.s32 32, 32
      %129 = vsyncadd [#allocation14], %s128
      %s130 = sshll.u32 [#allocation15], 4
      %s131 = int_to_ptr.vmem [resolvable:$true] %s130
      %136 = dma.hbm_to_vmem [thread:$0]  %s14, 32, %s131, [#allocation14], 16, 16, 1
    $region57: #{clip_caption_forward.1} parent=1 // pred_fallthru
      _
    // Predicated region
    $region58: #{clip_caption_forward.1} parent=1 // pred_check
      _
    $region59: #{clip_caption_forward.1} parent=1 // pred_check_branch
      %138 = sbr.rel (0) target = $region61
    $region60: #{clip_caption_forward.1} parent=1 // pred_region
      %s140 = ssub.s32 32, 32
      %141 = vsyncadd [#allocation17], %s140
      %s142 = sshll.u32 [#allocation16], 4
      %s143 = int_to_ptr.vmem [resolvable:$true] %s142
      %148 = dma.hbm_to_vmem [thread:$0]  %s15, 32, %s143, [#allocation17], 16, 16, 1
    $region61: #{clip_caption_forward.1} parent=1 // pred_fallthru
      _
    // Predicated region
    $region62: #{clip_caption_forward.1} parent=1 // pred_check
      _
    $region63: #{clip_caption_forward.1} parent=1 // pred_check_branch
      %150 = sbr.rel (0) target = $region65
    $region64: #{clip_caption_forward.1} parent=1 // pred_region
      _
    $region65: #{clip_caption_forward.1} parent=1 // pred_fallthru
      _
    // Predicated region
    $region66: #{clip_caption_forward.1} parent=1 // pred_check
      _
    $region67: #{clip_caption_forward.1} parent=1 // pred_check_branch
      %152 = sbr.rel (0) target = $region69
    $region68: #{clip_caption_forward.1} parent=1 // pred_region
      %s154 = ssub.s32 32, 32
      %155 = vsyncadd [#allocation17], %s154
      %s156 = sshll.u32 [#allocation18], 4
      %s157 = int_to_ptr.vmem [resolvable:$true] %s156
      %162 = dma.hbm_to_vmem [thread:$0]  %s17, 32, %s157, [#allocation17], 16, 16, 1
    $region69: #{clip_caption_forward.1} parent=1 // pred_fallthru
      _
    // Predicated region
    $region70: #{clip_caption_forward.1} parent=1 // pred_check
      _
    $region71: #{clip_caption_forward.1} parent=1 // pred_check_branch
      %164 = sbr.rel (0) target = $region73
    $region72: #{clip_caption_forward.1} parent=1 // pred_region
      _
    $region73: #{clip_caption_forward.1} parent=1 // pred_fallthru
      _
    // Predicated region
    $region74: #{clip_caption_forward.1} parent=1 // pred_check
      _
    $region75: #{clip_caption_forward.1} parent=1 // pred_check_branch
      %166 = sbr.rel (0) target = $region77
    $region76: #{clip_caption_forward.1} parent=1 // pred_region
      %s168 = ssub.s32 32, 32
      %169 = vsyncadd [#allocation20], %s168
      %s170 = sshll.u32 [#allocation19], 4
      %s171 = int_to_ptr.vmem [resolvable:$true] %s170
      %176 = dma.hbm_to_vmem [thread:$0]  %s19, 32, %s171, [#allocation20], 16, 16, 1
    $region77: #{clip_caption_forward.1} parent=1 // pred_fallthru
      _
    // Predicated region
    $region78: #{clip_caption_forward.1} parent=1 // pred_check
      _
    $region79: #{clip_caption_forward.1} parent=1 // pred_check_branch
      %178 = sbr.rel (0) target = $region81
    $region80: #{clip_caption_forward.1} parent=1 // pred_region
      %s180 = ssub.s32 16, 16
      %181 = vsyncadd [#allocation20], %s180
      %s183 = sshll.u32 [#allocation21], 4
      %s184 = int_to_ptr.vmem [resolvable:$true] %s183
      %186 = dma.hbm_to_vmem [thread:$0]  %s20, 16, %s184, [#allocation20]
    $region81: #{clip_caption_forward.1} parent=1 // pred_fallthru
      _
    // Predicated region
    $region82: #{clip_caption_forward.1} parent=1 // pred_check
      _
    $region83: #{clip_caption_forward.1} parent=1 // pred_check_branch
      %188 = sbr.rel (0) target = $region85
    $region84: #{clip_caption_forward.1} parent=1 // pred_region
      %s190 = ssub.s32 16, 16
      %191 = vsyncadd [#allocation23], %s190
      %s193 = sshll.u32 [#allocation22], 4
      %s194 = int_to_ptr.vmem [resolvable:$true] %s193
      %196 = dma.hbm_to_vmem [thread:$0]  %s21, 16, %s194, [#allocation23]
    $region85: #{clip_caption_forward.1} parent=1 // pred_fallthru
      _
    // Predicated region
    $region86: #{clip_caption_forward.1} parent=1 // pred_check
      _
    $region87: #{clip_caption_forward.1} parent=1 // pred_check_branch
      %198 = sbr.rel (0) target = $region89
    $region88: #{clip_caption_forward.1} parent=1 // pred_region
      _
    $region89: #{clip_caption_forward.1} parent=1 // pred_fallthru
      _
    // Predicated region
    $region90: #{clip_caption_forward.1} parent=1 // pred_check
      _
    $region91: #{clip_caption_forward.1} parent=1 // pred_check_branch
      %200 = sbr.rel (0) target = $region93
    $region92: #{clip_caption_forward.1} parent=1 // pred_region
      %s202 = ssub.s32 256, 256
      %203 = vsyncadd [#allocation23], %s202
      %s204 = sshll.u32 [#allocation24], 4
      %s205 = int_to_ptr.vmem [resolvable:$true] %s204
      %210 = dma.hbm_to_vmem [thread:$0]  %s23, 256, %s205, [#allocation23], 64, 64, 4
    $region93: #{clip_caption_forward.1} parent=1 // pred_fallthru
      _
    // Predicated region
    $region94: #{clip_caption_forward.1} parent=1 // pred_check
      _
    $region95: #{clip_caption_forward.1} parent=1 // pred_check_branch
      %212 = sbr.rel (0) target = $region97
    $region96: #{clip_caption_forward.1} parent=1 // pred_region
      %213 = dma.done [#allocation5], 16
    $region97: #{clip_caption_forward.1} parent=1 // pred_fallthru
      _
    // Predicated region
    $region98: #{clip_caption_forward.1} parent=1 // pred_check
      _
    $region99: #{clip_caption_forward.1} parent=1 // pred_check_branch
      %215 = sbr.rel (0) target = $region101
    $region100: #{clip_caption_forward.1} parent=1 // pred_region
      %216 = dma.done [#allocation8], 32
    $region101: #{clip_caption_forward.1} parent=1 // pred_fallthru
      _
    // Predicated region
    $region102: #{clip_caption_forward.1} parent=1 // pred_check
      _
    $region103: #{clip_caption_forward.1} parent=1 // pred_check_branch
      %218 = sbr.rel (0) target = $region105
    $region104: #{clip_caption_forward.1} parent=1 // pred_region
      %219 = dma.done [#allocation8], 32
    $region105: #{clip_caption_forward.1} parent=1 // pred_fallthru
      _
    // Predicated region
    $region106: #{clip_caption_forward.1} parent=1 // pred_check
      _
    $region107: #{clip_caption_forward.1} parent=1 // pred_check_branch
      %221 = sbr.rel (0) target = $region109
    $region108: #{clip_caption_forward.1} parent=1 // pred_region
      %222 = dma.done [#allocation11], 32
    $region109: #{clip_caption_forward.1} parent=1 // pred_fallthru
      _
    // Predicated region
    $region110: #{clip_caption_forward.1} parent=1 // pred_check
      _
    $region111: #{clip_caption_forward.1} parent=1 // pred_check_branch
      %224 = sbr.rel (0) target = $region113
    $region112: #{clip_caption_forward.1} parent=1 // pred_region
      %225 = dma.done [#allocation11], 32
    $region113: #{clip_caption_forward.1} parent=1 // pred_fallthru
      _
    // Predicated region
    $region114: #{clip_caption_forward.1} parent=1 // pred_check
      _
    $region115: #{clip_caption_forward.1} parent=1 // pred_check_branch
      %227 = sbr.rel (0) target = $region117
    $region116: #{clip_caption_forward.1} parent=1 // pred_region
      %228 = dma.done [#allocation14], 32
    $region117: #{clip_caption_forward.1} parent=1 // pred_fallthru
      _
    // Predicated region
    $region118: #{clip_caption_forward.1} parent=1 // pred_check
      _
    $region119: #{clip_caption_forward.1} parent=1 // pred_check_branch
      %230 = sbr.rel (0) target = $region121
    $region120: #{clip_caption_forward.1} parent=1 // pred_region
      %231 = dma.done [#allocation14], 32
    $region121: #{clip_caption_forward.1} parent=1 // pred_fallthru
      _
    // Predicated region
    $region122: #{clip_caption_forward.1} parent=1 // pred_check
      _
    $region123: #{clip_caption_forward.1} parent=1 // pred_check_branch
      %233 = sbr.rel (0) target = $region125
    $region124: #{clip_caption_forward.1} parent=1 // pred_region
      %234 = dma.done [#allocation17], 32
    $region125: #{clip_caption_forward.1} parent=1 // pred_fallthru
      _
    // Predicated region
    $region126: #{clip_caption_forward.1} parent=1 // pred_check
      _
    $region127: #{clip_caption_forward.1} parent=1 // pred_check_branch
      %236 = sbr.rel (0) target = $region129
    $region128: #{clip_caption_forward.1} parent=1 // pred_region
      %237 = dma.done [#allocation17], 32
    $region129: #{clip_caption_forward.1} parent=1 // pred_fallthru
      _
    // Predicated region
    $region130: #{clip_caption_forward.1} parent=1 // pred_check
      _
    $region131: #{clip_caption_forward.1} parent=1 // pred_check_branch
      %239 = sbr.rel (0) target = $region133
    $region132: #{clip_caption_forward.1} parent=1 // pred_region
      %240 = dma.done [#allocation20], 32
    $region133: #{clip_caption_forward.1} parent=1 // pred_fallthru
      _
    // Predicated region
    $region134: #{clip_caption_forward.1} parent=1 // pred_check
      _
    $region135: #{clip_caption_forward.1} parent=1 // pred_check_branch
      %242 = sbr.rel (0) target = $region137
    $region136: #{clip_caption_forward.1} parent=1 // pred_region
      %243 = dma.done [#allocation20], 16
    $region137: #{clip_caption_forward.1} parent=1 // pred_fallthru
      _
    // Predicated region
    $region138: #{clip_caption_forward.1} parent=1 // pred_check
      _
    $region139: #{clip_caption_forward.1} parent=1 // pred_check_branch
      %245 = sbr.rel (0) target = $region141
    $region140: #{clip_caption_forward.1} parent=1 // pred_region
      %246 = dma.done [#allocation23], 16
    $region141: #{clip_caption_forward.1} parent=1 // pred_fallthru
      _
    // Predicated region
    $region142: #{clip_caption_forward.1} parent=1 // pred_check
      _
    $region143: #{clip_caption_forward.1} parent=1 // pred_check_branch
      %248 = sbr.rel (0) target = $region145
    $region144: #{clip_caption_forward.1} parent=1 // pred_region
      %249 = dma.done [#allocation23], 256
    $region145: #{clip_caption_forward.1} parent=1 // pred_fallthru
      _
    %v251 = vld [vmem:[%s1] sm:$0x3]
    %v252 = vld [vmem:[%s4] sm:$0xf]
    %v253 = vld [vmem:[%s4 + $0x4] sm:$0xf]
    %v254 = vld [vmem:[%s4 + $0x8] sm:$0xf]
    %v255 = vld [vmem:[%s4 + $0xc] sm:$0xf]
    %v256 = vld [vmem:[%s4 + $0x10] sm:$0xf]
    %v257 = vld [vmem:[%s4 + $0x14] sm:$0xf]
    %v258 = vld [vmem:[%s4 + $0x18] sm:$0xf]
    %v259 = vld [vmem:[%s4 + $0x1c] sm:$0xf]
    %v260 = vld [vmem:[#allocation4] sm:$0x1]
    %v261 = vpack.c.bf16 %v251, %v251
    %v263 = vlaneseq
    %v264 = vshrl.u32 %v263, 7
    %v265 = vsub.s32 0, %v264
    %v266 = vrot.slane %v260, %v265
    %v276 = vunpack.c.l.b16 %v252
    %v277 = vunpack.c.l.b16 %v253
    %v278 = vunpack.c.l.b16 %v254
    %v279 = vunpack.c.l.b16 %v255
    %v280 = vunpack.c.l.b16 %v256
    %v281 = vunpack.c.l.b16 %v257
    %v282 = vunpack.c.l.b16 %v258
    %v283 = vunpack.c.l.b16 %v259
    %v284 = vpack.c.b16 %v277, %v276
    %v285 = vpack.c.b16 %v279, %v278
    %v286 = vpack.c.b16 %v281, %v280
    %v287 = vpack.c.b16 %v283, %v282
    %vm292 = vcmask 523264
    %v294 = vsel %vm292, %v261, 0
    %296 = vmatprep.subr.bf16.mxu0 0
    %297 = vmatpush1.bf16.msra.mxu0 %v284
    %298 = vmatprep.subr.bf16.mxu0 0
    %299 = vmatpush1.bf16.msra.mxu0 %v285
    %300 = vmatprep.subr.bf16.mxu0 0
    %301 = vmatpush1.bf16.msra.mxu0 %v286
    %302 = vmatprep.subr.bf16.mxu0 0
    %303 = vmatpush1.bf16.msra.mxu0 %v287
    %304 = vmatprep.subr.bf16.mxu0 0
    %305 = vmatpush1.bf16.msra.mxu0 0
    %306 = vmatprep.subr.bf16.mxu0 0
    %307 = vmatpush1.bf16.msra.mxu0 0
    %308 = vmatprep.subr.bf16.mxu0 0
    %309 = vmatpush1.bf16.msra.mxu0 0
    %310 = vmatprep.subr.bf16.mxu0 0
    %311 = vmatpush1.bf16.msra.mxu0 0
    %312 = vmatprep.subr.bf16.mxu0 0
    %313 = vmatpush1.bf16.msra.mxu0 0
    %314 = vmatprep.subr.bf16.mxu0 0
    %315 = vmatpush1.bf16.msra.mxu0 0
    %316 = vmatprep.subr.bf16.mxu0 0
    %317 = vmatpush1.bf16.msra.mxu0 0
    %318 = vmatprep.subr.bf16.mxu0 0
    %319 = vmatpush1.bf16.msra.mxu0 0
    %320 = vmatprep.subr.bf16.mxu0 0
    %321 = vmatpush1.bf16.msra.mxu0 0
    %322 = vmatprep.subr.bf16.mxu0 0
    %323 = vmatpush1.bf16.msra.mxu0 0
    %324 = vmatprep.subr.bf16.mxu0 0
    %325 = vmatpush1.bf16.msra.mxu0 0
    %326 = vmatprep.subr.bf16.mxu0 0
    %327 = vmatpush1.bf16.msra.mxu0 0
    %328 = vmatprep.mubr.bf16.mxu0 0
    %329 = vmatmul.mubr.bf16.gmra.mrb[0].mxu0 %v294
    %v330 = vpop.f32.mrb[0].mxu0
    %v331 = vadd.f32 %v266, %v330
    %v332 = vpop.f32.mrb[0].mxu0
    %v333 = vpop.f32.mrb[0].mxu0
    %v334 = vpop.f32.mrb[0].mxu0
    %335 = vdwg.mxu0
    %v336 = vtanh.pop %v331
    %v337 = vld [vmem:[%s6] sm:$0xff]
    %v338 = vld [vmem:[%s6 + $0x8] sm:$0xff]
    %v339 = vld [vmem:[%s6 + $0x10] sm:$0xff]
    %v340 = vld [vmem:[%s6 + $0x18] sm:$0xff]
    %v341 = vld [vmem:[%s6 + $0x20] sm:$0xff]
    %v342 = vld [vmem:[%s6 + $0x28] sm:$0xff]
    %v343 = vld [vmem:[%s6 + $0x30] sm:$0xff]
    %v344 = vld [vmem:[%s6 + $0x38] sm:$0xff]
    %v345 = vld [vmem:[%s6 + $0x40] sm:$0xff]
    %v346 = vld [vmem:[%s6 + $0x48] sm:$0xff]
    %v347 = vld [vmem:[%s6 + $0x50] sm:$0xff]
    %v348 = vld [vmem:[%s6 + $0x58] sm:$0xff]
    %v349 = vld [vmem:[%s6 + $0x60] sm:$0xff]
    %v350 = vld [vmem:[%s6 + $0x68] sm:$0xff]
    %v351 = vld [vmem:[%s6 + $0x70] sm:$0xff]
    %v352 = vld [vmem:[%s6 + $0x78] sm:$0xff]
    %v353 = vld [vmem:[#allocation7] sm:$0x3]
    %v354 = vpack.c.bf16 %v336, %v336
    %v356 = vlaneseq
    %v357 = vshrl.u32 %v356, 7
    %v358 = vsub.s32 0, %v357
    %v359 = vrot.slane %v353, %v358
    %v360 = vlaneseq
    %v361 = vshrl.u32 %v360, 7
    %v362 = vsub.s32 1, %v361
    %v363 = vrot.slane %v353, %v362
    %v382 = vunpack.c.l.b16 %v337
    %v383 = vunpack.c.h.b16 %v337
    %v384 = vunpack.c.l.b16 %v338
    %v385 = vunpack.c.h.b16 %v338
    %v386 = vunpack.c.l.b16 %v339
    %v387 = vunpack.c.h.b16 %v339
    %v388 = vunpack.c.l.b16 %v340
    %v389 = vunpack.c.h.b16 %v340
    %v390 = vunpack.c.l.b16 %v341
    %v391 = vunpack.c.h.b16 %v341
    %v392 = vunpack.c.l.b16 %v342
    %v393 = vunpack.c.h.b16 %v342
    %v394 = vunpack.c.l.b16 %v343
    %v395 = vunpack.c.h.b16 %v343
    %v396 = vunpack.c.l.b16 %v344
    %v397 = vunpack.c.h.b16 %v344
    %v398 = vunpack.c.l.b16 %v345
    %v399 = vunpack.c.h.b16 %v345
    %v400 = vunpack.c.l.b16 %v346
    %v401 = vunpack.c.h.b16 %v346
    %v402 = vunpack.c.l.b16 %v347
    %v403 = vunpack.c.h.b16 %v347
    %v404 = vunpack.c.l.b16 %v348
    %v405 = vunpack.c.h.b16 %v348
    %v406 = vunpack.c.l.b16 %v349
    %v407 = vunpack.c.h.b16 %v349
    %v408 = vunpack.c.l.b16 %v350
    %v409 = vunpack.c.h.b16 %v350
    %v410 = vunpack.c.l.b16 %v351
    %v411 = vunpack.c.h.b16 %v351
    %v412 = vunpack.c.l.b16 %v352
    %v413 = vunpack.c.h.b16 %v352
    %v414 = vpack.c.b16 %v384, %v382
    %v415 = vpack.c.b16 %v385, %v383
    %v416 = vpack.c.b16 %v388, %v386
    %v417 = vpack.c.b16 %v389, %v387
    %v418 = vpack.c.b16 %v392, %v390
    %v419 = vpack.c.b16 %v393, %v391
    %v420 = vpack.c.b16 %v396, %v394
    %v421 = vpack.c.b16 %v397, %v395
    %v422 = vpack.c.b16 %v400, %v398
    %v423 = vpack.c.b16 %v401, %v399
    %v424 = vpack.c.b16 %v404, %v402
    %v425 = vpack.c.b16 %v405, %v403
    %v426 = vpack.c.b16 %v408, %v406
    %v427 = vpack.c.b16 %v409, %v407
    %v428 = vpack.c.b16 %v412, %v410
    %v429 = vpack.c.b16 %v413, %v411
    %446 = vmatprep.subr.bf16.mxu0 %v415
    %447 = vmatpush1.bf16.msra.mxu0 %v414
    %448 = vmatprep.subr.bf16.mxu0 %v417
    %449 = vmatpush1.bf16.msra.mxu0 %v416
    %450 = vmatprep.subr.bf16.mxu0 %v419
    %451 = vmatpush1.bf16.msra.mxu0 %v418
    %452 = vmatprep.subr.bf16.mxu0 %v421
    %453 = vmatpush1.bf16.msra.mxu0 %v420
    %454 = vmatprep.subr.bf16.mxu0 %v423
    %455 = vmatpush1.bf16.msra.mxu0 %v422
    %456 = vmatprep.subr.bf16.mxu0 %v425
    %457 = vmatpush1.bf16.msra.mxu0 %v424
    %458 = vmatprep.subr.bf16.mxu0 %v427
    %459 = vmatpush1.bf16.msra.mxu0 %v426
    %460 = vmatprep.subr.bf16.mxu0 %v429
    %461 = vmatpush1.bf16.msra.mxu0 %v428
    %462 = vmatprep.subr.bf16.mxu0 0
    %463 = vmatpush1.bf16.msra.mxu0 0
    %464 = vmatprep.subr.bf16.mxu0 0
    %465 = vmatpush1.bf16.msra.mxu0 0
    %466 = vmatprep.subr.bf16.mxu0 0
    %467 = vmatpush1.bf16.msra.mxu0 0
    %468 = vmatprep.subr.bf16.mxu0 0
    %469 = vmatpush1.bf16.msra.mxu0 0
    %470 = vmatprep.subr.bf16.mxu0 0
    %471 = vmatpush1.bf16.msra.mxu0 0
    %472 = vmatprep.subr.bf16.mxu0 0
    %473 = vmatpush1.bf16.msra.mxu0 0
    %474 = vmatprep.subr.bf16.mxu0 0
    %475 = vmatpush1.bf16.msra.mxu0 0
    %476 = vmatprep.subr.bf16.mxu0 0
    %477 = vmatpush1.bf16.msra.mxu0 0
    %478 = vmatprep.mubr.bf16.mxu0 0
    %479 = vmatmul.mubr.bf16.gmra.mrb[0].mxu0 %v354
    %v480 = vpop.f32.mrb[0].mxu0
    %v481 = vadd.f32 %v359, %v480
    %v482 = vpop.f32.mrb[0].mxu0
    %v483 = vadd.f32 %v363, %v482
    %v484 = vpop.f32.mrb[0].mxu0
    %v485 = vpop.f32.mrb[0].mxu0
    %486 = vdwg.mxu0
    %s487 = sld [smem:[#allocation3]]
    %s488 = scalar_lea.vmem %s22, %s487
    %v489 = vld [vmem:[%s488] sm:$0x1]
    %s490 = sld [smem:[#allocation3 + $0x1]]
    %s491 = scalar_lea.vmem %s22, %s490
    %v492 = vld [vmem:[%s491] sm:$0x1]
    %s493 = sld [smem:[#allocation3 + $0x2]]
    %s494 = scalar_lea.vmem %s22, %s493
    %v495 = vld [vmem:[%s494] sm:$0x1]
    %s496 = sld [smem:[#allocation3 + $0x3]]
    %s497 = scalar_lea.vmem %s22, %s496
    %v498 = vld [vmem:[%s497] sm:$0x1]
    %s499 = sld [smem:[#allocation3 + $0x4]]
    %s500 = scalar_lea.vmem %s22, %s499
    %v501 = vld [vmem:[%s500] sm:$0x1]
    %s502 = sld [smem:[#allocation3 + $0x5]]
    %s503 = scalar_lea.vmem %s22, %s502
    %v504 = vld [vmem:[%s503] sm:$0x1]
    %s505 = sld [smem:[#allocation3 + $0x6]]
    %s506 = scalar_lea.vmem %s22, %s505
    %v507 = vld [vmem:[%s506] sm:$0x1]
    %s508 = sld [smem:[#allocation3 + $0x7]]
    %s509 = scalar_lea.vmem %s22, %s508
    %v510 = vld [vmem:[%s509] sm:$0x1]
    %s511 = sld [smem:[#allocation3 + $0x80]]
    %s512 = scalar_lea.vmem %s22, %s511
    %v513 = vld [vmem:[%s512] sm:$0x1]
    %s514 = sld [smem:[#allocation3 + $0x81]]
    %s515 = scalar_lea.vmem %s22, %s514
    %v516 = vld [vmem:[%s515] sm:$0x1]
    %s517 = sld [smem:[#allocation3 + $0x82]]
    %s518 = scalar_lea.vmem %s22, %s517
    %v519 = vld [vmem:[%s518] sm:$0x1]
    %s520 = sld [smem:[#allocation3 + $0x83]]
    %s521 = scalar_lea.vmem %s22, %s520
    %v522 = vld [vmem:[%s521] sm:$0x1]
    %s523 = sld [smem:[#allocation3 + $0x84]]
    %s524 = scalar_lea.vmem %s22, %s523
    %v525 = vld [vmem:[%s524] sm:$0x1]
    %s526 = sld [smem:[#allocation3 + $0x85]]
    %s527 = scalar_lea.vmem %s22, %s526
    %v528 = vld [vmem:[%s527] sm:$0x1]
    %s529 = sld [smem:[#allocation3 + $0x86]]
    %s530 = scalar_lea.vmem %s22, %s529
    %v531 = vld [vmem:[%s530] sm:$0x1]
    %s532 = sld [smem:[#allocation3 + $0x87]]
    %s533 = scalar_lea.vmem %s22, %s532
    %v534 = vld [vmem:[%s533] sm:$0x1]
    %v536 = vrot.slane %v481, 7
    %537 = vrot.lane.b32.xlu0 %v536, 96
    %v538 = vpop.permute.xlu0 %537
    %v540 = vrot.slane %v481, 6
    %541 = vrot.lane.b32.xlu0 %v540, 64
    %v542 = vpop.permute.xlu0 %541
    %v544 = vrot.slane %v481, 5
    %545 = vrot.lane.b32.xlu0 %v544, 32
    %v546 = vpop.permute.xlu0 %545
    %v549 = vrot.slane %v483, 4
    %v551 = vrot.slane %v483, 3
    %552 = vrot.lane.b32.xlu0 %v551, 96
    %v553 = vpop.permute.xlu0 %552
    %v555 = vrot.slane %v483, 2
    %556 = vrot.lane.b32.xlu0 %v555, 64
    %v557 = vpop.permute.xlu0 %556
    %v559 = vrot.slane %v483, 1
    %560 = vrot.lane.b32.xlu0 %v559, 32
    %v561 = vpop.permute.xlu0 %560
    %v564 = vrot.slane %v492, 7
    %v567 = vrot.slane %v495, 6
    %v570 = vrot.slane %v498, 5
    %v573 = vrot.slane %v501, 4
    %v576 = vrot.slane %v504, 3
    %v579 = vrot.slane %v507, 2
    %v582 = vrot.slane %v510, 1
    %vm584 = vcmask 1040384
    %v585 = vsel %vm584, %v481, %v538
    %vm586 = vcmask 1041408
    %v587 = vsel %vm586, %v585, %v542
    %vm588 = vcmask 1042432
    %v589 = vsel %vm588, %v587, %v546
    %vm590 = vcmask 1043456
    %v591 = vsel %vm590, %v589, %v549
    %vm592 = vcmask 1044480
    %v593 = vsel %vm592, %v591, %v553
    %vm594 = vcmask 1045504
    %v595 = vsel %vm594, %v593, %v557
    %vm596 = vcmask 1046528
    %v597 = vsel %vm596, %v595, %v561
    %v598 = vsel %vm584, %v489, %v564
    %v599 = vsel %vm586, %v598, %v567
    %v600 = vsel %vm588, %v599, %v570
    %v601 = vsel %vm590, %v600, %v573
    %v602 = vsel %vm592, %v601, %v576
    %v603 = vsel %vm594, %v602, %v579
    %v604 = vsel %vm596, %v603, %v582
    %v605 = vrot.slane %v481, 1
    %607 = vrot.lane.b32.xlu0 %v481, 96
    %v608 = vpop.permute.xlu0 %607
    %610 = vrot.lane.b32.xlu0 %v536, 64
    %v611 = vpop.permute.xlu0 %610
    %613 = vrot.lane.b32.xlu0 %v540, 32
    %v614 = vpop.permute.xlu0 %613
    %v616 = vrot.slane %v483, 5
    %618 = vrot.lane.b32.xlu0 %v549, 96
    %v619 = vpop.permute.xlu0 %618
    %621 = vrot.lane.b32.xlu0 %v551, 64
    %v622 = vpop.permute.xlu0 %621
    %624 = vrot.lane.b32.xlu0 %v555, 32
    %v625 = vpop.permute.xlu0 %624
    %v628 = vrot.slane %v516, 7
    %v631 = vrot.slane %v519, 6
    %v634 = vrot.slane %v522, 5
    %v637 = vrot.slane %v525, 4
    %v640 = vrot.slane %v528, 3
    %v643 = vrot.slane %v531, 2
    %v646 = vrot.slane %v534, 1
    %v648 = vsel %vm584, %v605, %v608
    %v649 = vsel %vm586, %v648, %v611
    %v650 = vsel %vm588, %v649, %v614
    %v651 = vsel %vm590, %v650, %v616
    %v652 = vsel %vm592, %v651, %v619
    %v653 = vsel %vm594, %v652, %v622
    %v654 = vsel %vm596, %v653, %v625
    %v655 = vsel %vm584, %v513, %v628
    %v656 = vsel %vm586, %v655, %v631
    %v657 = vsel %vm588, %v656, %v634
    %v658 = vsel %vm590, %v657, %v637
    %v659 = vsel %vm592, %v658, %v640
    %v660 = vsel %vm594, %v659, %v643
    %v661 = vsel %vm596, %v660, %v646
    %v662 = vld [vmem:[%s2] sm:$0xff]
    %v663 = vld [vmem:[%s2 + $0x8] sm:$0xff]
    %v664 = vld [vmem:[%s2 + $0x10] sm:$0xff]
    %v665 = vld [vmem:[%s2 + $0x18] sm:$0xff]
    %v666 = vadd.f32 %v597, %v662
    %v667 = vadd.f32 %v604, %v663
    %v668 = vadd.f32 %v654, %v664
    %v669 = vadd.f32 %v661, %v665
    %v670 = vld [vmem:[%s3] sm:$0xff]
    %v671 = vld [vmem:[%s3 + $0x8] sm:$0xff]
    %v672 = vld [vmem:[%s3 + $0x10] sm:$0xff]
    %v673 = vld [vmem:[%s3 + $0x18] sm:$0xff]
    %v674 = vld [vmem:[#allocation9] sm:$0x1]
    %v675 = vld [vmem:[#allocation10] sm:$0x1]
    %vm676 = vcmask 261120
    %v677 = vsel %vm676, %v666, 0.0
    %678 = vadd.xlane.f32.xlu0 %v677
    %v679 = vpop.xlane.xlu0 %678
    %v680 = vsel %vm676, %v667, 0.0
    %681 = vadd.xlane.f32.xlu0 %v680
    %v682 = vpop.xlane.xlu0 %681
    %v683 = vsel %vm676, %v668, 0.0
    %684 = vadd.xlane.f32.xlu0 %v683
    %v685 = vpop.xlane.xlu0 %684
    %v686 = vsel %vm676, %v669, 0.0
    %687 = vadd.xlane.f32.xlu0 %v686
    %v688 = vpop.xlane.xlu0 %687
    %v689 = vrcp.pop 32.0
    %v690 = vmul.f32 %v679, %v689
    %v691 = vmul.f32 %v682, %v689
    %v692 = vmul.f32 %v685, %v689
    %v693 = vmul.f32 %v688, %v689
    %v694 = vsub.f32 %v666, %v690
    %v695 = vsub.f32 %v667, %v691
    %v696 = vsub.f32 %v668, %v692
    %v697 = vsub.f32 %v669, %v693
    %v698 = vmul.f32 %v694, %v694
    %v699 = vmul.f32 %v695, %v695
    %v700 = vmul.f32 %v696, %v696
    %v701 = vmul.f32 %v697, %v697
    %v702 = vsel %vm676, %v698, 0.0
    %703 = vadd.xlane.f32.xlu0 %v702
    %v704 = vpop.xlane.xlu0 %703
    %v705 = vsel %vm676, %v699, 0.0
    %706 = vadd.xlane.f32.xlu0 %v705
    %v707 = vpop.xlane.xlu0 %706
    %v708 = vsel %vm676, %v700, 0.0
    %709 = vadd.xlane.f32.xlu0 %v708
    %v710 = vpop.xlane.xlu0 %709
    %v711 = vsel %vm676, %v701, 0.0
    %712 = vadd.xlane.f32.xlu0 %v711
    %v713 = vpop.xlane.xlu0 %712
    %v714 = vmul.f32 %v704, %v689
    %v715 = vmul.f32 %v707, %v689
    %v716 = vmul.f32 %v710, %v689
    %v717 = vmul.f32 %v713, %v689
    %v718 = vadd.f32 %v714, 1e-05
    %v719 = vadd.f32 %v715, 1e-05
    %v720 = vadd.f32 %v716, 1e-05
    %v721 = vadd.f32 %v717, 1e-05
    %v722 = vrsqrt.pop %v718
    %v723 = vrsqrt.pop %v719
    %v724 = vrsqrt.pop %v720
    %v725 = vrsqrt.pop %v721
    %v726 = vmul.f32 %v694, %v722
    %v727 = vmul.f32 %v695, %v723
    %v728 = vmul.f32 %v696, %v724
    %v729 = vmul.f32 %v697, %v725
    %v731 = vlaneseq
    %v732 = vshrl.u32 %v731, 7
    %v733 = vsub.s32 0, %v732
    %v734 = vrot.slane %v674, %v733
    %v736 = vmul.f32 %v726, %v734
    %v737 = vmul.f32 %v727, %v734
    %v738 = vmul.f32 %v728, %v734
    %v739 = vmul.f32 %v729, %v734
    %v741 = vlaneseq
    %v742 = vshrl.u32 %v741, 7
    %v743 = vsub.s32 0, %v742
    %v744 = vrot.slane %v675, %v743
    %v746 = vadd.f32 %v736, %v744
    %v747 = vadd.f32 %v737, %v744
    %v748 = vadd.f32 %v738, %v744
    %v749 = vadd.f32 %v739, %v744
    %v750 = vld [vmem:[%s10] sm:$0xf]
    %v751 = vld [vmem:[%s10 + $0x4] sm:$0xf]
    %v752 = vld [vmem:[%s10 + $0x8] sm:$0xf]
    %v753 = vld [vmem:[%s10 + $0xc] sm:$0xf]
    %v754 = vld [vmem:[#allocation12] sm:$0x1]
    %v755 = vpack.c.bf16 %v747, %v746
    %v756 = vpack.c.bf16 %v749, %v748
    %v758 = vlaneseq
    %v759 = vshrl.u32 %v758, 7
    %v760 = vsub.s32 0, %v759
    %v761 = vrot.slane %v754, %v760
    %v767 = vunpack.c.l.b16 %v750
    %v768 = vunpack.c.l.b16 %v751
    %v769 = vunpack.c.l.b16 %v752
    %v770 = vunpack.c.l.b16 %v753
    %v771 = vpack.c.b16 %v768, %v767
    %v772 = vpack.c.b16 %v770, %v769
    %v776 = vsel %vm676, %v755, 0
    %v779 = vsel %vm676, %v756, 0
    %781 = vmatprep.subr.bf16.mxu0 0
    %782 = vmatpush1.bf16.msra.mxu0 %v771
    %783 = vmatprep.subr.bf16.mxu0 0
    %784 = vmatpush1.bf16.msra.mxu0 %v772
    %785 = vmatprep.subr.bf16.mxu0 0
    %786 = vmatpush1.bf16.msra.mxu0 0
    %787 = vmatprep.subr.bf16.mxu0 0
    %788 = vmatpush1.bf16.msra.mxu0 0
    %789 = vmatprep.subr.bf16.mxu0 0
    %790 = vmatpush1.bf16.msra.mxu0 0
    %791 = vmatprep.subr.bf16.mxu0 0
    %792 = vmatpush1.bf16.msra.mxu0 0
    %793 = vmatprep.subr.bf16.mxu0 0
    %794 = vmatpush1.bf16.msra.mxu0 0
    %795 = vmatprep.subr.bf16.mxu0 0
    %796 = vmatpush1.bf16.msra.mxu0 0
    %797 = vmatprep.subr.bf16.mxu0 0
    %798 = vmatpush1.bf16.msra.mxu0 0
    %799 = vmatprep.subr.bf16.mxu0 0
    %800 = vmatpush1.bf16.msra.mxu0 0
    %801 = vmatprep.subr.bf16.mxu0 0
    %802 = vmatpush1.bf16.msra.mxu0 0
    %803 = vmatprep.subr.bf16.mxu0 0
    %804 = vmatpush1.bf16.msra.mxu0 0
    %805 = vmatprep.subr.bf16.mxu0 0
    %806 = vmatpush1.bf16.msra.mxu0 0
    %807 = vmatprep.subr.bf16.mxu0 0
    %808 = vmatpush1.bf16.msra.mxu0 0
    %809 = vmatprep.subr.bf16.mxu0 0
    %810 = vmatpush1.bf16.msra.mxu0 0
    %811 = vmatprep.subr.bf16.mxu0 0
    %812 = vmatpush1.bf16.msra.mxu0 0
    %813 = vmatprep.mubr.bf16.mxu0 0
    %814 = vmatmul.mubr.bf16.gmra.mrb[0].mxu0 %v776
    %v815 = vpop.f32.mrb[0].mxu0
    %v816 = vadd.f32 %v761, %v815
    %v817 = vpop.f32.mrb[0].mxu0
    %v818 = vpop.f32.mrb[0].mxu0
    %v819 = vadd.f32 %v761, %v818
    %v820 = vpop.f32.mrb[0].mxu0
    %821 = vmatprep.mubr.bf16.mxu0 0
    %822 = vmatmul.mubr.bf16.gmra.mrb[0].mxu0 %v779
    %v823 = vpop.f32.mrb[0].mxu0
    %v824 = vadd.f32 %v761, %v823
    %v825 = vpop.f32.mrb[0].mxu0
    %v826 = vpop.f32.mrb[0].mxu0
    %v827 = vadd.f32 %v761, %v826
    %v828 = vpop.f32.mrb[0].mxu0
    %829 = vdwg.mxu0
    %v830 = vld [vmem:[%s12] sm:$0xf]
    %v831 = vld [vmem:[%s12 + $0x4] sm:$0xf]
    %v832 = vld [vmem:[%s12 + $0x8] sm:$0xf]
    %v833 = vld [vmem:[%s12 + $0xc] sm:$0xf]
    %v834 = vpack.c.bf16 %v819, %v816
    %v835 = vpack.c.bf16 %v827, %v824
    %838 = vrot.lane.b32.xlu0 %v834, 96
    %v839 = vpop.permute.xlu0 %838
    %840 = vrot.lane.b32.xlu0 %v835, 96
    %v841 = vpop.permute.xlu0 %840
    %vm842 = vcmask 130048
    %v844 = vsel %vm842, %v834, 0
    %v847 = vsel %vm842, %v835, 0
    %v850 = vsel %vm842, %v839, 0
    %v853 = vsel %vm842, %v841, 0
    %855 = vmatprep.subr.bf16.mxu0 0
    %856 = vmatpush1.bf16.xpose.msra.mxu0 %v850
    %857 = vmatprep.subr.bf16.mxu0 0
    %858 = vmatpush1.bf16.xpose.msra.mxu0 %v853
    %859 = vmatprep.subr.bf16.mxu0 0
    %860 = vmatpush1.bf16.xpose.msra.mxu0 0
    %861 = vmatprep.subr.bf16.mxu0 0
    %862 = vmatpush1.bf16.xpose.msra.mxu0 0
    %863 = vmatprep.subr.bf16.mxu0 0
    %864 = vmatpush1.bf16.xpose.msra.mxu0 0
    %865 = vmatprep.subr.bf16.mxu0 0
    %866 = vmatpush1.bf16.xpose.msra.mxu0 0
    %867 = vmatprep.subr.bf16.mxu0 0
    %868 = vmatpush1.bf16.xpose.msra.mxu0 0
    %869 = vmatprep.subr.bf16.mxu0 0
    %870 = vmatpush1.bf16.xpose.msra.mxu0 0
    %871 = vmatprep.subr.bf16.mxu0 0
    %872 = vmatpush1.bf16.xpose.msra.mxu0 0
    %873 = vmatprep.subr.bf16.mxu0 0
    %874 = vmatpush1.bf16.xpose.msra.mxu0 0
    %875 = vmatprep.subr.bf16.mxu0 0
    %876 = vmatpush1.bf16.xpose.msra.mxu0 0
    %877 = vmatprep.subr.bf16.mxu0 0
    %878 = vmatpush1.bf16.xpose.msra.mxu0 0
    %879 = vmatprep.subr.bf16.mxu0 0
    %880 = vmatpush1.bf16.xpose.msra.mxu0 0
    %881 = vmatprep.subr.bf16.mxu0 0
    %882 = vmatpush1.bf16.xpose.msra.mxu0 0
    %883 = vmatprep.subr.bf16.mxu0 0
    %884 = vmatpush1.bf16.xpose.msra.mxu0 0
    %885 = vmatprep.subr.bf16.mxu0 0
    %886 = vmatpush1.bf16.xpose.msra.mxu0 0
    %887 = vmatprep.mubr.bf16.mxu0 0
    %888 = vmatmul.mubr.bf16.gmra.mrb[0].mxu0 %v844
    %v889 = vpop.f32.mrb[0].mxu0
    %v890 = vadd.f32 %v670, %v889
    %v891 = vpop.f32.mrb[0].mxu0
    %v892 = vpop.f32.mrb[0].mxu0
    %v893 = vadd.f32 %v671, %v892
    %v894 = vpop.f32.mrb[0].mxu0
    %895 = vmatprep.mubr.bf16.mxu0 0
    %896 = vmatmul.mubr.bf16.gmra.mrb[0].mxu0 %v847
    %v897 = vpop.f32.mrb[0].mxu0
    %v898 = vadd.f32 %v672, %v897
    %v899 = vpop.f32.mrb[0].mxu0
    %v900 = vpop.f32.mrb[0].mxu0
    %v901 = vadd.f32 %v673, %v900
    %v902 = vpop.f32.mrb[0].mxu0
    %903 = vdwg.mxu0
    %v904 = vsel %vm676, %v890, -inf
    %905 = vmax.xlane.f32.xlu0 %v904
    %v906 = vpop.xlane.xlu0 %905
    %v907 = vsel %vm676, %v893, -inf
    %908 = vmax.xlane.f32.xlu0 %v907
    %v909 = vpop.xlane.xlu0 %908
    %v910 = vsel %vm676, %v898, -inf
    %911 = vmax.xlane.f32.xlu0 %v910
    %v912 = vpop.xlane.xlu0 %911
    %v913 = vsel %vm676, %v901, -inf
    %914 = vmax.xlane.f32.xlu0 %v913
    %v915 = vpop.xlane.xlu0 %914
    %v916 = vsub.f32 %v890, %v906
    %v917 = vsub.f32 %v893, %v909
    %v918 = vsub.f32 %v898, %v912
    %v919 = vsub.f32 %v901, %v915
    %v920 = vmul.f32 %v916, 1.442695
    %v921 = vpow.pop %v920
    %v922 = vmul.f32 %v917, 1.442695
    %v923 = vpow.pop %v922
    %v924 = vmul.f32 %v918, 1.442695
    %v925 = vpow.pop %v924
    %v926 = vmul.f32 %v919, 1.442695
    %v927 = vpow.pop %v926
    %v928 = vsel %vm676, %v921, 0.0
    %929 = vadd.xlane.f32.xlu0 %v928
    %v930 = vpop.xlane.xlu0 %929
    %v931 = vsel %vm676, %v923, 0.0
    %932 = vadd.xlane.f32.xlu0 %v931
    %v933 = vpop.xlane.xlu0 %932
    %v934 = vsel %vm676, %v925, 0.0
    %935 = vadd.xlane.f32.xlu0 %v934
    %v936 = vpop.xlane.xlu0 %935
    %v937 = vsel %vm676, %v927, 0.0
    %938 = vadd.xlane.f32.xlu0 %v937
    %v939 = vpop.xlane.xlu0 %938
    %v940 = vrcp.pop %v930
    %v941 = vrcp.pop %v933
    %v942 = vrcp.pop %v936
    %v943 = vrcp.pop %v939
    %v944 = vmul.f32 %v921, %v940
    %v945 = vmul.f32 %v923, %v941
    %v946 = vmul.f32 %v925, %v942
    %v947 = vmul.f32 %v927, %v943
    %v948 = vpack.c.bf16 %v945, %v944
    %v949 = vpack.c.bf16 %v947, %v946
    %950 = vrot.lane.b32.xlu0 %v834, 64
    %v951 = vpop.permute.xlu0 %950
    %952 = vrot.lane.b32.xlu0 %v835, 64
    %v953 = vpop.permute.xlu0 %952
    %v957 = vsel %vm676, %v948, 0
    %v960 = vsel %vm676, %v949, 0
    %962 = vmatprep.subr.bf16.mxu0 0
    %963 = vmatpush1.bf16.msra.mxu0 %v951
    %964 = vmatprep.subr.bf16.mxu0 0
    %965 = vmatpush1.bf16.msra.mxu0 %v953
    %966 = vmatprep.subr.bf16.mxu0 0
    %967 = vmatpush1.bf16.msra.mxu0 0
    %968 = vmatprep.subr.bf16.mxu0 0
    %969 = vmatpush1.bf16.msra.mxu0 0
    %970 = vmatprep.subr.bf16.mxu0 0
    %971 = vmatpush1.bf16.msra.mxu0 0
    %972 = vmatprep.subr.bf16.mxu0 0
    %973 = vmatpush1.bf16.msra.mxu0 0
    %974 = vmatprep.subr.bf16.mxu0 0
    %975 = vmatpush1.bf16.msra.mxu0 0
    %976 = vmatprep.subr.bf16.mxu0 0
    %977 = vmatpush1.bf16.msra.mxu0 0
    %978 = vmatprep.subr.bf16.mxu0 0
    %979 = vmatpush1.bf16.msra.mxu0 0
    %980 = vmatprep.subr.bf16.mxu0 0
    %981 = vmatpush1.bf16.msra.mxu0 0
    %982 = vmatprep.subr.bf16.mxu0 0
    %983 = vmatpush1.bf16.msra.mxu0 0
    %984 = vmatprep.subr.bf16.mxu0 0
    %985 = vmatpush1.bf16.msra.mxu0 0
    %986 = vmatprep.subr.bf16.mxu0 0
    %987 = vmatpush1.bf16.msra.mxu0 0
    %988 = vmatprep.subr.bf16.mxu0 0
    %989 = vmatpush1.bf16.msra.mxu0 0
    %990 = vmatprep.subr.bf16.mxu0 0
    %991 = vmatpush1.bf16.msra.mxu0 0
    %992 = vmatprep.subr.bf16.mxu0 0
    %993 = vmatpush1.bf16.msra.mxu0 0
    %994 = vmatprep.mubr.bf16.mxu0 0
    %995 = vmatmul.mubr.bf16.gmra.mrb[0].mxu0 %v957
    %v996 = vpop.f32.mrb[0].mxu0
    %v997 = vadd.f32 0.0, %v996
    %v998 = vpop.f32.mrb[0].mxu0
    %v999 = vpop.f32.mrb[0].mxu0
    %v1000 = vadd.f32 0.0, %v999
    %v1001 = vpop.f32.mrb[0].mxu0
    %1002 = vmatprep.mubr.bf16.mxu0 0
    %1003 = vmatmul.mubr.bf16.gmra.mrb[0].mxu0 %v960
    %v1004 = vpop.f32.mrb[0].mxu0
    %v1005 = vadd.f32 0.0, %v1004
    %v1006 = vpop.f32.mrb[0].mxu0
    %v1007 = vpop.f32.mrb[0].mxu0
    %v1008 = vadd.f32 0.0, %v1007
    %v1009 = vpop.f32.mrb[0].mxu0
    %1010 = vdwg.mxu0
    %v1011 = vpack.c.bf16 %v1000, %v997
    %v1012 = vpack.c.bf16 %v1008, %v1005
    %1013 = vrot.lane.b32.xlu0 %v834, 112
    %v1014 = vpop.permute.xlu0 %1013
    %1015 = vrot.lane.b32.xlu0 %v835, 112
    %v1016 = vpop.permute.xlu0 %1015
    %1017 = vrot.lane.b32.xlu0 %v834, 80
    %v1018 = vpop.permute.xlu0 %1017
    %1019 = vrot.lane.b32.xlu0 %v835, 80
    %v1020 = vpop.permute.xlu0 %1019
    %v1022 = vsel %vm842, %v1014, 0
    %v1025 = vsel %vm842, %v1016, 0
    %v1028 = vsel %vm842, %v1018, 0
    %v1031 = vsel %vm842, %v1020, 0
    %1033 = vmatprep.subr.bf16.mxu0 0
    %1034 = vmatpush1.bf16.xpose.msra.mxu0 %v1028
    %1035 = vmatprep.subr.bf16.mxu0 0
    %1036 = vmatpush1.bf16.xpose.msra.mxu0 %v1031
    %1037 = vmatprep.subr.bf16.mxu0 0
    %1038 = vmatpush1.bf16.xpose.msra.mxu0 0
    %1039 = vmatprep.subr.bf16.mxu0 0
    %1040 = vmatpush1.bf16.xpose.msra.mxu0 0
    %1041 = vmatprep.subr.bf16.mxu0 0
    %1042 = vmatpush1.bf16.xpose.msra.mxu0 0
    %1043 = vmatprep.subr.bf16.mxu0 0
    %1044 = vmatpush1.bf16.xpose.msra.mxu0 0
    %1045 = vmatprep.subr.bf16.mxu0 0
    %1046 = vmatpush1.bf16.xpose.msra.mxu0 0
    %1047 = vmatprep.subr.bf16.mxu0 0
    %1048 = vmatpush1.bf16.xpose.msra.mxu0 0
    %1049 = vmatprep.subr.bf16.mxu0 0
    %1050 = vmatpush1.bf16.xpose.msra.mxu0 0
    %1051 = vmatprep.subr.bf16.mxu0 0
    %1052 = vmatpush1.bf16.xpose.msra.mxu0 0
    %1053 = vmatprep.subr.bf16.mxu0 0
    %1054 = vmatpush1.bf16.xpose.msra.mxu0 0
    %1055 = vmatprep.subr.bf16.mxu0 0
    %1056 = vmatpush1.bf16.xpose.msra.mxu0 0
    %1057 = vmatprep.subr.bf16.mxu0 0
    %1058 = vmatpush1.bf16.xpose.msra.mxu0 0
    %1059 = vmatprep.subr.bf16.mxu0 0
    %1060 = vmatpush1.bf16.xpose.msra.mxu0 0
    %1061 = vmatprep.subr.bf16.mxu0 0
    %1062 = vmatpush1.bf16.xpose.msra.mxu0 0
    %1063 = vmatprep.subr.bf16.mxu0 0
    %1064 = vmatpush1.bf16.xpose.msra.mxu0 0
    %1065 = vmatprep.mubr.bf16.mxu0 0
    %1066 = vmatmul.mubr.bf16.gmra.mrb[0].mxu0 %v1022
    %v1067 = vpop.f32.mrb[0].mxu0
    %v1068 = vadd.f32 %v670, %v1067
    %v1069 = vpop.f32.mrb[0].mxu0
    %v1070 = vpop.f32.mrb[0].mxu0
    %v1071 = vadd.f32 %v671, %v1070
    %v1072 = vpop.f32.mrb[0].mxu0
    %1073 = vmatprep.mubr.bf16.mxu0 0
    %1074 = vmatmul.mubr.bf16.gmra.mrb[0].mxu0 %v1025
    %v1075 = vpop.f32.mrb[0].mxu0
    %v1076 = vadd.f32 %v672, %v1075
    %v1077 = vpop.f32.mrb[0].mxu0
    %v1078 = vpop.f32.mrb[0].mxu0
    %v1079 = vadd.f32 %v673, %v1078
    %v1080 = vpop.f32.mrb[0].mxu0
    %1081 = vdwg.mxu0
    %v1082 = vsel %vm676, %v1068, -inf
    %1083 = vmax.xlane.f32.xlu0 %v1082
    %v1084 = vpop.xlane.xlu0 %1083
    %v1085 = vsel %vm676, %v1071, -inf
    %1086 = vmax.xlane.f32.xlu0 %v1085
    %v1087 = vpop.xlane.xlu0 %1086
    %v1088 = vsel %vm676, %v1076, -inf
    %1089 = vmax.xlane.f32.xlu0 %v1088
    %v1090 = vpop.xlane.xlu0 %1089
    %v1091 = vsel %vm676, %v1079, -inf
    %1092 = vmax.xlane.f32.xlu0 %v1091
    %v1093 = vpop.xlane.xlu0 %1092
    %v1094 = vsub.f32 %v1068, %v1084
    %v1095 = vsub.f32 %v1071, %v1087
    %v1096 = vsub.f32 %v1076, %v1090
    %v1097 = vsub.f32 %v1079, %v1093
    %v1098 = vmul.f32 %v1094, 1.442695
    %v1099 = vpow.pop %v1098
    %v1100 = vmul.f32 %v1095, 1.442695
    %v1101 = vpow.pop %v1100
    %v1102 = vmul.f32 %v1096, 1.442695
    %v1103 = vpow.pop %v1102
    %v1104 = vmul.f32 %v1097, 1.442695
    %v1105 = vpow.pop %v1104
    %v1106 = vsel %vm676, %v1099, 0.0
    %1107 = vadd.xlane.f32.xlu0 %v1106
    %v1108 = vpop.xlane.xlu0 %1107
    %v1109 = vsel %vm676, %v1101, 0.0
    %1110 = vadd.xlane.f32.xlu0 %v1109
    %v1111 = vpop.xlane.xlu0 %1110
    %v1112 = vsel %vm676, %v1103, 0.0
    %1113 = vadd.xlane.f32.xlu0 %v1112
    %v1114 = vpop.xlane.xlu0 %1113
    %v1115 = vsel %vm676, %v1105, 0.0
    %1116 = vadd.xlane.f32.xlu0 %v1115
    %v1117 = vpop.xlane.xlu0 %1116
    %v1118 = vrcp.pop %v1108
    %v1119 = vrcp.pop %v1111
    %v1120 = vrcp.pop %v1114
    %v1121 = vrcp.pop %v1117
    %v1122 = vmul.f32 %v1099, %v1118
    %v1123 = vmul.f32 %v1101, %v1119
    %v1124 = vmul.f32 %v1103, %v1120
    %v1125 = vmul.f32 %v1105, %v1121
    %v1126 = vpack.c.bf16 %v1123, %v1122
    %v1127 = vpack.c.bf16 %v1125, %v1124
    %1128 = vrot.lane.b32.xlu0 %v834, 48
    %v1129 = vpop.permute.xlu0 %1128
    %1130 = vrot.lane.b32.xlu0 %v835, 48
    %v1131 = vpop.permute.xlu0 %1130
    %v1135 = vsel %vm676, %v1126, 0
    %v1138 = vsel %vm676, %v1127, 0
    %1140 = vmatprep.subr.bf16.mxu0 0
    %1141 = vmatpush1.bf16.msra.mxu0 %v1129
    %1142 = vmatprep.subr.bf16.mxu0 0
    %1143 = vmatpush1.bf16.msra.mxu0 %v1131
    %1144 = vmatprep.subr.bf16.mxu0 0
    %1145 = vmatpush1.bf16.msra.mxu0 0
    %1146 = vmatprep.subr.bf16.mxu0 0
    %1147 = vmatpush1.bf16.msra.mxu0 0
    %1148 = vmatprep.subr.bf16.mxu0 0
    %1149 = vmatpush1.bf16.msra.mxu0 0
    %1150 = vmatprep.subr.bf16.mxu0 0
    %1151 = vmatpush1.bf16.msra.mxu0 0
    %1152 = vmatprep.subr.bf16.mxu0 0
    %1153 = vmatpush1.bf16.msra.mxu0 0
    %1154 = vmatprep.subr.bf16.mxu0 0
    %1155 = vmatpush1.bf16.msra.mxu0 0
    %1156 = vmatprep.subr.bf16.mxu0 0
    %1157 = vmatpush1.bf16.msra.mxu0 0
    %1158 = vmatprep.subr.bf16.mxu0 0
    %1159 = vmatpush1.bf16.msra.mxu0 0
    %1160 = vmatprep.subr.bf16.mxu0 0
    %1161 = vmatpush1.bf16.msra.mxu0 0
    %1162 = vmatprep.subr.bf16.mxu0 0
    %1163 = vmatpush1.bf16.msra.mxu0 0
    %1164 = vmatprep.subr.bf16.mxu0 0
    %1165 = vmatpush1.bf16.msra.mxu0 0
    %1166 = vmatprep.subr.bf16.mxu0 0
    %1167 = vmatpush1.bf16.msra.mxu0 0
    %1168 = vmatprep.subr.bf16.mxu0 0
    %1169 = vmatpush1.bf16.msra.mxu0 0
    %1170 = vmatprep.subr.bf16.mxu0 0
    %1171 = vmatpush1.bf16.msra.mxu0 0
    %1172 = vmatprep.mubr.bf16.mxu0 0
    %1173 = vmatmul.mubr.bf16.gmra.mrb[0].mxu0 %v1135
    %v1174 = vpop.f32.mrb[0].mxu0
    %v1175 = vadd.f32 0.0, %v1174
    %v1176 = vpop.f32.mrb[0].mxu0
    %v1177 = vpop.f32.mrb[0].mxu0
    %v1178 = vadd.f32 0.0, %v1177
    %v1179 = vpop.f32.mrb[0].mxu0
    %1180 = vmatprep.mubr.bf16.mxu0 0
    %1181 = vmatmul.mubr.bf16.gmra.mrb[0].mxu0 %v1138
    %v1182 = vpop.f32.mrb[0].mxu0
    %v1183 = vadd.f32 0.0, %v1182
    %v1184 = vpop.f32.mrb[0].mxu0
    %v1185 = vpop.f32.mrb[0].mxu0
    %v1186 = vadd.f32 0.0, %v1185
    %v1187 = vpop.f32.mrb[0].mxu0
    %1188 = vdwg.mxu0
    %v1189 = vpack.c.bf16 %v1178, %v1175
    %v1190 = vpack.c.bf16 %v1186, %v1183
    %v1193 = vunpack.c.l.b16 %v832
    %v1194 = vunpack.c.l.b16 %v833
    %v1195 = vpack.c.b16 %v1194, %v1193
    %v1198 = vsel %vm842, %v1189, 0
    %v1201 = vsel %vm842, %v1190, 0
    %1203 = vmatprep.subr.bf16.mxu0 0
    %1204 = vmatpush1.bf16.msra.mxu0 %v1195
    %1205 = vmatprep.subr.bf16.mxu0 0
    %1206 = vmatpush1.bf16.msra.mxu0 0
    %1207 = vmatprep.subr.bf16.mxu0 0
    %1208 = vmatpush1.bf16.msra.mxu0 0
    %1209 = vmatprep.subr.bf16.mxu0 0
    %1210 = vmatpush1.bf16.msra.mxu0 0
    %1211 = vmatprep.subr.bf16.mxu0 0
    %1212 = vmatpush1.bf16.msra.mxu0 0
    %1213 = vmatprep.subr.bf16.mxu0 0
    %1214 = vmatpush1.bf16.msra.mxu0 0
    %1215 = vmatprep.subr.bf16.mxu0 0
    %1216 = vmatpush1.bf16.msra.mxu0 0
    %1217 = vmatprep.subr.bf16.mxu0 0
    %1218 = vmatpush1.bf16.msra.mxu0 0
    %1219 = vmatprep.subr.bf16.mxu0 0
    %1220 = vmatpush1.bf16.msra.mxu0 0
    %1221 = vmatprep.subr.bf16.mxu0 0
    %1222 = vmatpush1.bf16.msra.mxu0 0
    %1223 = vmatprep.subr.bf16.mxu0 0
    %1224 = vmatpush1.bf16.msra.mxu0 0
    %1225 = vmatprep.subr.bf16.mxu0 0
    %1226 = vmatpush1.bf16.msra.mxu0 0
    %1227 = vmatprep.subr.bf16.mxu0 0
    %1228 = vmatpush1.bf16.msra.mxu0 0
    %1229 = vmatprep.subr.bf16.mxu0 0
    %1230 = vmatpush1.bf16.msra.mxu0 0
    %1231 = vmatprep.subr.bf16.mxu0 0
    %1232 = vmatpush1.bf16.msra.mxu0 0
    %1233 = vmatprep.subr.bf16.mxu0 0
    %1234 = vmatpush1.bf16.msra.mxu0 0
    %1235 = vmatprep.mubr.bf16.mxu0 0
    %1236 = vmatmul.mubr.bf16.gmra.mrb[0].mxu0 %v1198
    %v1237 = vpop.f32.mrb[0].mxu0
    %v1238 = vadd.f32 0.0, %v1237
    %v1239 = vpop.f32.mrb[0].mxu0
    %v1240 = vpop.f32.mrb[0].mxu0
    %v1241 = vadd.f32 0.0, %v1240
    %v1242 = vpop.f32.mrb[0].mxu0
    %1243 = vmatprep.mubr.bf16.mxu0 0
    %1244 = vmatmul.mubr.bf16.gmra.mrb[0].mxu0 %v1201
    %v1245 = vpop.f32.mrb[0].mxu0
    %v1246 = vadd.f32 0.0, %v1245
    %v1247 = vpop.f32.mrb[0].mxu0
    %v1248 = vpop.f32.mrb[0].mxu0
    %v1249 = vadd.f32 0.0, %v1248
    %v1250 = vpop.f32.mrb[0].mxu0
    %1251 = vdwg.mxu0
    %v1254 = vunpack.c.l.b16 %v830
    %v1255 = vunpack.c.l.b16 %v831
    %v1256 = vpack.c.b16 %v1255, %v1254
    %v1259 = vsel %vm842, %v1011, 0
    %v1262 = vsel %vm842, %v1012, 0
    %1264 = vmatprep.subr.bf16.mxu0 0
    %1265 = vmatpush1.bf16.msra.mxu0 %v1256
    %1266 = vmatprep.subr.bf16.mxu0 0
    %1267 = vmatpush1.bf16.msra.mxu0 0
    %1268 = vmatprep.subr.bf16.mxu0 0
    %1269 = vmatpush1.bf16.msra.mxu0 0
    %1270 = vmatprep.subr.bf16.mxu0 0
    %1271 = vmatpush1.bf16.msra.mxu0 0
    %1272 = vmatprep.subr.bf16.mxu0 0
    %1273 = vmatpush1.bf16.msra.mxu0 0
    %1274 = vmatprep.subr.bf16.mxu0 0
    %1275 = vmatpush1.bf16.msra.mxu0 0
    %1276 = vmatprep.subr.bf16.mxu0 0
    %1277 = vmatpush1.bf16.msra.mxu0 0
    %1278 = vmatprep.subr.bf16.mxu0 0
    %1279 = vmatpush1.bf16.msra.mxu0 0
    %1280 = vmatprep.subr.bf16.mxu0 0
    %1281 = vmatpush1.bf16.msra.mxu0 0
    %1282 = vmatprep.subr.bf16.mxu0 0
    %1283 = vmatpush1.bf16.msra.mxu0 0
    %1284 = vmatprep.subr.bf16.mxu0 0
    %1285 = vmatpush1.bf16.msra.mxu0 0
    %1286 = vmatprep.subr.bf16.mxu0 0
    %1287 = vmatpush1.bf16.msra.mxu0 0
    %1288 = vmatprep.subr.bf16.mxu0 0
    %1289 = vmatpush1.bf16.msra.mxu0 0
    %1290 = vmatprep.subr.bf16.mxu0 0
    %1291 = vmatpush1.bf16.msra.mxu0 0
    %1292 = vmatprep.subr.bf16.mxu0 0
    %1293 = vmatpush1.bf16.msra.mxu0 0
    %1294 = vmatprep.subr.bf16.mxu0 0
    %1295 = vmatpush1.bf16.msra.mxu0 0
    %1296 = vmatprep.mubr.bf16.mxu0 0
    %1297 = vmatmul.mubr.bf16.gmra.mrb[0].mxu0 %v1259
    %v1298 = vpop.f32.mrb[0].mxu0
    %v1299 = vadd.f32 %v1238, %v1298
    %v1300 = vpop.f32.mrb[0].mxu0
    %v1301 = vpop.f32.mrb[0].mxu0
    %v1302 = vadd.f32 %v1241, %v1301
    %v1303 = vpop.f32.mrb[0].mxu0
    %1304 = vmatprep.mubr.bf16.mxu0 0
    %1305 = vmatmul.mubr.bf16.gmra.mrb[0].mxu0 %v1262
    %v1306 = vpop.f32.mrb[0].mxu0
    %v1307 = vadd.f32 %v1246, %v1306
    %v1308 = vpop.f32.mrb[0].mxu0
    %v1309 = vpop.f32.mrb[0].mxu0
    %v1310 = vadd.f32 %v1249, %v1309
    %v1311 = vpop.f32.mrb[0].mxu0
    %1312 = vdwg.mxu0
    %v1313 = vadd.f32 %v666, %v1299
    %v1314 = vadd.f32 %v667, %v1302
    %v1315 = vadd.f32 %v668, %v1307
    %v1316 = vadd.f32 %v669, %v1310
    %v1317 = vld [vmem:[#allocation13] sm:$0x1]
    %v1319 = vlaneseq
    %v1320 = vshrl.u32 %v1319, 7
    %v1321 = vsub.s32 0, %v1320
    %v1322 = vrot.slane %v1317, %v1321
    %v1324 = vadd.f32 %v1313, %v1322
    %v1325 = vadd.f32 %v1314, %v1322
    %v1326 = vadd.f32 %v1315, %v1322
    %v1327 = vadd.f32 %v1316, %v1322
    %v1328 = vld [vmem:[#allocation15] sm:$0x1]
    %v1329 = vld [vmem:[#allocation16] sm:$0x1]
    %v1330 = vsel %vm676, %v1324, 0.0
    %1331 = vadd.xlane.f32.xlu0 %v1330
    %v1332 = vpop.xlane.xlu0 %1331
    %v1333 = vsel %vm676, %v1325, 0.0
    %1334 = vadd.xlane.f32.xlu0 %v1333
    %v1335 = vpop.xlane.xlu0 %1334
    %v1336 = vsel %vm676, %v1326, 0.0
    %1337 = vadd.xlane.f32.xlu0 %v1336
    %v1338 = vpop.xlane.xlu0 %1337
    %v1339 = vsel %vm676, %v1327, 0.0
    %1340 = vadd.xlane.f32.xlu0 %v1339
    %v1341 = vpop.xlane.xlu0 %1340
    %v1342 = vmul.f32 %v1332, %v689
    %v1343 = vmul.f32 %v1335, %v689
    %v1344 = vmul.f32 %v1338, %v689
    %v1345 = vmul.f32 %v1341, %v689
    %v1346 = vsub.f32 %v1324, %v1342
    %v1347 = vsub.f32 %v1325, %v1343
    %v1348 = vsub.f32 %v1326, %v1344
    %v1349 = vsub.f32 %v1327, %v1345
    %v1350 = vmul.f32 %v1346, %v1346
    %v1351 = vmul.f32 %v1347, %v1347
    %v1352 = vmul.f32 %v1348, %v1348
    %v1353 = vmul.f32 %v1349, %v1349
    %v1354 = vsel %vm676, %v1350, 0.0
    %1355 = vadd.xlane.f32.xlu0 %v1354
    %v1356 = vpop.xlane.xlu0 %1355
    %v1357 = vsel %vm676, %v1351, 0.0
    %1358 = vadd.xlane.f32.xlu0 %v1357
    %v1359 = vpop.xlane.xlu0 %1358
    %v1360 = vsel %vm676, %v1352, 0.0
    %1361 = vadd.xlane.f32.xlu0 %v1360
    %v1362 = vpop.xlane.xlu0 %1361
    %v1363 = vsel %vm676, %v1353, 0.0
    %1364 = vadd.xlane.f32.xlu0 %v1363
    %v1365 = vpop.xlane.xlu0 %1364
    %v1366 = vmul.f32 %v1356, %v689
    %v1367 = vmul.f32 %v1359, %v689
    %v1368 = vmul.f32 %v1362, %v689
    %v1369 = vmul.f32 %v1365, %v689
    %v1370 = vadd.f32 %v1366, 1e-05
    %v1371 = vadd.f32 %v1367, 1e-05
    %v1372 = vadd.f32 %v1368, 1e-05
    %v1373 = vadd.f32 %v1369, 1e-05
    %v1374 = vrsqrt.pop %v1370
    %v1375 = vrsqrt.pop %v1371
    %v1376 = vrsqrt.pop %v1372
    %v1377 = vrsqrt.pop %v1373
    %v1378 = vmul.f32 %v1346, %v1374
    %v1379 = vmul.f32 %v1347, %v1375
    %v1380 = vmul.f32 %v1348, %v1376
    %v1381 = vmul.f32 %v1349, %v1377
    %v1383 = vlaneseq
    %v1384 = vshrl.u32 %v1383, 7
    %v1385 = vsub.s32 0, %v1384
    %v1386 = vrot.slane %v1328, %v1385
    %v1388 = vmul.f32 %v1378, %v1386
    %v1389 = vmul.f32 %v1379, %v1386
    %v1390 = vmul.f32 %v1380, %v1386
    %v1391 = vmul.f32 %v1381, %v1386
    %v1393 = vlaneseq
    %v1394 = vshrl.u32 %v1393, 7
    %v1395 = vsub.s32 0, %v1394
    %v1396 = vrot.slane %v1329, %v1395
    %v1398 = vadd.f32 %v1388, %v1396
    %v1399 = vadd.f32 %v1389, %v1396
    %v1400 = vadd.f32 %v1390, %v1396
    %v1401 = vadd.f32 %v1391, %v1396
    %v1402 = vld [vmem:[%s16] sm:$0xf]
    %v1403 = vld [vmem:[%s16 + $0x4] sm:$0xf]
    %v1404 = vld [vmem:[%s16 + $0x8] sm:$0xf]
    %v1405 = vld [vmem:[%s16 + $0xc] sm:$0xf]
    %v1406 = vld [vmem:[#allocation18] sm:$0x1]
    %v1407 = vpack.c.bf16 %v1399, %v1398
    %v1408 = vpack.c.bf16 %v1401, %v1400
    %v1410 = vlaneseq
    %v1411 = vshrl.u32 %v1410, 7
    %v1412 = vsub.s32 0, %v1411
    %v1413 = vrot.slane %v1406, %v1412
    %v1419 = vunpack.c.l.b16 %v1402
    %v1420 = vunpack.c.l.b16 %v1403
    %v1421 = vunpack.c.l.b16 %v1404
    %v1422 = vunpack.c.l.b16 %v1405
    %v1423 = vpack.c.b16 %v1420, %v1419
    %v1424 = vpack.c.b16 %v1422, %v1421
    %v1428 = vsel %vm676, %v1407, 0
    %v1431 = vsel %vm676, %v1408, 0
    %1433 = vmatprep.subr.bf16.mxu0 0
    %1434 = vmatpush1.bf16.msra.mxu0 %v1423
    %1435 = vmatprep.subr.bf16.mxu0 0
    %1436 = vmatpush1.bf16.msra.mxu0 %v1424
    %1437 = vmatprep.subr.bf16.mxu0 0
    %1438 = vmatpush1.bf16.msra.mxu0 0
    %1439 = vmatprep.subr.bf16.mxu0 0
    %1440 = vmatpush1.bf16.msra.mxu0 0
    %1441 = vmatprep.subr.bf16.mxu0 0
    %1442 = vmatpush1.bf16.msra.mxu0 0
    %1443 = vmatprep.subr.bf16.mxu0 0
    %1444 = vmatpush1.bf16.msra.mxu0 0
    %1445 = vmatprep.subr.bf16.mxu0 0
    %1446 = vmatpush1.bf16.msra.mxu0 0
    %1447 = vmatprep.subr.bf16.mxu0 0
    %1448 = vmatpush1.bf16.msra.mxu0 0
    %1449 = vmatprep.subr.bf16.mxu0 0
    %1450 = vmatpush1.bf16.msra.mxu0 0
    %1451 = vmatprep.subr.bf16.mxu0 0
    %1452 = vmatpush1.bf16.msra.mxu0 0
    %1453 = vmatprep.subr.bf16.mxu0 0
    %1454 = vmatpush1.bf16.msra.mxu0 0
    %1455 = vmatprep.subr.bf16.mxu0 0
    %1456 = vmatpush1.bf16.msra.mxu0 0
    %1457 = vmatprep.subr.bf16.mxu0 0
    %1458 = vmatpush1.bf16.msra.mxu0 0
    %1459 = vmatprep.subr.bf16.mxu0 0
    %1460 = vmatpush1.bf16.msra.mxu0 0
    %1461 = vmatprep.subr.bf16.mxu0 0
    %1462 = vmatpush1.bf16.msra.mxu0 0
    %1463 = vmatprep.subr.bf16.mxu0 0
    %1464 = vmatpush1.bf16.msra.mxu0 0
    %1465 = vmatprep.mubr.bf16.mxu0 0
    %1466 = vmatmul.mubr.bf16.gmra.mrb[0].mxu0 %v1428
    %v1467 = vpop.f32.mrb[0].mxu0
    %v1468 = vadd.f32 %v1413, %v1467
    %v1469 = vpop.f32.mrb[0].mxu0
    %v1470 = vpop.f32.mrb[0].mxu0
    %v1471 = vadd.f32 %v1413, %v1470
    %v1472 = vpop.f32.mrb[0].mxu0
    %1473 = vmatprep.mubr.bf16.mxu0 0
    %1474 = vmatmul.mubr.bf16.gmra.mrb[0].mxu0 %v1431
    %v1475 = vpop.f32.mrb[0].mxu0
    %v1476 = vadd.f32 %v1413, %v1475
    %v1477 = vpop.f32.mrb[0].mxu0
    %v1478 = vpop.f32.mrb[0].mxu0
    %v1479 = vadd.f32 %v1413, %v1478
    %v1480 = vpop.f32.mrb[0].mxu0
    %1481 = vdwg.mxu0
    %v1482 = vmul.f32 %v1468, 0.5
    %v1483 = vmul.f32 %v1471, 0.5
    %v1484 = vmul.f32 %v1476, 0.5
    %v1485 = vmul.f32 %v1479, 0.5
    %v1486 = vmul.f32 %v1468, 0.044715
    %v1487 = vmul.f32 %v1471, 0.044715
    %v1488 = vmul.f32 %v1476, 0.044715
    %v1489 = vmul.f32 %v1479, 0.044715
    %v1490 = vmul.f32 %v1486, %v1468
    %v1491 = vmul.f32 %v1487, %v1471
    %v1492 = vmul.f32 %v1488, %v1476
    %v1493 = vmul.f32 %v1489, %v1479
    %v1494 = vmul.f32 %v1490, %v1468
    %v1495 = vmul.f32 %v1491, %v1471
    %v1496 = vmul.f32 %v1492, %v1476
    %v1497 = vmul.f32 %v1493, %v1479
    %v1498 = vadd.f32 %v1468, %v1494
    %v1499 = vadd.f32 %v1471, %v1495
    %v1500 = vadd.f32 %v1476, %v1496
    %v1501 = vadd.f32 %v1479, %v1497
    %v1502 = vmul.f32 %v1498, 0.7978846
    %v1503 = vmul.f32 %v1499, 0.7978846
    %v1504 = vmul.f32 %v1500, 0.7978846
    %v1505 = vmul.f32 %v1501, 0.7978846
    %v1506 = vtanh.pop %v1502
    %v1507 = vtanh.pop %v1503
    %v1508 = vtanh.pop %v1504
    %v1509 = vtanh.pop %v1505
    %v1510 = vadd.f32 %v1506, 1.0
    %v1511 = vadd.f32 %v1507, 1.0
    %v1512 = vadd.f32 %v1508, 1.0
    %v1513 = vadd.f32 %v1509, 1.0
    %v1514 = vmul.f32 %v1482, %v1510
    %v1515 = vmul.f32 %v1483, %v1511
    %v1516 = vmul.f32 %v1484, %v1512
    %v1517 = vmul.f32 %v1485, %v1513
    %v1518 = vld [vmem:[%s18] sm:$0xf]
    %v1519 = vld [vmem:[%s18 + $0x4] sm:$0xf]
    %v1520 = vld [vmem:[%s18 + $0x8] sm:$0xf]
    %v1521 = vld [vmem:[%s18 + $0xc] sm:$0xf]
    %v1522 = vld [vmem:[%s18 + $0x10] sm:$0xf]
    %v1523 = vld [vmem:[%s18 + $0x14] sm:$0xf]
    %v1524 = vld [vmem:[%s18 + $0x18] sm:$0xf]
    %v1525 = vld [vmem:[%s18 + $0x1c] sm:$0xf]
    %v1526 = vld [vmem:[%s18 + $0x20] sm:$0xf]
    %v1527 = vld [vmem:[%s18 + $0x24] sm:$0xf]
    %v1528 = vld [vmem:[%s18 + $0x28] sm:$0xf]
    %v1529 = vld [vmem:[%s18 + $0x2c] sm:$0xf]
    %v1530 = vld [vmem:[%s18 + $0x30] sm:$0xf]
    %v1531 = vld [vmem:[%s18 + $0x34] sm:$0xf]
    %v1532 = vld [vmem:[%s18 + $0x38] sm:$0xf]
    %v1533 = vld [vmem:[%s18 + $0x3c] sm:$0xf]
    %v1534 = vld [vmem:[#allocation19] sm:$0x1]
    %v1535 = vpack.c.bf16 %v1515, %v1514
    %v1536 = vpack.c.bf16 %v1517, %v1516
    %v1538 = vlaneseq
    %v1539 = vshrl.u32 %v1538, 7
    %v1540 = vsub.s32 0, %v1539
    %v1541 = vrot.slane %v1534, %v1540
    %v1559 = vunpack.c.l.b16 %v1518
    %v1560 = vunpack.c.l.b16 %v1519
    %v1561 = vunpack.c.l.b16 %v1520
    %v1562 = vunpack.c.l.b16 %v1521
    %v1563 = vunpack.c.l.b16 %v1522
    %v1564 = vunpack.c.l.b16 %v1523
    %v1565 = vunpack.c.l.b16 %v1524
    %v1566 = vunpack.c.l.b16 %v1525
    %v1567 = vunpack.c.l.b16 %v1526
    %v1568 = vunpack.c.l.b16 %v1527
    %v1569 = vunpack.c.l.b16 %v1528
    %v1570 = vunpack.c.l.b16 %v1529
    %v1571 = vunpack.c.l.b16 %v1530
    %v1572 = vunpack.c.l.b16 %v1531
    %v1573 = vunpack.c.l.b16 %v1532
    %v1574 = vunpack.c.l.b16 %v1533
    %v1575 = vpack.c.b16 %v1560, %v1559
    %v1576 = vpack.c.b16 %v1562, %v1561
    %v1577 = vpack.c.b16 %v1564, %v1563
    %v1578 = vpack.c.b16 %v1566, %v1565
    %v1579 = vpack.c.b16 %v1568, %v1567
    %v1580 = vpack.c.b16 %v1570, %v1569
    %v1581 = vpack.c.b16 %v1572, %v1571
    %v1582 = vpack.c.b16 %v1574, %v1573
    %1591 = vmatprep.subr.bf16.mxu0 0
    %1592 = vmatpush1.bf16.msra.mxu0 %v1575
    %1593 = vmatprep.subr.bf16.mxu0 0
    %1594 = vmatpush1.bf16.msra.mxu0 %v1576
    %1595 = vmatprep.subr.bf16.mxu0 0
    %1596 = vmatpush1.bf16.msra.mxu0 %v1577
    %1597 = vmatprep.subr.bf16.mxu0 0
    %1598 = vmatpush1.bf16.msra.mxu0 %v1578
    %1599 = vmatprep.subr.bf16.mxu0 0
    %1600 = vmatpush1.bf16.msra.mxu0 %v1579
    %1601 = vmatprep.subr.bf16.mxu0 0
    %1602 = vmatpush1.bf16.msra.mxu0 %v1580
    %1603 = vmatprep.subr.bf16.mxu0 0
    %1604 = vmatpush1.bf16.msra.mxu0 %v1581
    %1605 = vmatprep.subr.bf16.mxu0 0
    %1606 = vmatpush1.bf16.msra.mxu0 %v1582
    %1607 = vmatprep.subr.bf16.mxu0 0
    %1608 = vmatpush1.bf16.msra.mxu0 0
    %1609 = vmatprep.subr.bf16.mxu0 0
    %1610 = vmatpush1.bf16.msra.mxu0 0
    %1611 = vmatprep.subr.bf16.mxu0 0
    %1612 = vmatpush1.bf16.msra.mxu0 0
    %1613 = vmatprep.subr.bf16.mxu0 0
    %1614 = vmatpush1.bf16.msra.mxu0 0
    %1615 = vmatprep.subr.bf16.mxu0 0
    %1616 = vmatpush1.bf16.msra.mxu0 0
    %1617 = vmatprep.subr.bf16.mxu0 0
    %1618 = vmatpush1.bf16.msra.mxu0 0
    %1619 = vmatprep.subr.bf16.mxu0 0
    %1620 = vmatpush1.bf16.msra.mxu0 0
    %1621 = vmatprep.subr.bf16.mxu0 0
    %1622 = vmatpush1.bf16.msra.mxu0 0
    %1623 = vmatprep.mubr.bf16.mxu0 0
    %1624 = vmatmul.mubr.bf16.gmra.mrb[0].mxu0 %v1535
    %v1625 = vpop.f32.mrb[0].mxu0
    %v1626 = vadd.f32 %v1541, %v1625
    %v1627 = vpop.f32.mrb[0].mxu0
    %v1628 = vpop.f32.mrb[0].mxu0
    %v1629 = vadd.f32 %v1541, %v1628
    %v1630 = vpop.f32.mrb[0].mxu0
    %1631 = vmatprep.mubr.bf16.mxu0 0
    %1632 = vmatmul.mubr.bf16.gmra.mrb[0].mxu0 %v1536
    %v1633 = vpop.f32.mrb[0].mxu0
    %v1634 = vadd.f32 %v1541, %v1633
    %v1635 = vpop.f32.mrb[0].mxu0
    %v1636 = vpop.f32.mrb[0].mxu0
    %v1637 = vadd.f32 %v1541, %v1636
    %v1638 = vpop.f32.mrb[0].mxu0
    %1639 = vdwg.mxu0
    %v1640 = vadd.f32 %v1324, %v1626
    %v1641 = vadd.f32 %v1325, %v1629
    %v1642 = vadd.f32 %v1326, %v1634
    %v1643 = vadd.f32 %v1327, %v1637
    %s1644 = scalar_lea.vmem [#allocation9], 1
    %v1645 = vld [vmem:[%s1644] sm:$0x1]
    %s1646 = scalar_lea.vmem [#allocation10], 1
    %v1647 = vld [vmem:[%s1646] sm:$0x1]
    %v1648 = vsel %vm676, %v1640, 0.0
    %1649 = vadd.xlane.f32.xlu0 %v1648
    %v1650 = vpop.xlane.xlu0 %1649
    %v1651 = vsel %vm676, %v1641, 0.0
    %1652 = vadd.xlane.f32.xlu0 %v1651
    %v1653 = vpop.xlane.xlu0 %1652
    %v1654 = vsel %vm676, %v1642, 0.0
    %1655 = vadd.xlane.f32.xlu0 %v1654
    %v1656 = vpop.xlane.xlu0 %1655
    %v1657 = vsel %vm676, %v1643, 0.0
    %1658 = vadd.xlane.f32.xlu0 %v1657
    %v1659 = vpop.xlane.xlu0 %1658
    %v1660 = vmul.f32 %v1650, %v689
    %v1661 = vmul.f32 %v1653, %v689
    %v1662 = vmul.f32 %v1656, %v689
    %v1663 = vmul.f32 %v1659, %v689
    %v1664 = vsub.f32 %v1640, %v1660
    %v1665 = vsub.f32 %v1641, %v1661
    %v1666 = vsub.f32 %v1642, %v1662
    %v1667 = vsub.f32 %v1643, %v1663
    %v1668 = vmul.f32 %v1664, %v1664
    %v1669 = vmul.f32 %v1665, %v1665
    %v1670 = vmul.f32 %v1666, %v1666
    %v1671 = vmul.f32 %v1667, %v1667
    %v1672 = vsel %vm676, %v1668, 0.0
    %1673 = vadd.xlane.f32.xlu0 %v1672
    %v1674 = vpop.xlane.xlu0 %1673
    %v1675 = vsel %vm676, %v1669, 0.0
    %1676 = vadd.xlane.f32.xlu0 %v1675
    %v1677 = vpop.xlane.xlu0 %1676
    %v1678 = vsel %vm676, %v1670, 0.0
    %1679 = vadd.xlane.f32.xlu0 %v1678
    %v1680 = vpop.xlane.xlu0 %1679
    %v1681 = vsel %vm676, %v1671, 0.0
    %1682 = vadd.xlane.f32.xlu0 %v1681
    %v1683 = vpop.xlane.xlu0 %1682
    %v1684 = vmul.f32 %v1674, %v689
    %v1685 = vmul.f32 %v1677, %v689
    %v1686 = vmul.f32 %v1680, %v689
    %v1687 = vmul.f32 %v1683, %v689
    %v1688 = vadd.f32 %v1684, 1e-05
    %v1689 = vadd.f32 %v1685, 1e-05
    %v1690 = vadd.f32 %v1686, 1e-05
    %v1691 = vadd.f32 %v1687, 1e-05
    %v1692 = vrsqrt.pop %v1688
    %v1693 = vrsqrt.pop %v1689
    %v1694 = vrsqrt.pop %v1690
    %v1695 = vrsqrt.pop %v1691
    %v1696 = vmul.f32 %v1664, %v1692
    %v1697 = vmul.f32 %v1665, %v1693
    %v1698 = vmul.f32 %v1666, %v1694
    %v1699 = vmul.f32 %v1667, %v1695
    %v1701 = vlaneseq
    %v1702 = vshrl.u32 %v1701, 7
    %v1703 = vsub.s32 0, %v1702
    %v1704 = vrot.slane %v1645, %v1703
    %v1706 = vmul.f32 %v1696, %v1704
    %v1707 = vmul.f32 %v1697, %v1704
    %v1708 = vmul.f32 %v1698, %v1704
    %v1709 = vmul.f32 %v1699, %v1704
    %v1711 = vlaneseq
    %v1712 = vshrl.u32 %v1711, 7
    %v1713 = vsub.s32 0, %v1712
    %v1714 = vrot.slane %v1647, %v1713
    %v1716 = vadd.f32 %v1706, %v1714
    %v1717 = vadd.f32 %v1707, %v1714
    %v1718 = vadd.f32 %v1708, %v1714
    %v1719 = vadd.f32 %v1709, %v1714
    %s1720 = scalar_lea.vmem %s10, 16
    %v1721 = vld [vmem:[%s1720] sm:$0xf]
    %v1722 = vld [vmem:[%s1720 + $0x4] sm:$0xf]
    %v1723 = vld [vmem:[%s1720 + $0x8] sm:$0xf]
    %v1724 = vld [vmem:[%s1720 + $0xc] sm:$0xf]
    %s1725 = scalar_lea.vmem [#allocation12], 1
    %v1726 = vld [vmem:[%s1725] sm:$0x1]
    %v1727 = vpack.c.bf16 %v1717, %v1716
    %v1728 = vpack.c.bf16 %v1719, %v1718
    %v1730 = vlaneseq
    %v1731 = vshrl.u32 %v1730, 7
    %v1732 = vsub.s32 0, %v1731
    %v1733 = vrot.slane %v1726, %v1732
    %v1739 = vunpack.c.l.b16 %v1721
    %v1740 = vunpack.c.l.b16 %v1722
    %v1741 = vunpack.c.l.b16 %v1723
    %v1742 = vunpack.c.l.b16 %v1724
    %v1743 = vpack.c.b16 %v1740, %v1739
    %v1744 = vpack.c.b16 %v1742, %v1741
    %v1748 = vsel %vm676, %v1727, 0
    %v1751 = vsel %vm676, %v1728, 0
    %1753 = vmatprep.subr.bf16.mxu0 0
    %1754 = vmatpush1.bf16.msra.mxu0 %v1743
    %1755 = vmatprep.subr.bf16.mxu0 0
    %1756 = vmatpush1.bf16.msra.mxu0 %v1744
    %1757 = vmatprep.subr.bf16.mxu0 0
    %1758 = vmatpush1.bf16.msra.mxu0 0
    %1759 = vmatprep.subr.bf16.mxu0 0
    %1760 = vmatpush1.bf16.msra.mxu0 0
    %1761 = vmatprep.subr.bf16.mxu0 0
    %1762 = vmatpush1.bf16.msra.mxu0 0
    %1763 = vmatprep.subr.bf16.mxu0 0
    %1764 = vmatpush1.bf16.msra.mxu0 0
    %1765 = vmatprep.subr.bf16.mxu0 0
    %1766 = vmatpush1.bf16.msra.mxu0 0
    %1767 = vmatprep.subr.bf16.mxu0 0
    %1768 = vmatpush1.bf16.msra.mxu0 0
    %1769 = vmatprep.subr.bf16.mxu0 0
    %1770 = vmatpush1.bf16.msra.mxu0 0
    %1771 = vmatprep.subr.bf16.mxu0 0
    %1772 = vmatpush1.bf16.msra.mxu0 0
    %1773 = vmatprep.subr.bf16.mxu0 0
    %1774 = vmatpush1.bf16.msra.mxu0 0
    %1775 = vmatprep.subr.bf16.mxu0 0
    %1776 = vmatpush1.bf16.msra.mxu0 0
    %1777 = vmatprep.subr.bf16.mxu0 0
    %1778 = vmatpush1.bf16.msra.mxu0 0
    %1779 = vmatprep.subr.bf16.mxu0 0
    %1780 = vmatpush1.bf16.msra.mxu0 0
    %1781 = vmatprep.subr.bf16.mxu0 0
    %1782 = vmatpush1.bf16.msra.mxu0 0
    %1783 = vmatprep.subr.bf16.mxu0 0
    %1784 = vmatpush1.bf16.msra.mxu0 0
    %1785 = vmatprep.mubr.bf16.mxu0 0
    %1786 = vmatmul.mubr.bf16.gmra.mrb[0].mxu0 %v1748
    %v1787 = vpop.f32.mrb[0].mxu0
    %v1788 = vadd.f32 %v1733, %v1787
    %v1789 = vpop.f32.mrb[0].mxu0
    %v1790 = vpop.f32.mrb[0].mxu0
    %v1791 = vadd.f32 %v1733, %v1790
    %v1792 = vpop.f32.mrb[0].mxu0
    %1793 = vmatprep.mubr.bf16.mxu0 0
    %1794 = vmatmul.mubr.bf16.gmra.mrb[0].mxu0 %v1751
    %v1795 = vpop.f32.mrb[0].mxu0
    %v1796 = vadd.f32 %v1733, %v1795
    %v1797 = vpop.f32.mrb[0].mxu0
    %v1798 = vpop.f32.mrb[0].mxu0
    %v1799 = vadd.f32 %v1733, %v1798
    %v1800 = vpop.f32.mrb[0].mxu0
    %1801 = vdwg.mxu0
    %s1802 = scalar_lea.vmem %s12, 16
    %v1803 = vld [vmem:[%s1802] sm:$0xf]
    %v1804 = vld [vmem:[%s1802 + $0x4] sm:$0xf]
    %v1805 = vld [vmem:[%s1802 + $0x8] sm:$0xf]
    %v1806 = vld [vmem:[%s1802 + $0xc] sm:$0xf]
    %v1807 = vpack.c.bf16 %v1791, %v1788
    %v1808 = vpack.c.bf16 %v1799, %v1796
    %1811 = vrot.lane.b32.xlu0 %v1807, 96
    %v1812 = vpop.permute.xlu0 %1811
    %1813 = vrot.lane.b32.xlu0 %v1808, 96
    %v1814 = vpop.permute.xlu0 %1813
    %v1816 = vsel %vm842, %v1807, 0
    %v1819 = vsel %vm842, %v1808, 0
    %v1822 = vsel %vm842, %v1812, 0
    %v1825 = vsel %vm842, %v1814, 0
    %1827 = vmatprep.subr.bf16.mxu0 0
    %1828 = vmatpush1.bf16.xpose.msra.mxu0 %v1822
    %1829 = vmatprep.subr.bf16.mxu0 0
    %1830 = vmatpush1.bf16.xpose.msra.mxu0 %v1825
    %1831 = vmatprep.subr.bf16.mxu0 0
    %1832 = vmatpush1.bf16.xpose.msra.mxu0 0
    %1833 = vmatprep.subr.bf16.mxu0 0
    %1834 = vmatpush1.bf16.xpose.msra.mxu0 0
    %1835 = vmatprep.subr.bf16.mxu0 0
    %1836 = vmatpush1.bf16.xpose.msra.mxu0 0
    %1837 = vmatprep.subr.bf16.mxu0 0
    %1838 = vmatpush1.bf16.xpose.msra.mxu0 0
    %1839 = vmatprep.subr.bf16.mxu0 0
    %1840 = vmatpush1.bf16.xpose.msra.mxu0 0
    %1841 = vmatprep.subr.bf16.mxu0 0
    %1842 = vmatpush1.bf16.xpose.msra.mxu0 0
    %1843 = vmatprep.subr.bf16.mxu0 0
    %1844 = vmatpush1.bf16.xpose.msra.mxu0 0
    %1845 = vmatprep.subr.bf16.mxu0 0
    %1846 = vmatpush1.bf16.xpose.msra.mxu0 0
    %1847 = vmatprep.subr.bf16.mxu0 0
    %1848 = vmatpush1.bf16.xpose.msra.mxu0 0
    %1849 = vmatprep.subr.bf16.mxu0 0
    %1850 = vmatpush1.bf16.xpose.msra.mxu0 0
    %1851 = vmatprep.subr.bf16.mxu0 0
    %1852 = vmatpush1.bf16.xpose.msra.mxu0 0
    %1853 = vmatprep.subr.bf16.mxu0 0
    %1854 = vmatpush1.bf16.xpose.msra.mxu0 0
    %1855 = vmatprep.subr.bf16.mxu0 0
    %1856 = vmatpush1.bf16.xpose.msra.mxu0 0
    %1857 = vmatprep.subr.bf16.mxu0 0
    %1858 = vmatpush1.bf16.xpose.msra.mxu0 0
    %1859 = vmatprep.mubr.bf16.mxu0 0
    %1860 = vmatmul.mubr.bf16.gmra.mrb[0].mxu0 %v1816
    %v1861 = vpop.f32.mrb[0].mxu0
    %v1862 = vadd.f32 %v670, %v1861
    %v1863 = vpop.f32.mrb[0].mxu0
    %v1864 = vpop.f32.mrb[0].mxu0
    %v1865 = vadd.f32 %v671, %v1864
    %v1866 = vpop.f32.mrb[0].mxu0
    %1867 = vmatprep.mubr.bf16.mxu0 0
    %1868 = vmatmul.mubr.bf16.gmra.mrb[0].mxu0 %v1819
    %v1869 = vpop.f32.mrb[0].mxu0
    %v1870 = vadd.f32 %v672, %v1869
    %v1871 = vpop.f32.mrb[0].mxu0
    %v1872 = vpop.f32.mrb[0].mxu0
    %v1873 = vadd.f32 %v673, %v1872
    %v1874 = vpop.f32.mrb[0].mxu0
    %1875 = vdwg.mxu0
    %v1876 = vsel %vm676, %v1862, -inf
    %1877 = vmax.xlane.f32.xlu0 %v1876
    %v1878 = vpop.xlane.xlu0 %1877
    %v1879 = vsel %vm676, %v1865, -inf
    %1880 = vmax.xlane.f32.xlu0 %v1879
    %v1881 = vpop.xlane.xlu0 %1880
    %v1882 = vsel %vm676, %v1870, -inf
    %1883 = vmax.xlane.f32.xlu0 %v1882
    %v1884 = vpop.xlane.xlu0 %1883
    %v1885 = vsel %vm676, %v1873, -inf
    %1886 = vmax.xlane.f32.xlu0 %v1885
    %v1887 = vpop.xlane.xlu0 %1886
    %v1888 = vsub.f32 %v1862, %v1878
    %v1889 = vsub.f32 %v1865, %v1881
    %v1890 = vsub.f32 %v1870, %v1884
    %v1891 = vsub.f32 %v1873, %v1887
    %v1892 = vmul.f32 %v1888, 1.442695
    %v1893 = vpow.pop %v1892
    %v1894 = vmul.f32 %v1889, 1.442695
    %v1895 = vpow.pop %v1894
    %v1896 = vmul.f32 %v1890, 1.442695
    %v1897 = vpow.pop %v1896
    %v1898 = vmul.f32 %v1891, 1.442695
    %v1899 = vpow.pop %v1898
    %v1900 = vsel %vm676, %v1893, 0.0
    %1901 = vadd.xlane.f32.xlu0 %v1900
    %v1902 = vpop.xlane.xlu0 %1901
    %v1903 = vsel %vm676, %v1895, 0.0
    %1904 = vadd.xlane.f32.xlu0 %v1903
    %v1905 = vpop.xlane.xlu0 %1904
    %v1906 = vsel %vm676, %v1897, 0.0
    %1907 = vadd.xlane.f32.xlu0 %v1906
    %v1908 = vpop.xlane.xlu0 %1907
    %v1909 = vsel %vm676, %v1899, 0.0
    %1910 = vadd.xlane.f32.xlu0 %v1909
    %v1911 = vpop.xlane.xlu0 %1910
    %v1912 = vrcp.pop %v1902
    %v1913 = vrcp.pop %v1905
    %v1914 = vrcp.pop %v1908
    %v1915 = vrcp.pop %v1911
    %v1916 = vmul.f32 %v1893, %v1912
    %v1917 = vmul.f32 %v1895, %v1913
    %v1918 = vmul.f32 %v1897, %v1914
    %v1919 = vmul.f32 %v1899, %v1915
    %v1920 = vpack.c.bf16 %v1917, %v1916
    %v1921 = vpack.c.bf16 %v1919, %v1918
    %1922 = vrot.lane.b32.xlu0 %v1807, 64
    %v1923 = vpop.permute.xlu0 %1922
    %1924 = vrot.lane.b32.xlu0 %v1808, 64
    %v1925 = vpop.permute.xlu0 %1924
    %v1929 = vsel %vm676, %v1920, 0
    %v1932 = vsel %vm676, %v1921, 0
    %1934 = vmatprep.subr.bf16.mxu0 0
    %1935 = vmatpush1.bf16.msra.mxu0 %v1923
    %1936 = vmatprep.subr.bf16.mxu0 0
    %1937 = vmatpush1.bf16.msra.mxu0 %v1925
    %1938 = vmatprep.subr.bf16.mxu0 0
    %1939 = vmatpush1.bf16.msra.mxu0 0
    %1940 = vmatprep.subr.bf16.mxu0 0
    %1941 = vmatpush1.bf16.msra.mxu0 0
    %1942 = vmatprep.subr.bf16.mxu0 0
    %1943 = vmatpush1.bf16.msra.mxu0 0
    %1944 = vmatprep.subr.bf16.mxu0 0
    %1945 = vmatpush1.bf16.msra.mxu0 0
    %1946 = vmatprep.subr.bf16.mxu0 0
    %1947 = vmatpush1.bf16.msra.mxu0 0
    %1948 = vmatprep.subr.bf16.mxu0 0
    %1949 = vmatpush1.bf16.msra.mxu0 0
    %1950 = vmatprep.subr.bf16.mxu0 0
    %1951 = vmatpush1.bf16.msra.mxu0 0
    %1952 = vmatprep.subr.bf16.mxu0 0
    %1953 = vmatpush1.bf16.msra.mxu0 0
    %1954 = vmatprep.subr.bf16.mxu0 0
    %1955 = vmatpush1.bf16.msra.mxu0 0
    %1956 = vmatprep.subr.bf16.mxu0 0
    %1957 = vmatpush1.bf16.msra.mxu0 0
    %1958 = vmatprep.subr.bf16.mxu0 0
    %1959 = vmatpush1.bf16.msra.mxu0 0
    %1960 = vmatprep.subr.bf16.mxu0 0
    %1961 = vmatpush1.bf16.msra.mxu0 0
    %1962 = vmatprep.subr.bf16.mxu0 0
    %1963 = vmatpush1.bf16.msra.mxu0 0
    %1964 = vmatprep.subr.bf16.mxu0 0
    %1965 = vmatpush1.bf16.msra.mxu0 0
    %1966 = vmatprep.mubr.bf16.mxu0 0
    %1967 = vmatmul.mubr.bf16.gmra.mrb[0].mxu0 %v1929
    %v1968 = vpop.f32.mrb[0].mxu0
    %v1969 = vadd.f32 0.0, %v1968
    %v1970 = vpop.f32.mrb[0].mxu0
    %v1971 = vpop.f32.mrb[0].mxu0
    %v1972 = vadd.f32 0.0, %v1971
    %v1973 = vpop.f32.mrb[0].mxu0
    %1974 = vmatprep.mubr.bf16.mxu0 0
    %1975 = vmatmul.mubr.bf16.gmra.mrb[0].mxu0 %v1932
    %v1976 = vpop.f32.mrb[0].mxu0
    %v1977 = vadd.f32 0.0, %v1976
    %v1978 = vpop.f32.mrb[0].mxu0
    %v1979 = vpop.f32.mrb[0].mxu0
    %v1980 = vadd.f32 0.0, %v1979
    %v1981 = vpop.f32.mrb[0].mxu0
    %1982 = vdwg.mxu0
    %v1983 = vpack.c.bf16 %v1972, %v1969
    %v1984 = vpack.c.bf16 %v1980, %v1977
    %1985 = vrot.lane.b32.xlu0 %v1807, 112
    %v1986 = vpop.permute.xlu0 %1985
    %1987 = vrot.lane.b32.xlu0 %v1808, 112
    %v1988 = vpop.permute.xlu0 %1987
    %1989 = vrot.lane.b32.xlu0 %v1807, 80
    %v1990 = vpop.permute.xlu0 %1989
    %1991 = vrot.lane.b32.xlu0 %v1808, 80
    %v1992 = vpop.permute.xlu0 %1991
    %v1994 = vsel %vm842, %v1986, 0
    %v1997 = vsel %vm842, %v1988, 0
    %v2000 = vsel %vm842, %v1990, 0
    %v2003 = vsel %vm842, %v1992, 0
    %2005 = vmatprep.subr.bf16.mxu0 0
    %2006 = vmatpush1.bf16.xpose.msra.mxu0 %v2000
    %2007 = vmatprep.subr.bf16.mxu0 0
    %2008 = vmatpush1.bf16.xpose.msra.mxu0 %v2003
    %2009 = vmatprep.subr.bf16.mxu0 0
    %2010 = vmatpush1.bf16.xpose.msra.mxu0 0
    %2011 = vmatprep.subr.bf16.mxu0 0
    %2012 = vmatpush1.bf16.xpose.msra.mxu0 0
    %2013 = vmatprep.subr.bf16.mxu0 0
    %2014 = vmatpush1.bf16.xpose.msra.mxu0 0
    %2015 = vmatprep.subr.bf16.mxu0 0
    %2016 = vmatpush1.bf16.xpose.msra.mxu0 0
    %2017 = vmatprep.subr.bf16.mxu0 0
    %2018 = vmatpush1.bf16.xpose.msra.mxu0 0
    %2019 = vmatprep.subr.bf16.mxu0 0
    %2020 = vmatpush1.bf16.xpose.msra.mxu0 0
    %2021 = vmatprep.subr.bf16.mxu0 0
    %2022 = vmatpush1.bf16.xpose.msra.mxu0 0
    %2023 = vmatprep.subr.bf16.mxu0 0
    %2024 = vmatpush1.bf16.xpose.msra.mxu0 0
    %2025 = vmatprep.subr.bf16.mxu0 0
    %2026 = vmatpush1.bf16.xpose.msra.mxu0 0
    %2027 = vmatprep.subr.bf16.mxu0 0
    %2028 = vmatpush1.bf16.xpose.msra.mxu0 0
    %2029 = vmatprep.subr.bf16.mxu0 0
    %2030 = vmatpush1.bf16.xpose.msra.mxu0 0
    %2031 = vmatprep.subr.bf16.mxu0 0
    %2032 = vmatpush1.bf16.xpose.msra.mxu0 0
    %2033 = vmatprep.subr.bf16.mxu0 0
    %2034 = vmatpush1.bf16.xpose.msra.mxu0 0
    %2035 = vmatprep.subr.bf16.mxu0 0
    %2036 = vmatpush1.bf16.xpose.msra.mxu0 0
    %2037 = vmatprep.mubr.bf16.mxu0 0
    %2038 = vmatmul.mubr.bf16.gmra.mrb[0].mxu0 %v1994
    %v2039 = vpop.f32.mrb[0].mxu0
    %v2040 = vadd.f32 %v670, %v2039
    %v2041 = vpop.f32.mrb[0].mxu0
    %v2042 = vpop.f32.mrb[0].mxu0
    %v2043 = vadd.f32 %v671, %v2042
    %v2044 = vpop.f32.mrb[0].mxu0
    %2045 = vmatprep.mubr.bf16.mxu0 0
    %2046 = vmatmul.mubr.bf16.gmra.mrb[0].mxu0 %v1997
    %v2047 = vpop.f32.mrb[0].mxu0
    %v2048 = vadd.f32 %v672, %v2047
    %v2049 = vpop.f32.mrb[0].mxu0
    %v2050 = vpop.f32.mrb[0].mxu0
    %v2051 = vadd.f32 %v673, %v2050
    %v2052 = vpop.f32.mrb[0].mxu0
    %2053 = vdwg.mxu0
    %v2054 = vsel %vm676, %v2040, -inf
    %2055 = vmax.xlane.f32.xlu0 %v2054
    %v2056 = vpop.xlane.xlu0 %2055
    %v2057 = vsel %vm676, %v2043, -inf
    %2058 = vmax.xlane.f32.xlu0 %v2057
    %v2059 = vpop.xlane.xlu0 %2058
    %v2060 = vsel %vm676, %v2048, -inf
    %2061 = vmax.xlane.f32.xlu0 %v2060
    %v2062 = vpop.xlane.xlu0 %2061
    %v2063 = vsel %vm676, %v2051, -inf
    %2064 = vmax.xlane.f32.xlu0 %v2063
    %v2065 = vpop.xlane.xlu0 %2064
    %v2066 = vsub.f32 %v2040, %v2056
    %v2067 = vsub.f32 %v2043, %v2059
    %v2068 = vsub.f32 %v2048, %v2062
    %v2069 = vsub.f32 %v2051, %v2065
    %v2070 = vmul.f32 %v2066, 1.442695
    %v2071 = vpow.pop %v2070
    %v2072 = vmul.f32 %v2067, 1.442695
    %v2073 = vpow.pop %v2072
    %v2074 = vmul.f32 %v2068, 1.442695
    %v2075 = vpow.pop %v2074
    %v2076 = vmul.f32 %v2069, 1.442695
    %v2077 = vpow.pop %v2076
    %v2078 = vsel %vm676, %v2071, 0.0
    %2079 = vadd.xlane.f32.xlu0 %v2078
    %v2080 = vpop.xlane.xlu0 %2079
    %v2081 = vsel %vm676, %v2073, 0.0
    %2082 = vadd.xlane.f32.xlu0 %v2081
    %v2083 = vpop.xlane.xlu0 %2082
    %v2084 = vsel %vm676, %v2075, 0.0
    %2085 = vadd.xlane.f32.xlu0 %v2084
    %v2086 = vpop.xlane.xlu0 %2085
    %v2087 = vsel %vm676, %v2077, 0.0
    %2088 = vadd.xlane.f32.xlu0 %v2087
    %v2089 = vpop.xlane.xlu0 %2088
    %v2090 = vrcp.pop %v2080
    %v2091 = vrcp.pop %v2083
    %v2092 = vrcp.pop %v2086
    %v2093 = vrcp.pop %v2089
    %v2094 = vmul.f32 %v2071, %v2090
    %v2095 = vmul.f32 %v2073, %v2091
    %v2096 = vmul.f32 %v2075, %v2092
    %v2097 = vmul.f32 %v2077, %v2093
    %v2098 = vpack.c.bf16 %v2095, %v2094
    %v2099 = vpack.c.bf16 %v2097, %v2096
    %2100 = vrot.lane.b32.xlu0 %v1807, 48
    %v2101 = vpop.permute.xlu0 %2100
    %2102 = vrot.lane.b32.xlu0 %v1808, 48
    %v2103 = vpop.permute.xlu0 %2102
    %v2107 = vsel %vm676, %v2098, 0
    %v2110 = vsel %vm676, %v2099, 0
    %2112 = vmatprep.subr.bf16.mxu0 0
    %2113 = vmatpush1.bf16.msra.mxu0 %v2101
    %2114 = vmatprep.subr.bf16.mxu0 0
    %2115 = vmatpush1.bf16.msra.mxu0 %v2103
    %2116 = vmatprep.subr.bf16.mxu0 0
    %2117 = vmatpush1.bf16.msra.mxu0 0
    %2118 = vmatprep.subr.bf16.mxu0 0
    %2119 = vmatpush1.bf16.msra.mxu0 0
    %2120 = vmatprep.subr.bf16.mxu0 0
    %2121 = vmatpush1.bf16.msra.mxu0 0
    %2122 = vmatprep.subr.bf16.mxu0 0
    %2123 = vmatpush1.bf16.msra.mxu0 0
    %2124 = vmatprep.subr.bf16.mxu0 0
    %2125 = vmatpush1.bf16.msra.mxu0 0
    %2126 = vmatprep.subr.bf16.mxu0 0
    %2127 = vmatpush1.bf16.msra.mxu0 0
    %2128 = vmatprep.subr.bf16.mxu0 0
    %2129 = vmatpush1.bf16.msra.mxu0 0
    %2130 = vmatprep.subr.bf16.mxu0 0
    %2131 = vmatpush1.bf16.msra.mxu0 0
    %2132 = vmatprep.subr.bf16.mxu0 0
    %2133 = vmatpush1.bf16.msra.mxu0 0
    %2134 = vmatprep.subr.bf16.mxu0 0
    %2135 = vmatpush1.bf16.msra.mxu0 0
    %2136 = vmatprep.subr.bf16.mxu0 0
    %2137 = vmatpush1.bf16.msra.mxu0 0
    %2138 = vmatprep.subr.bf16.mxu0 0
    %2139 = vmatpush1.bf16.msra.mxu0 0
    %2140 = vmatprep.subr.bf16.mxu0 0
    %2141 = vmatpush1.bf16.msra.mxu0 0
    %2142 = vmatprep.subr.bf16.mxu0 0
    %2143 = vmatpush1.bf16.msra.mxu0 0
    %2144 = vmatprep.mubr.bf16.mxu0 0
    %2145 = vmatmul.mubr.bf16.gmra.mrb[0].mxu0 %v2107
    %v2146 = vpop.f32.mrb[0].mxu0
    %v2147 = vadd.f32 0.0, %v2146
    %v2148 = vpop.f32.mrb[0].mxu0
    %v2149 = vpop.f32.mrb[0].mxu0
    %v2150 = vadd.f32 0.0, %v2149
    %v2151 = vpop.f32.mrb[0].mxu0
    %2152 = vmatprep.mubr.bf16.mxu0 0
    %2153 = vmatmul.mubr.bf16.gmra.mrb[0].mxu0 %v2110
    %v2154 = vpop.f32.mrb[0].mxu0
    %v2155 = vadd.f32 0.0, %v2154
    %v2156 = vpop.f32.mrb[0].mxu0
    %v2157 = vpop.f32.mrb[0].mxu0
    %v2158 = vadd.f32 0.0, %v2157
    %v2159 = vpop.f32.mrb[0].mxu0
    %2160 = vdwg.mxu0
    %v2161 = vpack.c.bf16 %v2150, %v2147
    %v2162 = vpack.c.bf16 %v2158, %v2155
    %v2165 = vunpack.c.l.b16 %v1805
    %v2166 = vunpack.c.l.b16 %v1806
    %v2167 = vpack.c.b16 %v2166, %v2165
    %v2170 = vsel %vm842, %v2161, 0
    %v2173 = vsel %vm842, %v2162, 0
    %2175 = vmatprep.subr.bf16.mxu0 0
    %2176 = vmatpush1.bf16.msra.mxu0 %v2167
    %2177 = vmatprep.subr.bf16.mxu0 0
    %2178 = vmatpush1.bf16.msra.mxu0 0
    %2179 = vmatprep.subr.bf16.mxu0 0
    %2180 = vmatpush1.bf16.msra.mxu0 0
    %2181 = vmatprep.subr.bf16.mxu0 0
    %2182 = vmatpush1.bf16.msra.mxu0 0
    %2183 = vmatprep.subr.bf16.mxu0 0
    %2184 = vmatpush1.bf16.msra.mxu0 0
    %2185 = vmatprep.subr.bf16.mxu0 0
    %2186 = vmatpush1.bf16.msra.mxu0 0
    %2187 = vmatprep.subr.bf16.mxu0 0
    %2188 = vmatpush1.bf16.msra.mxu0 0
    %2189 = vmatprep.subr.bf16.mxu0 0
    %2190 = vmatpush1.bf16.msra.mxu0 0
    %2191 = vmatprep.subr.bf16.mxu0 0
    %2192 = vmatpush1.bf16.msra.mxu0 0
    %2193 = vmatprep.subr.bf16.mxu0 0
    %2194 = vmatpush1.bf16.msra.mxu0 0
    %2195 = vmatprep.subr.bf16.mxu0 0
    %2196 = vmatpush1.bf16.msra.mxu0 0
    %2197 = vmatprep.subr.bf16.mxu0 0
    %2198 = vmatpush1.bf16.msra.mxu0 0
    %2199 = vmatprep.subr.bf16.mxu0 0
    %2200 = vmatpush1.bf16.msra.mxu0 0
    %2201 = vmatprep.subr.bf16.mxu0 0
    %2202 = vmatpush1.bf16.msra.mxu0 0
    %2203 = vmatprep.subr.bf16.mxu0 0
    %2204 = vmatpush1.bf16.msra.mxu0 0
    %2205 = vmatprep.subr.bf16.mxu0 0
    %2206 = vmatpush1.bf16.msra.mxu0 0
    %2207 = vmatprep.mubr.bf16.mxu0 0
    %2208 = vmatmul.mubr.bf16.gmra.mrb[0].mxu0 %v2170
    %v2209 = vpop.f32.mrb[0].mxu0
    %v2210 = vadd.f32 0.0, %v2209
    %v2211 = vpop.f32.mrb[0].mxu0
    %v2212 = vpop.f32.mrb[0].mxu0
    %v2213 = vadd.f32 0.0, %v2212
    %v2214 = vpop.f32.mrb[0].mxu0
    %2215 = vmatprep.mubr.bf16.mxu0 0
    %2216 = vmatmul.mubr.bf16.gmra.mrb[0].mxu0 %v2173
    %v2217 = vpop.f32.mrb[0].mxu0
    %v2218 = vadd.f32 0.0, %v2217
    %v2219 = vpop.f32.mrb[0].mxu0
    %v2220 = vpop.f32.mrb[0].mxu0
    %v2221 = vadd.f32 0.0, %v2220
    %v2222 = vpop.f32.mrb[0].mxu0
    %2223 = vdwg.mxu0
    %v2226 = vunpack.c.l.b16 %v1803
    %v2227 = vunpack.c.l.b16 %v1804
    %v2228 = vpack.c.b16 %v2227, %v2226
    %v2231 = vsel %vm842, %v1983, 0
    %v2234 = vsel %vm842, %v1984, 0
    %2236 = vmatprep.subr.bf16.mxu0 0
    %2237 = vmatpush1.bf16.msra.mxu0 %v2228
    %2238 = vmatprep.subr.bf16.mxu0 0
    %2239 = vmatpush1.bf16.msra.mxu0 0
    %2240 = vmatprep.subr.bf16.mxu0 0
    %2241 = vmatpush1.bf16.msra.mxu0 0
    %2242 = vmatprep.subr.bf16.mxu0 0
    %2243 = vmatpush1.bf16.msra.mxu0 0
    %2244 = vmatprep.subr.bf16.mxu0 0
    %2245 = vmatpush1.bf16.msra.mxu0 0
    %2246 = vmatprep.subr.bf16.mxu0 0
    %2247 = vmatpush1.bf16.msra.mxu0 0
    %2248 = vmatprep.subr.bf16.mxu0 0
    %2249 = vmatpush1.bf16.msra.mxu0 0
    %2250 = vmatprep.subr.bf16.mxu0 0
    %2251 = vmatpush1.bf16.msra.mxu0 0
    %2252 = vmatprep.subr.bf16.mxu0 0
    %2253 = vmatpush1.bf16.msra.mxu0 0
    %2254 = vmatprep.subr.bf16.mxu0 0
    %2255 = vmatpush1.bf16.msra.mxu0 0
    %2256 = vmatprep.subr.bf16.mxu0 0
    %2257 = vmatpush1.bf16.msra.mxu0 0
    %2258 = vmatprep.subr.bf16.mxu0 0
    %2259 = vmatpush1.bf16.msra.mxu0 0
    %2260 = vmatprep.subr.bf16.mxu0 0
    %2261 = vmatpush1.bf16.msra.mxu0 0
    %2262 = vmatprep.subr.bf16.mxu0 0
    %2263 = vmatpush1.bf16.msra.mxu0 0
    %2264 = vmatprep.subr.bf16.mxu0 0
    %2265 = vmatpush1.bf16.msra.mxu0 0
    %2266 = vmatprep.subr.bf16.mxu0 0
    %2267 = vmatpush1.bf16.msra.mxu0 0
    %2268 = vmatprep.mubr.bf16.mxu0 0
    %2269 = vmatmul.mubr.bf16.gmra.mrb[0].mxu0 %v2231
    %v2270 = vpop.f32.mrb[0].mxu0
    %v2271 = vadd.f32 %v2210, %v2270
    %v2272 = vpop.f32.mrb[0].mxu0
    %v2273 = vpop.f32.mrb[0].mxu0
    %v2274 = vadd.f32 %v2213, %v2273
    %v2275 = vpop.f32.mrb[0].mxu0
    %2276 = vmatprep.mubr.bf16.mxu0 0
    %2277 = vmatmul.mubr.bf16.gmra.mrb[0].mxu0 %v2234
    %v2278 = vpop.f32.mrb[0].mxu0
    %v2279 = vadd.f32 %v2218, %v2278
    %v2280 = vpop.f32.mrb[0].mxu0
    %v2281 = vpop.f32.mrb[0].mxu0
    %v2282 = vadd.f32 %v2221, %v2281
    %v2283 = vpop.f32.mrb[0].mxu0
    %2284 = vdwg.mxu0
    %v2285 = vadd.f32 %v1640, %v2271
    %v2286 = vadd.f32 %v1641, %v2274
    %v2287 = vadd.f32 %v1642, %v2279
    %v2288 = vadd.f32 %v1643, %v2282
    %s2289 = scalar_lea.vmem [#allocation13], 1
    %v2290 = vld [vmem:[%s2289] sm:$0x1]
    %v2292 = vlaneseq
    %v2293 = vshrl.u32 %v2292, 7
    %v2294 = vsub.s32 0, %v2293
    %v2295 = vrot.slane %v2290, %v2294
    %v2297 = vadd.f32 %v2285, %v2295
    %v2298 = vadd.f32 %v2286, %v2295
    %v2299 = vadd.f32 %v2287, %v2295
    %v2300 = vadd.f32 %v2288, %v2295
    %s2301 = scalar_lea.vmem [#allocation15], 1
    %v2302 = vld [vmem:[%s2301] sm:$0x1]
    %s2303 = scalar_lea.vmem [#allocation16], 1
    %v2304 = vld [vmem:[%s2303] sm:$0x1]
    %v2305 = vsel %vm676, %v2297, 0.0
    %2306 = vadd.xlane.f32.xlu0 %v2305
    %v2307 = vpop.xlane.xlu0 %2306
    %v2308 = vsel %vm676, %v2298, 0.0
    %2309 = vadd.xlane.f32.xlu0 %v2308
    %v2310 = vpop.xlane.xlu0 %2309
    %v2311 = vsel %vm676, %v2299, 0.0
    %2312 = vadd.xlane.f32.xlu0 %v2311
    %v2313 = vpop.xlane.xlu0 %2312
    %v2314 = vsel %vm676, %v2300, 0.0
    %2315 = vadd.xlane.f32.xlu0 %v2314
    %v2316 = vpop.xlane.xlu0 %2315
    %v2317 = vmul.f32 %v2307, %v689
    %v2318 = vmul.f32 %v2310, %v689
    %v2319 = vmul.f32 %v2313, %v689
    %v2320 = vmul.f32 %v2316, %v689
    %v2321 = vsub.f32 %v2297, %v2317
    %v2322 = vsub.f32 %v2298, %v2318
    %v2323 = vsub.f32 %v2299, %v2319
    %v2324 = vsub.f32 %v2300, %v2320
    %v2325 = vmul.f32 %v2321, %v2321
    %v2326 = vmul.f32 %v2322, %v2322
    %v2327 = vmul.f32 %v2323, %v2323
    %v2328 = vmul.f32 %v2324, %v2324
    %v2329 = vsel %vm676, %v2325, 0.0
    %2330 = vadd.xlane.f32.xlu0 %v2329
    %v2331 = vpop.xlane.xlu0 %2330
    %v2332 = vsel %vm676, %v2326, 0.0
    %2333 = vadd.xlane.f32.xlu0 %v2332
    %v2334 = vpop.xlane.xlu0 %2333
    %v2335 = vsel %vm676, %v2327, 0.0
    %2336 = vadd.xlane.f32.xlu0 %v2335
    %v2337 = vpop.xlane.xlu0 %2336
    %v2338 = vsel %vm676, %v2328, 0.0
    %2339 = vadd.xlane.f32.xlu0 %v2338
    %v2340 = vpop.xlane.xlu0 %2339
    %v2341 = vmul.f32 %v2331, %v689
    %v2342 = vmul.f32 %v2334, %v689
    %v2343 = vmul.f32 %v2337, %v689
    %v2344 = vmul.f32 %v2340, %v689
    %v2345 = vadd.f32 %v2341, 1e-05
    %v2346 = vadd.f32 %v2342, 1e-05
    %v2347 = vadd.f32 %v2343, 1e-05
    %v2348 = vadd.f32 %v2344, 1e-05
    %v2349 = vrsqrt.pop %v2345
    %v2350 = vrsqrt.pop %v2346
    %v2351 = vrsqrt.pop %v2347
    %v2352 = vrsqrt.pop %v2348
    %v2353 = vmul.f32 %v2321, %v2349
    %v2354 = vmul.f32 %v2322, %v2350
    %v2355 = vmul.f32 %v2323, %v2351
    %v2356 = vmul.f32 %v2324, %v2352
    %v2358 = vlaneseq
    %v2359 = vshrl.u32 %v2358, 7
    %v2360 = vsub.s32 0, %v2359
    %v2361 = vrot.slane %v2302, %v2360
    %v2363 = vmul.f32 %v2353, %v2361
    %v2364 = vmul.f32 %v2354, %v2361
    %v2365 = vmul.f32 %v2355, %v2361
    %v2366 = vmul.f32 %v2356, %v2361
    %v2368 = vlaneseq
    %v2369 = vshrl.u32 %v2368, 7
    %v2370 = vsub.s32 0, %v2369
    %v2371 = vrot.slane %v2304, %v2370
    %v2373 = vadd.f32 %v2363, %v2371
    %v2374 = vadd.f32 %v2364, %v2371
    %v2375 = vadd.f32 %v2365, %v2371
    %v2376 = vadd.f32 %v2366, %v2371
    %s2377 = scalar_lea.vmem %s16, 16
    %v2378 = vld [vmem:[%s2377] sm:$0xf]
    %v2379 = vld [vmem:[%s2377 + $0x4] sm:$0xf]
    %v2380 = vld [vmem:[%s2377 + $0x8] sm:$0xf]
    %v2381 = vld [vmem:[%s2377 + $0xc] sm:$0xf]
    %s2382 = scalar_lea.vmem [#allocation18], 1
    %v2383 = vld [vmem:[%s2382] sm:$0x1]
    %v2384 = vpack.c.bf16 %v2374, %v2373
    %v2385 = vpack.c.bf16 %v2376, %v2375
    %v2387 = vlaneseq
    %v2388 = vshrl.u32 %v2387, 7
    %v2389 = vsub.s32 0, %v2388
    %v2390 = vrot.slane %v2383, %v2389
    %v2396 = vunpack.c.l.b16 %v2378
    %v2397 = vunpack.c.l.b16 %v2379
    %v2398 = vunpack.c.l.b16 %v2380
    %v2399 = vunpack.c.l.b16 %v2381
    %v2400 = vpack.c.b16 %v2397, %v2396
    %v2401 = vpack.c.b16 %v2399, %v2398
    %v2405 = vsel %vm676, %v2384, 0
    %v2408 = vsel %vm676, %v2385, 0
    %2410 = vmatprep.subr.bf16.mxu0 0
    %2411 = vmatpush1.bf16.msra.mxu0 %v2400
    %2412 = vmatprep.subr.bf16.mxu0 0
    %2413 = vmatpush1.bf16.msra.mxu0 %v2401
    %2414 = vmatprep.subr.bf16.mxu0 0
    %2415 = vmatpush1.bf16.msra.mxu0 0
    %2416 = vmatprep.subr.bf16.mxu0 0
    %2417 = vmatpush1.bf16.msra.mxu0 0
    %2418 = vmatprep.subr.bf16.mxu0 0
    %2419 = vmatpush1.bf16.msra.mxu0 0
    %2420 = vmatprep.subr.bf16.mxu0 0
    %2421 = vmatpush1.bf16.msra.mxu0 0
    %2422 = vmatprep.subr.bf16.mxu0 0
    %2423 = vmatpush1.bf16.msra.mxu0 0
    %2424 = vmatprep.subr.bf16.mxu0 0
    %2425 = vmatpush1.bf16.msra.mxu0 0
    %2426 = vmatprep.subr.bf16.mxu0 0
    %2427 = vmatpush1.bf16.msra.mxu0 0
    %2428 = vmatprep.subr.bf16.mxu0 0
    %2429 = vmatpush1.bf16.msra.mxu0 0
    %2430 = vmatprep.subr.bf16.mxu0 0
    %2431 = vmatpush1.bf16.msra.mxu0 0
    %2432 = vmatprep.subr.bf16.mxu0 0
    %2433 = vmatpush1.bf16.msra.mxu0 0
    %2434 = vmatprep.subr.bf16.mxu0 0
    %2435 = vmatpush1.bf16.msra.mxu0 0
    %2436 = vmatprep.subr.bf16.mxu0 0
    %2437 = vmatpush1.bf16.msra.mxu0 0
    %2438 = vmatprep.subr.bf16.mxu0 0
    %2439 = vmatpush1.bf16.msra.mxu0 0
    %2440 = vmatprep.subr.bf16.mxu0 0
    %2441 = vmatpush1.bf16.msra.mxu0 0
    %2442 = vmatprep.mubr.bf16.mxu0 0
    %2443 = vmatmul.mubr.bf16.gmra.mrb[0].mxu0 %v2405
    %v2444 = vpop.f32.mrb[0].mxu0
    %v2445 = vadd.f32 %v2390, %v2444
    %v2446 = vpop.f32.mrb[0].mxu0
    %v2447 = vpop.f32.mrb[0].mxu0
    %v2448 = vadd.f32 %v2390, %v2447
    %v2449 = vpop.f32.mrb[0].mxu0
    %2450 = vmatprep.mubr.bf16.mxu0 0
    %2451 = vmatmul.mubr.bf16.gmra.mrb[0].mxu0 %v2408
    %v2452 = vpop.f32.mrb[0].mxu0
    %v2453 = vadd.f32 %v2390, %v2452
    %v2454 = vpop.f32.mrb[0].mxu0
    %v2455 = vpop.f32.mrb[0].mxu0
    %v2456 = vadd.f32 %v2390, %v2455
    %v2457 = vpop.f32.mrb[0].mxu0
    %2458 = vdwg.mxu0
    %v2459 = vmul.f32 %v2445, 0.5
    %v2460 = vmul.f32 %v2448, 0.5
    %v2461 = vmul.f32 %v2453, 0.5
    %v2462 = vmul.f32 %v2456, 0.5
    %v2463 = vmul.f32 %v2445, 0.044715
    %v2464 = vmul.f32 %v2448, 0.044715
    %v2465 = vmul.f32 %v2453, 0.044715
    %v2466 = vmul.f32 %v2456, 0.044715
    %v2467 = vmul.f32 %v2463, %v2445
    %v2468 = vmul.f32 %v2464, %v2448
    %v2469 = vmul.f32 %v2465, %v2453
    %v2470 = vmul.f32 %v2466, %v2456
    %v2471 = vmul.f32 %v2467, %v2445
    %v2472 = vmul.f32 %v2468, %v2448
    %v2473 = vmul.f32 %v2469, %v2453
    %v2474 = vmul.f32 %v2470, %v2456
    %v2475 = vadd.f32 %v2445, %v2471
    %v2476 = vadd.f32 %v2448, %v2472
    %v2477 = vadd.f32 %v2453, %v2473
    %v2478 = vadd.f32 %v2456, %v2474
    %v2479 = vmul.f32 %v2475, 0.7978846
    %v2480 = vmul.f32 %v2476, 0.7978846
    %v2481 = vmul.f32 %v2477, 0.7978846
    %v2482 = vmul.f32 %v2478, 0.7978846
    %v2483 = vtanh.pop %v2479
    %v2484 = vtanh.pop %v2480
    %v2485 = vtanh.pop %v2481
    %v2486 = vtanh.pop %v2482
    %v2487 = vadd.f32 %v2483, 1.0
    %v2488 = vadd.f32 %v2484, 1.0
    %v2489 = vadd.f32 %v2485, 1.0
    %v2490 = vadd.f32 %v2486, 1.0
    %v2491 = vmul.f32 %v2459, %v2487
    %v2492 = vmul.f32 %v2460, %v2488
    %v2493 = vmul.f32 %v2461, %v2489
    %v2494 = vmul.f32 %v2462, %v2490
    %s2495 = scalar_lea.vmem %s18, 64
    %v2496 = vld [vmem:[%s2495] sm:$0xf]
    %v2497 = vld [vmem:[%s2495 + $0x4] sm:$0xf]
    %v2498 = vld [vmem:[%s2495 + $0x8] sm:$0xf]
    %v2499 = vld [vmem:[%s2495 + $0xc] sm:$0xf]
    %v2500 = vld [vmem:[%s2495 + $0x10] sm:$0xf]
    %v2501 = vld [vmem:[%s2495 + $0x14] sm:$0xf]
    %v2502 = vld [vmem:[%s2495 + $0x18] sm:$0xf]
    %v2503 = vld [vmem:[%s2495 + $0x1c] sm:$0xf]
    %v2504 = vld [vmem:[%s2495 + $0x20] sm:$0xf]
    %v2505 = vld [vmem:[%s2495 + $0x24] sm:$0xf]
    %v2506 = vld [vmem:[%s2495 + $0x28] sm:$0xf]
    %v2507 = vld [vmem:[%s2495 + $0x2c] sm:$0xf]
    %v2508 = vld [vmem:[%s2495 + $0x30] sm:$0xf]
    %v2509 = vld [vmem:[%s2495 + $0x34] sm:$0xf]
    %v2510 = vld [vmem:[%s2495 + $0x38] sm:$0xf]
    %v2511 = vld [vmem:[%s2495 + $0x3c] sm:$0xf]
    %s2512 = scalar_lea.vmem [#allocation19], 1
    %v2513 = vld [vmem:[%s2512] sm:$0x1]
    %v2514 = vpack.c.bf16 %v2492, %v2491
    %v2515 = vpack.c.bf16 %v2494, %v2493
    %v2517 = vlaneseq
    %v2518 = vshrl.u32 %v2517, 7
    %v2519 = vsub.s32 0, %v2518
    %v2520 = vrot.slane %v2513, %v2519
    %v2538 = vunpack.c.l.b16 %v2496
    %v2539 = vunpack.c.l.b16 %v2497
    %v2540 = vunpack.c.l.b16 %v2498
    %v2541 = vunpack.c.l.b16 %v2499
    %v2542 = vunpack.c.l.b16 %v2500
    %v2543 = vunpack.c.l.b16 %v2501
    %v2544 = vunpack.c.l.b16 %v2502
    %v2545 = vunpack.c.l.b16 %v2503
    %v2546 = vunpack.c.l.b16 %v2504
    %v2547 = vunpack.c.l.b16 %v2505
    %v2548 = vunpack.c.l.b16 %v2506
    %v2549 = vunpack.c.l.b16 %v2507
    %v2550 = vunpack.c.l.b16 %v2508
    %v2551 = vunpack.c.l.b16 %v2509
    %v2552 = vunpack.c.l.b16 %v2510
    %v2553 = vunpack.c.l.b16 %v2511
    %v2554 = vpack.c.b16 %v2539, %v2538
    %v2555 = vpack.c.b16 %v2541, %v2540
    %v2556 = vpack.c.b16 %v2543, %v2542
    %v2557 = vpack.c.b16 %v2545, %v2544
    %v2558 = vpack.c.b16 %v2547, %v2546
    %v2559 = vpack.c.b16 %v2549, %v2548
    %v2560 = vpack.c.b16 %v2551, %v2550
    %v2561 = vpack.c.b16 %v2553, %v2552
    %2570 = vmatprep.subr.bf16.mxu0 0
    %2571 = vmatpush1.bf16.msra.mxu0 %v2554
    %2572 = vmatprep.subr.bf16.mxu0 0
    %2573 = vmatpush1.bf16.msra.mxu0 %v2555
    %2574 = vmatprep.subr.bf16.mxu0 0
    %2575 = vmatpush1.bf16.msra.mxu0 %v2556
    %2576 = vmatprep.subr.bf16.mxu0 0
    %2577 = vmatpush1.bf16.msra.mxu0 %v2557
    %2578 = vmatprep.subr.bf16.mxu0 0
    %2579 = vmatpush1.bf16.msra.mxu0 %v2558
    %2580 = vmatprep.subr.bf16.mxu0 0
    %2581 = vmatpush1.bf16.msra.mxu0 %v2559
    %2582 = vmatprep.subr.bf16.mxu0 0
    %2583 = vmatpush1.bf16.msra.mxu0 %v2560
    %2584 = vmatprep.subr.bf16.mxu0 0
    %2585 = vmatpush1.bf16.msra.mxu0 %v2561
    %2586 = vmatprep.subr.bf16.mxu0 0
    %2587 = vmatpush1.bf16.msra.mxu0 0
    %2588 = vmatprep.subr.bf16.mxu0 0
    %2589 = vmatpush1.bf16.msra.mxu0 0
    %2590 = vmatprep.subr.bf16.mxu0 0
    %2591 = vmatpush1.bf16.msra.mxu0 0
    %2592 = vmatprep.subr.bf16.mxu0 0
    %2593 = vmatpush1.bf16.msra.mxu0 0
    %2594 = vmatprep.subr.bf16.mxu0 0
    %2595 = vmatpush1.bf16.msra.mxu0 0
    %2596 = vmatprep.subr.bf16.mxu0 0
    %2597 = vmatpush1.bf16.msra.mxu0 0
    %2598 = vmatprep.subr.bf16.mxu0 0
    %2599 = vmatpush1.bf16.msra.mxu0 0
    %2600 = vmatprep.subr.bf16.mxu0 0
    %2601 = vmatpush1.bf16.msra.mxu0 0
    %2602 = vmatprep.mubr.bf16.mxu0 0
    %2603 = vmatmul.mubr.bf16.gmra.mrb[0].mxu0 %v2514
    %v2604 = vpop.f32.mrb[0].mxu0
    %v2605 = vadd.f32 %v2520, %v2604
    %v2606 = vpop.f32.mrb[0].mxu0
    %v2607 = vpop.f32.mrb[0].mxu0
    %v2608 = vadd.f32 %v2520, %v2607
    %v2609 = vpop.f32.mrb[0].mxu0
    %2610 = vmatprep.mubr.bf16.mxu0 0
    %2611 = vmatmul.mubr.bf16.gmra.mrb[0].mxu0 %v2515
    %v2612 = vpop.f32.mrb[0].mxu0
    %v2613 = vadd.f32 %v2520, %v2612
    %v2614 = vpop.f32.mrb[0].mxu0
    %v2615 = vpop.f32.mrb[0].mxu0
    %v2616 = vadd.f32 %v2520, %v2615
    %v2617 = vpop.f32.mrb[0].mxu0
    %2618 = vdwg.mxu0
    %v2619 = vadd.f32 %v2297, %v2605
    %v2620 = vadd.f32 %v2298, %v2608
    %v2621 = vadd.f32 %v2299, %v2613
    %v2622 = vadd.f32 %v2300, %v2616
    %v2623 = vld [vmem:[#allocation21] sm:$0x1]
    %v2624 = vld [vmem:[#allocation22] sm:$0x1]
    %v2625 = vsel %vm676, %v2619, 0.0
    %2626 = vadd.xlane.f32.xlu0 %v2625
    %v2627 = vpop.xlane.xlu0 %2626
    %v2628 = vsel %vm676, %v2620, 0.0
    %2629 = vadd.xlane.f32.xlu0 %v2628
    %v2630 = vpop.xlane.xlu0 %2629
    %v2631 = vsel %vm676, %v2621, 0.0
    %2632 = vadd.xlane.f32.xlu0 %v2631
    %v2633 = vpop.xlane.xlu0 %2632
    %v2634 = vsel %vm676, %v2622, 0.0
    %2635 = vadd.xlane.f32.xlu0 %v2634
    %v2636 = vpop.xlane.xlu0 %2635
    %v2637 = vmul.f32 %v2627, %v689
    %v2638 = vmul.f32 %v2630, %v689
    %v2639 = vmul.f32 %v2633, %v689
    %v2640 = vmul.f32 %v2636, %v689
    %v2641 = vsub.f32 %v2619, %v2637
    %v2642 = vsub.f32 %v2620, %v2638
    %v2643 = vsub.f32 %v2621, %v2639
    %v2644 = vsub.f32 %v2622, %v2640
    %v2645 = vmul.f32 %v2641, %v2641
    %v2646 = vmul.f32 %v2642, %v2642
    %v2647 = vmul.f32 %v2643, %v2643
    %v2648 = vmul.f32 %v2644, %v2644
    %v2649 = vsel %vm676, %v2645, 0.0
    %2650 = vadd.xlane.f32.xlu0 %v2649
    %v2651 = vpop.xlane.xlu0 %2650
    %v2652 = vsel %vm676, %v2646, 0.0
    %2653 = vadd.xlane.f32.xlu0 %v2652
    %v2654 = vpop.xlane.xlu0 %2653
    %v2655 = vsel %vm676, %v2647, 0.0
    %2656 = vadd.xlane.f32.xlu0 %v2655
    %v2657 = vpop.xlane.xlu0 %2656
    %v2658 = vsel %vm676, %v2648, 0.0
    %2659 = vadd.xlane.f32.xlu0 %v2658
    %v2660 = vpop.xlane.xlu0 %2659
    %v2661 = vmul.f32 %v2651, %v689
    %v2662 = vmul.f32 %v2654, %v689
    %v2663 = vmul.f32 %v2657, %v689
    %v2664 = vmul.f32 %v2660, %v689
    %v2665 = vadd.f32 %v2661, 1e-05
    %v2666 = vadd.f32 %v2662, 1e-05
    %v2667 = vadd.f32 %v2663, 1e-05
    %v2668 = vadd.f32 %v2664, 1e-05
    %v2669 = vrsqrt.pop %v2665
    %v2670 = vrsqrt.pop %v2666
    %v2671 = vrsqrt.pop %v2667
    %v2672 = vrsqrt.pop %v2668
    %v2673 = vmul.f32 %v2641, %v2669
    %v2674 = vmul.f32 %v2642, %v2670
    %v2675 = vmul.f32 %v2643, %v2671
    %v2676 = vmul.f32 %v2644, %v2672
    %v2678 = vlaneseq
    %v2679 = vshrl.u32 %v2678, 7
    %v2680 = vsub.s32 0, %v2679
    %v2681 = vrot.slane %v2623, %v2680
    %v2683 = vmul.f32 %v2673, %v2681
    %v2684 = vmul.f32 %v2674, %v2681
    %v2685 = vmul.f32 %v2675, %v2681
    %v2686 = vmul.f32 %v2676, %v2681
    %v2688 = vlaneseq
    %v2689 = vshrl.u32 %v2688, 7
    %v2690 = vsub.s32 0, %v2689
    %v2691 = vrot.slane %v2624, %v2690
    %v2693 = vadd.f32 %v2683, %v2691
    %v2694 = vadd.f32 %v2684, %v2691
    %v2695 = vadd.f32 %v2685, %v2691
    %v2696 = vadd.f32 %v2686, %v2691
    %v2697 = vpack.c.bf16 %v2694, %v2693
    %v2698 = vpack.c.bf16 %v2696, %v2695
    %v2699 = vld [vmem:[#allocation24] sm:$0xf]
    %v2700 = vld [vmem:[#allocation24 + $0x4] sm:$0xf]
    %v2701 = vld [vmem:[#allocation24 + $0x8] sm:$0xf]
    %v2702 = vld [vmem:[#allocation24 + $0xc] sm:$0xf]
    %v2707 = vunpack.c.l.b16 %v2699
    %v2708 = vunpack.c.l.b16 %v2700
    %v2709 = vunpack.c.l.b16 %v2701
    %v2710 = vunpack.c.l.b16 %v2702
    %v2711 = vpack.c.b16 %v2708, %v2707
    %v2712 = vpack.c.b16 %v2710, %v2709
    %v2716 = vsel %vm676, %v2697, 0
    %v2719 = vsel %vm676, %v2698, 0
    %2721 = vmatprep.subr.bf16.mxu0 0
    %2722 = vmatpush1.bf16.msra.mxu0 %v2711
    %2723 = vmatprep.subr.bf16.mxu0 0
    %2724 = vmatpush1.bf16.msra.mxu0 %v2712
    %2725 = vmatprep.subr.bf16.mxu0 0
    %2726 = vmatpush1.bf16.msra.mxu0 0
    %2727 = vmatprep.subr.bf16.mxu0 0
    %2728 = vmatpush1.bf16.msra.mxu0 0
    %2729 = vmatprep.subr.bf16.mxu0 0
    %2730 = vmatpush1.bf16.msra.mxu0 0
    %2731 = vmatprep.subr.bf16.mxu0 0
    %2732 = vmatpush1.bf16.msra.mxu0 0
    %2733 = vmatprep.subr.bf16.mxu0 0
    %2734 = vmatpush1.bf16.msra.mxu0 0
    %2735 = vmatprep.subr.bf16.mxu0 0
    %2736 = vmatpush1.bf16.msra.mxu0 0
    %2737 = vmatprep.subr.bf16.mxu0 0
    %2738 = vmatpush1.bf16.msra.mxu0 0
    %2739 = vmatprep.subr.bf16.mxu0 0
    %2740 = vmatpush1.bf16.msra.mxu0 0
    %2741 = vmatprep.subr.bf16.mxu0 0
    %2742 = vmatpush1.bf16.msra.mxu0 0
    %2743 = vmatprep.subr.bf16.mxu0 0
    %2744 = vmatpush1.bf16.msra.mxu0 0
    %2745 = vmatprep.subr.bf16.mxu0 0
    %2746 = vmatpush1.bf16.msra.mxu0 0
    %2747 = vmatprep.subr.bf16.mxu0 0
    %2748 = vmatpush1.bf16.msra.mxu0 0
    %2749 = vmatprep.subr.bf16.mxu0 0
    %2750 = vmatpush1.bf16.msra.mxu0 0
    %2751 = vmatprep.subr.bf16.mxu0 0
    %2752 = vmatpush1.bf16.msra.mxu0 0
    %2753 = vmatprep.mubr.bf16.mxu0 0
    %2754 = vmatmul.mubr.bf16.gmra.mrb[0].mxu0 %v2716
    %v2755 = vpop.f32.mrb[0].mxu0
    %v2756 = vadd.f32 0.0, %v2755
    %v2757 = vpop.f32.mrb[0].mxu0
    %v2758 = vpop.f32.mrb[0].mxu0
    %v2759 = vadd.f32 0.0, %v2758
    %v2760 = vpop.f32.mrb[0].mxu0
    %2761 = vmatprep.mubr.bf16.mxu0 0
    %2762 = vmatmul.mubr.bf16.gmra.mrb[0].mxu0 %v2719
    %v2763 = vpop.f32.mrb[0].mxu0
    %v2764 = vadd.f32 0.0, %v2763
    %v2765 = vpop.f32.mrb[0].mxu0
    %v2766 = vpop.f32.mrb[0].mxu0
    %v2767 = vadd.f32 0.0, %v2766
    %v2768 = vpop.f32.mrb[0].mxu0
    %2769 = vdwg.mxu0
    %2770 = vst [vmem:[#allocation25] sm:$0xff] %v2756
    %2771 = vst [vmem:[#allocation25 + $0x8] sm:$0xff] %v2759
    %2772 = vst [vmem:[#allocation25 + $0x10] sm:$0xff] %v2764
    %2773 = vst [vmem:[#allocation25 + $0x18] sm:$0xff] %v2767
    // Predicated region
    $region146: #{clip_caption_forward.1} parent=1 // pred_check
      _
    $region147: #{clip_caption_forward.1} parent=1 // pred_check_branch
      %2775 = sbr.rel (0) target = $region149
    $region148: #{clip_caption_forward.1} parent=1 // pred_region
      %s2777 = ssub.s32 512, 512
      %2778 = vsyncadd [#allocation6], %s2777
      %s2779 = sshll.u32 [#allocation25], 4
      %s2780 = int_to_ptr.vmem [resolvable:$true] %s2779
      %2785 = dma.vmem_to_hbm [thread:$0]  %s2780, 512, %s24, [#allocation6], 128, 128, 8
    $region149: #{clip_caption_forward.1} parent=1 // pred_fallthru
      _
    // Predicated region
    $region150: #{clip_caption_forward.1} parent=1 // pred_check
      _
    $region151: #{clip_caption_forward.1} parent=1 // pred_check_branch
      %2787 = sbr.rel (0) target = $region153
    $region152: #{clip_caption_forward.1} parent=1 // pred_region
      %2788 = dma.done [#allocation6], 512
    $region153: #{clip_caption_forward.1} parent=1 // pred_fallthru
      _
    %2789 = vsyncpa [#allocation5], 1
    %2790 = vsyncpa [#allocation8], 1
    %2791 = vsyncpa [#allocation11], 1
    %2792 = vsyncpa [#allocation14], 1
    %2793 = vsyncpa [#allocation17], 1
    %2794 = vsyncpa [#allocation20], 1
    %2795 = vsyncpa [#allocation23], 1
    %2796 = vsyncpa [#allocation6], 1

</llo_original>
